<compile_context>
chip_gen: v7x
topology: tpu7x:2x2x1
jax: 0.10.0
libtpu: 0.0.40
codegen_flags: <defaults>
</compile_context>

<pallas_src>
import math

import jax
import jax.numpy as jnp
from jax.experimental import pallas as pl
from jax.experimental.pallas import tpu as pltpu


# ----------------------------- small helpers ---------------------------------

def _round_up(v, m):
    return ((v + m - 1) // m) * m


def _layernorm(x, g, eps=1e-5):
    # matches the module's LayerNorm: biased variance, gain only, fp32 eps=1e-5
    mean = jnp.mean(x, axis=-1, keepdims=True)
    xc = x - mean
    var = jnp.mean(xc * xc, axis=-1, keepdims=True)
    return xc * jax.lax.rsqrt(var + eps) * g


def _l2norm_scale(t, s):
    # F.normalize(t, dim=-1) * s  ==  t * rsqrt(max(|t|^2, eps)) * s
    ss = jnp.sum(t * t, axis=-1, keepdims=True)
    return t * (jax.lax.rsqrt(jnp.maximum(ss, 1e-24)) * s)


# --------------------------------- kernel ------------------------------------

def make_transformer_kernel(*, n_seq, bt, heads, dim_head, nk, scale=16.0):
    N = n_seq
    Bt = bt
    dh = dim_head
    Nk = nk
    M = Bt * N
    sqrt_scale = math.sqrt(scale)
    bf = jnp.bfloat16

    def kernel(x_ref, w_in_ref, b_in_ref,
               g_attn_ref, wq_ref, wk_ref, wv_ref, nkv_ref, wo_ref, g_out_ref,
               g_ff_ref, w_val_ref, w_gate_ref, w_ff2_ref,
               g_fin_ref, w_out_ref,
               bias_ref, cos_ref, sin_odd_ref, sin_even_ref,
               o_ref,
               h_ref, k_buf, v_buf):
        l = pl.program_id(1)
        last = pl.num_programs(1) - 1

        # ---------------- project_in + scratch init (first depth step) --------
        @pl.when(l == 0)
        def _init():
            xb = x_ref[...].astype(bf)
            h_ref[...] = (jnp.dot(xb, w_in_ref[...],
                                  preferred_element_type=jnp.float32)
                          + b_in_ref[...])
            # K/V pad rows (>= N+1) must hold finite values (the pad key columns
            # are additionally masked with -1e30 in `bias`).  They are zeroed
            # once per batch block; depth is the inner grid axis so the scratch
            # is not reused by another batch block in between.
            k_buf[...] = jnp.zeros_like(k_buf)
            v_buf[...] = jnp.zeros_like(v_buf)

        cos = cos_ref[...][None]          # (1, N, dh)
        s_odd = sin_odd_ref[...][None]    # +sin on odd lanes (pairs with x[j-1])
        s_even = sin_even_ref[...][None]  # -sin on even lanes (pairs with x[j+1])

        def rotary(t2):
            # interleaved-pair rotary on a (M, dh) slab; rotate-half built from two
            # lane rolls (XLU) with the parity/sign masks folded into the host tables.
            r_dn = pltpu.roll(t2, 1, axis=1)         # x[j-1]
            r_up = pltpu.roll(t2, dh - 1, axis=1)    # x[j+1]
            return (t2.reshape(Bt, N, dh) * cos
                    + r_dn.reshape(Bt, N, dh) * s_odd
                    + r_up.reshape(Bt, N, dh) * s_even)

        # ------------------------------ Attention -----------------------------
        h = h_ref[...]                                        # (M, hidden) fp32
        xb = _layernorm(h, g_attn_ref[0]).astype(bf)

        q = jnp.dot(xb, wq_ref[0], preferred_element_type=jnp.float32)  # (M, heads*dh)
        k = jnp.dot(xb, wk_ref[0], preferred_element_type=jnp.float32)  # (M, dh)
        v = jnp.dot(xb, wv_ref[0], preferred_element_type=jnp.float32)  # (M, dh)

        # shared (per batch-element) K/V: rows [0,N) real keys (rotary + l2norm
        # + sqrt(scale), matching `q * scale` cancelling under l2norm), row N = null
        # kv (pre-normalized on the host), rows > N zero + bias-masked.
        k3 = _l2norm_scale(rotary(k), sqrt_scale)
        k_buf[:, 0:N, :] = k3.astype(bf)
        v_buf[:, 0:N, :] = v.reshape(Bt, N, dh).astype(bf)
        nkv = nkv_ref[0]                                      # (2, dh) bf16
        k_buf[:, N:N + 1, :] = jnp.broadcast_to(nkv[0:1, :][None], (Bt, 1, dh))
        v_buf[:, N:N + 1, :] = jnp.broadcast_to(nkv[1:2, :][None], (Bt, 1, dh))

        kb = k_buf[...]                                       # (Bt, Nk, dh) bf16
        vb = v_buf[...]                                       # (Bt, Nk, dh) bf16

        av_parts = []
        for hh in range(heads):
            qh = _l2norm_scale(rotary(q[:, hh * dh:(hh + 1) * dh]), sqrt_scale)
            qh = qh.astype(bf)                                # (Bt, N, dh)
            sim = jnp.einsum('bnd,bjd->bnj', qh, kb,
                             preferred_element_type=jnp.float32)   # (Bt, N, Nk)
            sim = sim + bias_ref[hh][None]
            sim = sim - jnp.max(sim, axis=-1, keepdims=True)
            p = jnp.exp(sim)
            p = p * pl.reciprocal(jnp.sum(p, axis=-1, keepdims=True), approx=True)
            av = jnp.einsum('bnj,bjd->bnd', p.astype(bf), vb,
                            preferred_element_type=jnp.float32)    # (Bt, N, dh)
            av_parts.append(av.reshape(M, dh))

        # fused output projection: contract over the full heads*dh dimension.
        attn_cat = jnp.concatenate(av_parts, axis=-1).astype(bf)   # (M, heads*dh)
        attn_out = jnp.dot(attn_cat, wo_ref[0], preferred_element_type=jnp.float32)
        h = h + _layernorm(attn_out, g_out_ref[0])

        # --------------------------- FeedForward (SwiGLU) ---------------------
        xn = _layernorm(h, g_ff_ref[0]).astype(bf)
        a = jnp.dot(xn, w_val_ref[0], preferred_element_type=jnp.float32)
        g = jnp.dot(xn, w_gate_ref[0], preferred_element_type=jnp.float32)
        s = (a * (g * jax.nn.sigmoid(g))).astype(bf)
        h = h + jnp.dot(s, w_ff2_ref[0], preferred_element_type=jnp.float32)
        h_ref[...] = h

        # ---------------- final stable LayerNorm + projection -----------------
        @pl.when(l == last)
        def _final():
            hs = h / jnp.max(h, axis=-1, keepdims=True)       # LayerNorm(stable=True)
            hn = _layernorm(hs, g_fin_ref[...])
            o_ref[...] = jnp.dot(hn.astype(bf), w_out_ref[...],
                                 preferred_element_type=jnp.float32).astype(o_ref.dtype)

    return kernel


# ------------------------- host-side precomputation --------------------------

def build_rotary(n, dim_head, rot_dim):
    """cos/sin tables (interleaved-pair convention), padded to dim_head."""
    inv_freq = 1.0 / (10000.0 ** (jnp.arange(0, rot_dim, 2, dtype=jnp.float32) / rot_dim))
    t = jnp.arange(n, dtype=jnp.float32)
    freqs = t[:, None] * inv_freq[None, :]            # (n, rot_dim//2)
    freqs = jnp.repeat(freqs, 2, axis=-1)             # (n, rot_dim)  [f0,f0,f1,f1,...]
    cos = jnp.cos(freqs)
    sin = jnp.sin(freqs)
    if rot_dim < dim_head:
        pad = dim_head - rot_dim
        cos = jnp.concatenate([cos, jnp.ones((n, pad), jnp.float32)], axis=-1)
        sin = jnp.concatenate([sin, jnp.zeros((n, pad), jnp.float32)], axis=-1)
    return cos, sin


def rel_pos_bias(emb, i, j, num_buckets=32, max_distance=128):
    """RelPosBias.forward(i, j) -> (heads, i, j)."""
    q_pos = jnp.arange(i, dtype=jnp.int32)
    k_pos = jnp.arange(j, dtype=jnp.int32)
    rel = k_pos[None, :] - q_pos[:, None]
    nrel = jnp.maximum(-rel, 0)
    max_exact = num_buckets // 2
    is_small = nrel < max_exact
    nf = jnp.maximum(nrel.astype(jnp.float32), 1.0)   # avoid log(0); masked by is_small
    val_if_large = max_exact + (jnp.log(nf / max_exact)
                                / math.log(max_distance / max_exact)
                                * (num_buckets - max_exact)).astype(jnp.int32)
    val_if_large = jnp.minimum(val_if_large, num_buckets - 1)
    bucket = jnp.where(is_small, nrel, val_if_large)
    values = emb[bucket]                              # (i, j, heads)
    return jnp.transpose(values, (2, 0, 1)).astype(jnp.float32)


def init_params(key, *, in_dim, hidden_dim, out_dim, depth, heads, dim_head,
                ff_mult, num_buckets=32):
    inner_attn = heads * dim_head
    inner_ff = ff_mult * hidden_dim
    ks = jax.random.split(key, 9)

    def nrm(k, shape, s=0.02):
        return jax.random.normal(k, shape, jnp.float32) * s

    return dict(
        w_in=nrm(ks[0], (in_dim, hidden_dim)),
        b_in=jnp.zeros((1, hidden_dim), jnp.float32),
        g_attn=jnp.ones((depth, hidden_dim), jnp.float32),
        wq=nrm(ks[1], (depth, hidden_dim, inner_attn)),
        wkv=nrm(ks[2], (depth, hidden_dim, 2 * dim_head)),
        null_kv=jax.random.normal(ks[3], (depth, 2, dim_head), jnp.float32),
        wo=nrm(ks[4], (depth, inner_attn, hidden_dim)),
        g_out=jnp.ones((depth, hidden_dim), jnp.float32),
        g_ff=jnp.ones((depth, hidden_dim), jnp.float32),
        wff1=nrm(ks[5], (depth, hidden_dim, 2 * inner_ff)),
        wff2=nrm(ks[6], (depth, inner_ff, hidden_dim)),
        g_final=jnp.ones((1, hidden_dim), jnp.float32),
        w_out=nrm(ks[7], (hidden_dim, out_dim)),
        rel_emb=jax.random.normal(ks[8], (num_buckets, heads), jnp.float32),
    )


def _vmem_limit_bytes():
    """Budget VMEM per generation: ~85% of physical, capped at 112 MiB."""
    try:
        cap = getattr(pltpu.get_tpu_info(), "vmem_capacity_bytes", None)
        if cap:
            return int(min(cap * 0.85, 112 * 1024 * 1024))
    except Exception:
        pass
    return 48 * 1024 * 1024   # conservative default that fits every generation (v7x: 64 MiB)


# --------------------------------- wrapper -----------------------------------

def transformer_forward(x, params, *, depth, heads, dim_head, ff_mult,
                        hidden_dim, out_dim):
    B, N, in_dim = x.shape
    inner = ff_mult * hidden_dim
    dh = dim_head
    Dh = heads * dh
    rot_dim = min(32, dim_head)
    sqrt_scale = math.sqrt(16.0)

    # row packing: aim for ~256 matmul rows per grid step, but keep at least two
    # batch blocks so the "parallel" batch axis can be split across TensorCores.
    target_rows = 256
    Bt = max(1, min(B, target_rows // max(N, 1)))
    if B >= 2:
        Bt = min(Bt, B // 2)
    Bt = max(Bt, 1)
    while B % Bt != 0:
        Bt -= 1
    n_bb = B // Bt
    M = Bt * N
    Nk = _round_up(N + 1, 128)          # lane-dense key length (real + null + masked pad)
    out_pad = _round_up(out_dim, 128)   # lane-dense output slab

    # ---- rotary tables (parity/sign folded on host) ----
    cos, sin = build_rotary(N, dh, rot_dim)
    lane = jnp.arange(dh)
    odd = (lane % 2 == 1)[None, :]
    sin_odd = jnp.where(odd, sin, 0.0)      # multiplies roll(+1) = x[j-1]
    sin_even = jnp.where(odd, 0.0, -sin)    # multiplies roll(dh-1) = x[j+1]

    # ---- rel-pos bias: real keys first, null key at col N, pads masked ----
    rb = rel_pos_bias(params["rel_emb"], N, N + 1)  # (heads, N, N+1); col 0 = null key
    bias = jnp.concatenate([rb[:, :, 1:], rb[:, :, :1]], axis=-1)
    if Nk > N + 1:
        bias = jnp.concatenate(
            [bias, jnp.full((heads, N, Nk - (N + 1)), -1e30, jnp.float32)], axis=-1)

    # ---- weights (bf16 matmul operands; split fused projections; lane-pad w_out) ----
    bf = jnp.bfloat16
    w_in = params["w_in"].astype(bf)
    b_in = params["b_in"]
    g_attn = params["g_attn"][:, None, :]
    wq = params["wq"].astype(bf)
    wk = params["wkv"][:, :, :dh].astype(bf)
    wv = params["wkv"][:, :, dh:].astype(bf)
    null_k = params["null_kv"][:, 0, :]
    null_v = params["null_kv"][:, 1, :]
    null_k = null_k * jax.lax.rsqrt(
        jnp.maximum(jnp.sum(null_k * null_k, axis=-1, keepdims=True), 1e-24)) * sqrt_scale
    nkv = jnp.stack([null_k, null_v], axis=1).astype(bf)    # (depth, 2, dh)
    wo = params["wo"].astype(bf)                            # (depth, Dh, hidden)
    g_out = params["g_out"][:, None, :]
    g_ff = params["g_ff"][:, None, :]
    w_val = params["wff1"][:, :, :inner].astype(bf)
    w_gate = params["wff1"][:, :, inner:].astype(bf)
    w_ff2 = params["wff2"].astype(bf)
    g_fin = params["g_final"]
    w_out = jnp.pad(params["w_out"], ((0, 0), (0, out_pad - out_dim))).astype(bf)

    x2 = x.reshape(B * N, in_dim)

    inv2 = lambda b, l: (0, 0)                        # grid-invariant 2D operands
    inv3 = lambda b, l: (0, 0, 0)                     # grid-invariant 3D operands
    lay3 = lambda b, l: (l, 0, 0)                     # per-layer 3D operands

    operands = [x2, w_in, b_in, g_attn, wq, wk, wv, nkv, wo, g_out, g_ff,
                w_val, w_gate, w_ff2, g_fin, w_out, bias, cos, sin_odd, sin_even]

    in_specs = [
        pl.BlockSpec((M, in_dim), lambda b, l: (b, 0)),                  # x
        pl.BlockSpec((in_dim, hidden_dim), inv2),                        # w_in
        pl.BlockSpec((1, hidden_dim), inv2),                             # b_in
        pl.BlockSpec((1, 1, hidden_dim), lay3),                          # g_attn
        pl.BlockSpec((1, hidden_dim, Dh), lay3),                         # wq
        pl.BlockSpec((1, hidden_dim, dh), lay3),                         # wk
        pl.BlockSpec((1, hidden_dim, dh), lay3),                         # wv
        pl.BlockSpec((1, 2, dh), lay3),                                  # null_kv
        pl.BlockSpec((1, Dh, hidden_dim), lay3),                         # wo
        pl.BlockSpec((1, 1, hidden_dim), lay3),                          # g_out
        pl.BlockSpec((1, 1, hidden_dim), lay3),                          # g_ff
        pl.BlockSpec((1, hidden_dim, inner), lay3),                      # w_val
        pl.BlockSpec((1, hidden_dim, inner), lay3),                      # w_gate
        pl.BlockSpec((1, inner, hidden_dim), lay3),                      # w_ff2
        pl.BlockSpec((1, hidden_dim), inv2),                             # g_final
        pl.BlockSpec((hidden_dim, out_pad), inv2),                       # w_out
        pl.BlockSpec((heads, N, Nk), inv3),                              # rel-pos bias
        pl.BlockSpec((N, dh), inv2),                                     # cos
        pl.BlockSpec((N, dh), inv2),                                     # sin_odd
        pl.BlockSpec((N, dh), inv2),                                     # sin_even
    ]

    kernel = make_transformer_kernel(n_seq=N, bt=Bt, heads=heads,
                                     dim_head=dim_head, nk=Nk)

    out = pl.pallas_call(
        kernel,
        out_shape=jax.ShapeDtypeStruct((B * N, out_pad), jnp.bfloat16),
        grid=(n_bb, depth),
        in_specs=in_specs,
        out_specs=pl.BlockSpec((M, out_pad), lambda b, l: (b, 0)),
        scratch_shapes=[
            pltpu.VMEM((M, hidden_dim), jnp.float32),   # running activation h
            pltpu.VMEM((Bt, Nk, dh), jnp.bfloat16),     # padded K (real + null + pad)
            pltpu.VMEM((Bt, Nk, dh), jnp.bfloat16),     # padded V
        ],
        compiler_params=pltpu.CompilerParams(
            dimension_semantics=("parallel", "arbitrary"),
            vmem_limit_bytes=_vmem_limit_bytes(),
        ),
    )(*operands)

    return out[:, :out_dim].astype(jnp.float32).reshape(B, N, out_dim)


# ----------------------------------- main ------------------------------------

if __name__ == "__main__":
    # Small, module-consistent shapes: Transformer(in_dim=32, hidden_dim=32,
    # out_dim=32, depth=2, dim_head=16, heads=4, ff_mult=4), batch=2, seq=8.
    B, N = 2, 8
    in_dim, hidden_dim, out_dim = 32, 32, 32
    depth, heads, dim_head, ff_mult = 2, 4, 16, 4

    key = jax.random.PRNGKey(0)
    kx, kp = jax.random.split(key)
    x = jax.random.normal(kx, (B, N, in_dim), jnp.float32)
    params = init_params(kp, in_dim=in_dim, hidden_dim=hidden_dim, out_dim=out_dim,
                         depth=depth, heads=heads, dim_head=dim_head, ff_mult=ff_mult)

    out = transformer_forward(x, params, depth=depth, heads=heads, dim_head=dim_head,
                              ff_mult=ff_mult, hidden_dim=hidden_dim, out_dim=out_dim)
    out = jax.block_until_ready(out)

    assert out.shape == (B, N, out_dim), out.shape
    assert bool(jnp.all(jnp.isfinite(out)))
    # Dropout layers have p=0.0 (identity); mask/causal paths unused with defaults.
    print("KERNEL_OK")
</pallas_src>

<mosaic_0001>
module attributes {stable_mosaic.version = 11 : i64} {
  func.func @kernel(%arg0: i32, %arg1: i32, %arg2: memref<8x32xf32, #tpu.memory_space<vmem>>, %arg3: memref<32x32xbf16, #tpu.memory_space<vmem>>, %arg4: memref<1x32xf32, #tpu.memory_space<vmem>>, %arg5: memref<1x1x32xf32, #tpu.memory_space<vmem>>, %arg6: memref<1x32x64xbf16, #tpu.memory_space<vmem>>, %arg7: memref<1x32x16xbf16, #tpu.memory_space<vmem>>, %arg8: memref<1x32x16xbf16, #tpu.memory_space<vmem>>, %arg9: memref<1x2x16xbf16, #tpu.memory_space<vmem>>, %arg10: memref<1x64x32xbf16, #tpu.memory_space<vmem>>, %arg11: memref<1x1x32xf32, #tpu.memory_space<vmem>>, %arg12: memref<1x1x32xf32, #tpu.memory_space<vmem>>, %arg13: memref<1x32x128xbf16, #tpu.memory_space<vmem>>, %arg14: memref<1x32x128xbf16, #tpu.memory_space<vmem>>, %arg15: memref<1x128x32xbf16, #tpu.memory_space<vmem>>, %arg16: memref<1x32xf32, #tpu.memory_space<vmem>>, %arg17: memref<32x128xbf16, #tpu.memory_space<vmem>>, %arg18: memref<4x8x128xf32, #tpu.memory_space<vmem>>, %arg19: memref<8x16xf32, #tpu.memory_space<vmem>>, %arg20: memref<8x16xf32, #tpu.memory_space<vmem>>, %arg21: memref<8x16xf32, #tpu.memory_space<vmem>>, %arg22: memref<8x128xbf16, #tpu.memory_space<vmem>>, %arg23: memref<8x32xf32, #tpu.memory_space<vmem>>, %arg24: memref<1x128x16xbf16, #tpu.memory_space<vmem>>, %arg25: memref<1x128x16xbf16, #tpu.memory_space<vmem>>) attributes {dimension_semantics = [#tpu.dimension_semantics<parallel>, #tpu.dimension_semantics<arbitrary>], iteration_bounds = array<i64: 2, 2>, scalar_prefetch = 0 : i64, scratch_operands = 3 : i64, tpu.core_type = #tpu.core_type<tc>, window_params = [{transform_indices = @transform_0, window_bounds = array<i64: 8, 32>}, {pipeline_mode = #tpu.pipeline_mode<synchronous>, transform_indices = @transform_1, window_bounds = array<i64: 32, 32>}, {pipeline_mode = #tpu.pipeline_mode<synchronous>, transform_indices = @transform_2, window_bounds = array<i64: 1, 32>}, {transform_indices = @transform_3, window_bounds = array<i64: 1, 1, 32>}, {transform_indices = @transform_4, window_bounds = array<i64: 1, 32, 64>}, {transform_indices = @transform_5, window_bounds = array<i64: 1, 32, 16>}, {transform_indices = @transform_6, window_bounds = array<i64: 1, 32, 16>}, {transform_indices = @transform_7, window_bounds = array<i64: 1, 2, 16>}, {transform_indices = @transform_8, window_bounds = array<i64: 1, 64, 32>}, {transform_indices = @transform_9, window_bounds = array<i64: 1, 1, 32>}, {transform_indices = @transform_10, window_bounds = array<i64: 1, 1, 32>}, {transform_indices = @transform_11, window_bounds = array<i64: 1, 32, 128>}, {transform_indices = @transform_12, window_bounds = array<i64: 1, 32, 128>}, {transform_indices = @transform_13, window_bounds = array<i64: 1, 128, 32>}, {pipeline_mode = #tpu.pipeline_mode<synchronous>, transform_indices = @transform_14, window_bounds = array<i64: 1, 32>}, {pipeline_mode = #tpu.pipeline_mode<synchronous>, transform_indices = @transform_15, window_bounds = array<i64: 32, 128>}, {pipeline_mode = #tpu.pipeline_mode<synchronous>, transform_indices = @transform_16, window_bounds = array<i64: 4, 8, 128>}, {pipeline_mode = #tpu.pipeline_mode<synchronous>, transform_indices = @transform_17, window_bounds = array<i64: 8, 16>}, {pipeline_mode = #tpu.pipeline_mode<synchronous>, transform_indices = @transform_18, window_bounds = array<i64: 8, 16>}, {pipeline_mode = #tpu.pipeline_mode<synchronous>, transform_indices = @transform_19, window_bounds = array<i64: 8, 16>}, {transform_indices = @transform_20, window_bounds = array<i64: 8, 128>}]} {
    %c0_i32 = arith.constant 0 : i32
    %0 = arith.cmpi eq, %arg1, %c0_i32 : i32
    %1 = arith.extui %0 : i1 to i32
    %c0_i32_0 = arith.constant 0 : i32
    %2 = arith.cmpi ne, %1, %c0_i32_0 : i32
    scf.if %2 {
      %c0_132 = arith.constant 0 : index
      %c0_133 = arith.constant 0 : index
      %304 = vector.load %arg2[%c0_132, %c0_133] : memref<8x32xf32, #tpu.memory_space<vmem>>, vector<8x32xf32>
      %305 = arith.truncf %304 : vector<8x32xf32> to vector<8x32xbf16>
      %c0_134 = arith.constant 0 : index
      %c0_135 = arith.constant 0 : index
      %306 = vector.load %arg3[%c0_134, %c0_135] : memref<32x32xbf16, #tpu.memory_space<vmem>>, vector<32x32xbf16>
      %cst_136 = arith.constant dense<0.000000e+00> : vector<8x32xf32>
      %307 = tpu.matmul %305, %306, %cst_136 {dimension_numbers = #tpu.dot_dimension_numbers<[1], [0], [0], [1], [0, 0, 1, 1], [], []>} : vector<8x32xbf16>, vector<32x32xbf16>, vector<8x32xf32> -> vector<8x32xf32>
      %c0_137 = arith.constant 0 : index
      %c0_138 = arith.constant 0 : index
      %308 = vector.load %arg4[%c0_137, %c0_138] : memref<1x32xf32, #tpu.memory_space<vmem>>, vector<1x32xf32>
      %309 = vector.broadcast %308 : vector<1x32xf32> to vector<8x32xf32>
      %310 = arith.addf %307, %309 : vector<8x32xf32>
      %c0_139 = arith.constant 0 : index
      %c0_140 = arith.constant 0 : index
      %311 = vector.load %arg23[%c0_139, %c0_140] : memref<8x32xf32, #tpu.memory_space<vmem>>, vector<8x32xf32>
      tpu.vector_store %arg23[%c0_139, %c0_140], %310 {strides = array<i32>} : memref<8x32xf32, #tpu.memory_space<vmem>>, vector<8x32xf32>,
      %cst_141 = arith.constant 0.000000e+00 : bf16
      %312 = vector.broadcast %cst_141 : bf16 to vector<1x128x16xbf16>
      %c0_142 = arith.constant 0 : index
      %c0_143 = arith.constant 0 : index
      %c0_144 = arith.constant 0 : index
      %313 = vector.load %arg24[%c0_142, %c0_143, %c0_144] : memref<1x128x16xbf16, #tpu.memory_space<vmem>>, vector<1x128x16xbf16>
      tpu.vector_store %arg24[%c0_142, %c0_143, %c0_144], %312 {strides = array<i32>} : memref<1x128x16xbf16, #tpu.memory_space<vmem>>, vector<1x128x16xbf16>,
      %cst_145 = arith.constant 0.000000e+00 : bf16
      %314 = vector.broadcast %cst_145 : bf16 to vector<1x128x16xbf16>
      %c0_146 = arith.constant 0 : index
      %c0_147 = arith.constant 0 : index
      %c0_148 = arith.constant 0 : index
      %315 = vector.load %arg25[%c0_146, %c0_147, %c0_148] : memref<1x128x16xbf16, #tpu.memory_space<vmem>>, vector<1x128x16xbf16>
      tpu.vector_store %arg25[%c0_146, %c0_147, %c0_148], %314 {strides = array<i32>} : memref<1x128x16xbf16, #tpu.memory_space<vmem>>, vector<1x128x16xbf16>,
    } else {
    }
    %c0 = arith.constant 0 : index
    %c0_1 = arith.constant 0 : index
    %3 = vector.load %arg19[%c0, %c0_1] : memref<8x16xf32, #tpu.memory_space<vmem>>, vector<8x16xf32>
    %4 = vector.shape_cast %3 : vector<8x16xf32> to vector<1x8x16xf32>
    %c0_2 = arith.constant 0 : index
    %c0_3 = arith.constant 0 : index
    %5 = vector.load %arg20[%c0_2, %c0_3] : memref<8x16xf32, #tpu.memory_space<vmem>>, vector<8x16xf32>
    %6 = vector.shape_cast %5 : vector<8x16xf32> to vector<1x8x16xf32>
    %c0_4 = arith.constant 0 : index
    %c0_5 = arith.constant 0 : index
    %7 = vector.load %arg21[%c0_4, %c0_5] : memref<8x16xf32, #tpu.memory_space<vmem>>, vector<8x16xf32>
    %8 = vector.shape_cast %7 : vector<8x16xf32> to vector<1x8x16xf32>
    %c0_6 = arith.constant 0 : index
    %c0_7 = arith.constant 0 : index
    %9 = vector.load %arg23[%c0_6, %c0_7] : memref<8x32xf32, #tpu.memory_space<vmem>>, vector<8x32xf32>
    %c0_8 = arith.constant 0 : index
    %c0_9 = arith.constant 0 : index
    %c0_10 = arith.constant 0 : index
    %10 = vector.load %arg5[%c0_8, %c0_9, %c0_10] : memref<1x1x32xf32, #tpu.memory_space<vmem>>, vector<1x1x32xf32>
    %11 = vector.shape_cast %10 : vector<1x1x32xf32> to vector<1x32xf32>
    %cst = arith.constant dense<0.000000e+00> : vector<8xf32>
    %12 = vector.multi_reduction <add>, %9, %cst [1] : vector<8x32xf32> to vector<8xf32>
    %13 = vector.shape_cast %12 : vector<8xf32> to vector<8x1xf32>
    %cst_11 = arith.constant 3.200000e+01 : f32
    %14 = vector.broadcast %cst_11 : f32 to vector<8x1xf32>
    %15 = arith.divf %13, %14 : vector<8x1xf32>
    %16 = vector.broadcast %15 : vector<8x1xf32> to vector<8x32xf32>
    %17 = arith.subf %9, %16 : vector<8x32xf32>
    %18 = arith.mulf %17, %17 : vector<8x32xf32>
    %cst_12 = arith.constant dense<0.000000e+00> : vector<8xf32>
    %19 = vector.multi_reduction <add>, %18, %cst_12 [1] : vector<8x32xf32> to vector<8xf32>
    %20 = vector.shape_cast %19 : vector<8xf32> to vector<8x1xf32>
    %cst_13 = arith.constant 3.200000e+01 : f32
    %21 = vector.broadcast %cst_13 : f32 to vector<8x1xf32>
    %22 = arith.divf %20, %21 : vector<8x1xf32>
    %cst_14 = arith.constant 9.99999974E-6 : f32
    %23 = vector.broadcast %cst_14 : f32 to vector<8x1xf32>
    %24 = arith.addf %22, %23 : vector<8x1xf32>
    %25 = math.rsqrt %24 : vector<8x1xf32>
    %26 = vector.broadcast %25 : vector<8x1xf32> to vector<8x32xf32>
    %27 = arith.mulf %17, %26 : vector<8x32xf32>
    %28 = vector.broadcast %11 : vector<1x32xf32> to vector<8x32xf32>
    %29 = arith.mulf %27, %28 : vector<8x32xf32>
    %30 = arith.truncf %29 : vector<8x32xf32> to vector<8x32xbf16>
    %c0_15 = arith.constant 0 : index
    %c0_16 = arith.constant 0 : index
    %c0_17 = arith.constant 0 : index
    %31 = vector.load %arg6[%c0_15, %c0_16, %c0_17] : memref<1x32x64xbf16, #tpu.memory_space<vmem>>, vector<1x32x64xbf16>
    %32 = vector.shape_cast %31 : vector<1x32x64xbf16> to vector<32x64xbf16>
    %cst_18 = arith.constant dense<0.000000e+00> : vector<8x64xf32>
    %33 = tpu.matmul %30, %32, %cst_18 {dimension_numbers = #tpu.dot_dimension_numbers<[1], [0], [0], [1], [0, 0, 1, 1], [], []>} : vector<8x32xbf16>, vector<32x64xbf16>, vector<8x64xf32> -> vector<8x64xf32>
    %c0_19 = arith.constant 0 : index
    %c0_20 = arith.constant 0 : index
    %c0_21 = arith.constant 0 : index
    %34 = vector.load %arg7[%c0_19, %c0_20, %c0_21] : memref<1x32x16xbf16, #tpu.memory_space<vmem>>, vector<1x32x16xbf16>
    %35 = vector.shape_cast %34 : vector<1x32x16xbf16> to vector<32x16xbf16>
    %cst_22 = arith.constant dense<0.000000e+00> : vector<8x16xf32>
    %36 = tpu.matmul %30, %35, %cst_22 {dimension_numbers = #tpu.dot_dimension_numbers<[1], [0], [0], [1], [0, 0, 1, 1], [], []>} : vector<8x32xbf16>, vector<32x16xbf16>, vector<8x16xf32> -> vector<8x16xf32>
    %c0_23 = arith.constant 0 : index
    %c0_24 = arith.constant 0 : index
    %c0_25 = arith.constant 0 : index
    %37 = vector.load %arg8[%c0_23, %c0_24, %c0_25] : memref<1x32x16xbf16, #tpu.memory_space<vmem>>, vector<1x32x16xbf16>
    %38 = vector.shape_cast %37 : vector<1x32x16xbf16> to vector<32x16xbf16>
    %cst_26 = arith.constant dense<0.000000e+00> : vector<8x16xf32>
    %39 = tpu.matmul %30, %38, %cst_26 {dimension_numbers = #tpu.dot_dimension_numbers<[1], [0], [0], [1], [0, 0, 1, 1], [], []>} : vector<8x32xbf16>, vector<32x16xbf16>, vector<8x16xf32> -> vector<8x16xf32>
    %c1_i32 = arith.constant 1 : i32
    %40 = tpu.dynamic_rotate %36 by %c1_i32 dim 1 : vector<8x16xf32>, i32 -> vector<8x16xf32>
    %c15_i32 = arith.constant 15 : i32
    %41 = tpu.dynamic_rotate %36 by %c15_i32 dim 1 : vector<8x16xf32>, i32 -> vector<8x16xf32>
    %42 = vector.shape_cast %36 : vector<8x16xf32> to vector<1x8x16xf32>
    %43 = arith.mulf %42, %4 : vector<1x8x16xf32>
    %44 = vector.shape_cast %40 : vector<8x16xf32> to vector<1x8x16xf32>
    %45 = arith.mulf %44, %6 : vector<1x8x16xf32>
    %46 = arith.addf %43, %45 : vector<1x8x16xf32>
    %47 = vector.shape_cast %41 : vector<8x16xf32> to vector<1x8x16xf32>
    %48 = arith.mulf %47, %8 : vector<1x8x16xf32>
    %49 = arith.addf %46, %48 : vector<1x8x16xf32>
    %50 = arith.mulf %49, %49 : vector<1x8x16xf32>
    %cst_27 = arith.constant dense<0.000000e+00> : vector<1x8xf32>
    %51 = vector.multi_reduction <add>, %50, %cst_27 [2] : vector<1x8x16xf32> to vector<1x8xf32>
    %52 = vector.shape_cast %51 : vector<1x8xf32> to vector<1x8x1xf32>
    %cst_28 = arith.constant 1.000000e-24 : f32
    %53 = vector.broadcast %cst_28 : f32 to vector<1x8x1xf32>
    %54 = arith.maximumf %52, %53 : vector<1x8x1xf32>
    %55 = math.rsqrt %54 : vector<1x8x1xf32>
    %cst_29 = arith.constant 4.000000e+00 : f32
    %56 = vector.broadcast %cst_29 : f32 to vector<1x8x1xf32>
    %57 = arith.mulf %55, %56 : vector<1x8x1xf32>
    %58 = vector.broadcast %57 : vector<1x8x1xf32> to vector<1x8x16xf32>
    %59 = arith.mulf %49, %58 : vector<1x8x16xf32>
    %60 = arith.truncf %59 : vector<1x8x16xf32> to vector<1x8x16xbf16>
    %c0_30 = arith.constant 0 : index
    %c0_31 = arith.constant 0 : index
    %c0_32 = arith.constant 0 : index
    %61 = vector.load %arg24[%c0_30, %c0_31, %c0_32] : memref<1x128x16xbf16, #tpu.memory_space<vmem>>, vector<1x8x16xbf16>
    tpu.vector_store %arg24[%c0_30, %c0_31, %c0_32], %60 {strides = array<i32>} : memref<1x128x16xbf16, #tpu.memory_space<vmem>>, vector<1x8x16xbf16>,
    %62 = vector.shape_cast %39 : vector<8x16xf32> to vector<1x8x16xf32>
    %63 = arith.truncf %62 : vector<1x8x16xf32> to vector<1x8x16xbf16>
    %c0_33 = arith.constant 0 : index
    %c0_34 = arith.constant 0 : index
    %c0_35 = arith.constant 0 : index
    %64 = vector.load %arg25[%c0_33, %c0_34, %c0_35] : memref<1x128x16xbf16, #tpu.memory_space<vmem>>, vector<1x8x16xbf16>
    tpu.vector_store %arg25[%c0_33, %c0_34, %c0_35], %63 {strides = array<i32>} : memref<1x128x16xbf16, #tpu.memory_space<vmem>>, vector<1x8x16xbf16>,
    %c0_36 = arith.constant 0 : index
    %c0_37 = arith.constant 0 : index
    %c0_38 = arith.constant 0 : index
    %65 = vector.load %arg9[%c0_36, %c0_37, %c0_38] : memref<1x2x16xbf16, #tpu.memory_space<vmem>>, vector<1x2x16xbf16>
    %66 = vector.shape_cast %65 : vector<1x2x16xbf16> to vector<2x16xbf16>
    %67 = vector.extract_strided_slice %66 {offsets = [0, 0], sizes = [1, 16], strides = [1, 1]} : vector<2x16xbf16> to vector<1x16xbf16>
    %68 = vector.shape_cast %67 : vector<1x16xbf16> to vector<1x1x16xbf16>
    %c0_39 = arith.constant 0 : index
    %c8 = arith.constant 8 : index
    %c0_40 = arith.constant 0 : index
    %69 = vector.load %arg24[%c0_39, %c8, %c0_40] : memref<1x128x16xbf16, #tpu.memory_space<vmem>>, vector<1x1x16xbf16>
    tpu.vector_store %arg24[%c0_39, %c8, %c0_40], %68 {strides = array<i32>} : memref<1x128x16xbf16, #tpu.memory_space<vmem>>, vector<1x1x16xbf16>,
    %70 = vector.extract_strided_slice %66 {offsets = [1, 0], sizes = [1, 16], strides = [1, 1]} : vector<2x16xbf16> to vector<1x16xbf16>
    %71 = vector.shape_cast %70 : vector<1x16xbf16> to vector<1x1x16xbf16>
    %c0_41 = arith.constant 0 : index
    %c8_42 = arith.constant 8 : index
    %c0_43 = arith.constant 0 : index
    %72 = vector.load %arg25[%c0_41, %c8_42, %c0_43] : memref<1x128x16xbf16, #tpu.memory_space<vmem>>, vector<1x1x16xbf16>
    tpu.vector_store %arg25[%c0_41, %c8_42, %c0_43], %71 {strides = array<i32>} : memref<1x128x16xbf16, #tpu.memory_space<vmem>>, vector<1x1x16xbf16>,
    %c0_44 = arith.constant 0 : index
    %c0_45 = arith.constant 0 : index
    %c0_46 = arith.constant 0 : index
    %73 = vector.load %arg24[%c0_44, %c0_45, %c0_46] : memref<1x128x16xbf16, #tpu.memory_space<vmem>>, vector<1x128x16xbf16>
    %c0_47 = arith.constant 0 : index
    %c0_48 = arith.constant 0 : index
    %c0_49 = arith.constant 0 : index
    %74 = vector.load %arg25[%c0_47, %c0_48, %c0_49] : memref<1x128x16xbf16, #tpu.memory_space<vmem>>, vector<1x128x16xbf16>
    %75 = vector.extract_strided_slice %33 {offsets = [0, 0], sizes = [8, 16], strides = [1, 1]} : vector<8x64xf32> to vector<8x16xf32>
    %c1_i32_50 = arith.constant 1 : i32
    %76 = tpu.dynamic_rotate %75 by %c1_i32_50 dim 1 : vector<8x16xf32>, i32 -> vector<8x16xf32>
    %c15_i32_51 = arith.constant 15 : i32
    %77 = tpu.dynamic_rotate %75 by %c15_i32_51 dim 1 : vector<8x16xf32>, i32 -> vector<8x16xf32>
    %78 = vector.shape_cast %75 : vector<8x16xf32> to vector<1x8x16xf32>
    %79 = arith.mulf %78, %4 : vector<1x8x16xf32>
    %80 = vector.shape_cast %76 : vector<8x16xf32> to vector<1x8x16xf32>
    %81 = arith.mulf %80, %6 : vector<1x8x16xf32>
    %82 = arith.addf %79, %81 : vector<1x8x16xf32>
    %83 = vector.shape_cast %77 : vector<8x16xf32> to vector<1x8x16xf32>
    %84 = arith.mulf %83, %8 : vector<1x8x16xf32>
    %85 = arith.addf %82, %84 : vector<1x8x16xf32>
    %86 = arith.mulf %85, %85 : vector<1x8x16xf32>
    %cst_52 = arith.constant dense<0.000000e+00> : vector<1x8xf32>
    %87 = vector.multi_reduction <add>, %86, %cst_52 [2] : vector<1x8x16xf32> to vector<1x8xf32>
    %88 = vector.shape_cast %87 : vector<1x8xf32> to vector<1x8x1xf32>
    %cst_53 = arith.constant 1.000000e-24 : f32
    %89 = vector.broadcast %cst_53 : f32 to vector<1x8x1xf32>
    %90 = arith.maximumf %88, %89 : vector<1x8x1xf32>
    %91 = math.rsqrt %90 : vector<1x8x1xf32>
    %cst_54 = arith.constant 4.000000e+00 : f32
    %92 = vector.broadcast %cst_54 : f32 to vector<1x8x1xf32>
    %93 = arith.mulf %91, %92 : vector<1x8x1xf32>
    %94 = vector.broadcast %93 : vector<1x8x1xf32> to vector<1x8x16xf32>
    %95 = arith.mulf %85, %94 : vector<1x8x16xf32>
    %96 = arith.truncf %95 : vector<1x8x16xf32> to vector<1x8x16xbf16>
    "tpu.trace_start"() <{level = 10 : i32, message = "bnd,bjd->bnj"}> : () -> ()
    %cst_55 = arith.constant dense<0.000000e+00> : vector<1x8x128xf32>
    %97 = tpu.matmul %96, %73, %cst_55 {dimension_numbers = #tpu.dot_dimension_numbers<[2], [2], [1], [1], [0, 0, 0, 1, 1, 1], [0], [0]>} : vector<1x8x16xbf16>, vector<1x128x16xbf16>, vector<1x8x128xf32> -> vector<1x8x128xf32>
    "tpu.trace_stop"() : () -> ()
    %c0_56 = arith.constant 0 : index
    %c0_57 = arith.constant 0 : index
    %c0_58 = arith.constant 0 : index
    %98 = vector.load %arg18[%c0_56, %c0_57, %c0_58] : memref<4x8x128xf32, #tpu.memory_space<vmem>>, vector<1x8x128xf32>
    %99 = vector.shape_cast %98 : vector<1x8x128xf32> to vector<8x128xf32>
    %100 = vector.shape_cast %99 : vector<8x128xf32> to vector<1x8x128xf32>
    %101 = arith.addf %97, %100 : vector<1x8x128xf32>
    %cst_59 = arith.constant dense<0xFF800000> : vector<1x8xf32>
    %102 = vector.multi_reduction <maximumf>, %101, %cst_59 [2] : vector<1x8x128xf32> to vector<1x8xf32>
    %103 = vector.shape_cast %102 : vector<1x8xf32> to vector<1x8x1xf32>
    %104 = vector.broadcast %103 : vector<1x8x1xf32> to vector<1x8x128xf32>
    %105 = arith.subf %101, %104 : vector<1x8x128xf32>
    %106 = math.exp %105 : vector<1x8x128xf32>
    %cst_60 = arith.constant dense<0.000000e+00> : vector<1x8xf32>
    %107 = vector.multi_reduction <add>, %106, %cst_60 [2] : vector<1x8x128xf32> to vector<1x8xf32>
    %108 = vector.shape_cast %107 : vector<1x8xf32> to vector<1x8x1xf32>
    %109 = tpu.reciprocal %108 {approx = true} : vector<1x8x1xf32> -> vector<1x8x1xf32>
    %110 = vector.broadcast %109 : vector<1x8x1xf32> to vector<1x8x128xf32>
    %111 = arith.mulf %106, %110 : vector<1x8x128xf32>
    %112 = arith.truncf %111 : vector<1x8x128xf32> to vector<1x8x128xbf16>
    "tpu.trace_start"() <{level = 10 : i32, message = "bnj,bjd->bnd"}> : () -> ()
    %cst_61 = arith.constant dense<0.000000e+00> : vector<1x8x16xf32>
    %113 = tpu.matmul %112, %74, %cst_61 {dimension_numbers = #tpu.dot_dimension_numbers<[2], [1], [1], [2], [0, 0, 0, 1, 1, 2], [0], [0]>} : vector<1x8x128xbf16>, vector<1x128x16xbf16>, vector<1x8x16xf32> -> vector<1x8x16xf32>
    "tpu.trace_stop"() : () -> ()
    %114 = vector.shape_cast %113 : vector<1x8x16xf32> to vector<8x16xf32>
    %115 = vector.extract_strided_slice %33 {offsets = [0, 16], sizes = [8, 16], strides = [1, 1]} : vector<8x64xf32> to vector<8x16xf32>
    %c1_i32_62 = arith.constant 1 : i32
    %116 = tpu.dynamic_rotate %115 by %c1_i32_62 dim 1 : vector<8x16xf32>, i32 -> vector<8x16xf32>
    %c15_i32_63 = arith.constant 15 : i32
    %117 = tpu.dynamic_rotate %115 by %c15_i32_63 dim 1 : vector<8x16xf32>, i32 -> vector<8x16xf32>
    %118 = vector.shape_cast %115 : vector<8x16xf32> to vector<1x8x16xf32>
    %119 = arith.mulf %118, %4 : vector<1x8x16xf32>
    %120 = vector.shape_cast %116 : vector<8x16xf32> to vector<1x8x16xf32>
    %121 = arith.mulf %120, %6 : vector<1x8x16xf32>
    %122 = arith.addf %119, %121 : vector<1x8x16xf32>
    %123 = vector.shape_cast %117 : vector<8x16xf32> to vector<1x8x16xf32>
    %124 = arith.mulf %123, %8 : vector<1x8x16xf32>
    %125 = arith.addf %122, %124 : vector<1x8x16xf32>
    %126 = arith.mulf %125, %125 : vector<1x8x16xf32>
    %cst_64 = arith.constant dense<0.000000e+00> : vector<1x8xf32>
    %127 = vector.multi_reduction <add>, %126, %cst_64 [2] : vector<1x8x16xf32> to vector<1x8xf32>
    %128 = vector.shape_cast %127 : vector<1x8xf32> to vector<1x8x1xf32>
    %cst_65 = arith.constant 1.000000e-24 : f32
    %129 = vector.broadcast %cst_65 : f32 to vector<1x8x1xf32>
    %130 = arith.maximumf %128, %129 : vector<1x8x1xf32>
    %131 = math.rsqrt %130 : vector<1x8x1xf32>
    %cst_66 = arith.constant 4.000000e+00 : f32
    %132 = vector.broadcast %cst_66 : f32 to vector<1x8x1xf32>
    %133 = arith.mulf %131, %132 : vector<1x8x1xf32>
    %134 = vector.broadcast %133 : vector<1x8x1xf32> to vector<1x8x16xf32>
    %135 = arith.mulf %125, %134 : vector<1x8x16xf32>
    %136 = arith.truncf %135 : vector<1x8x16xf32> to vector<1x8x16xbf16>
    "tpu.trace_start"() <{level = 10 : i32, message = "bnd,bjd->bnj"}> : () -> ()
    %cst_67 = arith.constant dense<0.000000e+00> : vector<1x8x128xf32>
    %137 = tpu.matmul %136, %73, %cst_67 {dimension_numbers = #tpu.dot_dimension_numbers<[2], [2], [1], [1], [0, 0, 0, 1, 1, 1], [0], [0]>} : vector<1x8x16xbf16>, vector<1x128x16xbf16>, vector<1x8x128xf32> -> vector<1x8x128xf32>
    "tpu.trace_stop"() : () -> ()
    %c1 = arith.constant 1 : index
    %c0_68 = arith.constant 0 : index
    %c0_69 = arith.constant 0 : index
    %138 = vector.load %arg18[%c1, %c0_68, %c0_69] : memref<4x8x128xf32, #tpu.memory_space<vmem>>, vector<1x8x128xf32>
    %139 = vector.shape_cast %138 : vector<1x8x128xf32> to vector<8x128xf32>
    %140 = vector.shape_cast %139 : vector<8x128xf32> to vector<1x8x128xf32>
    %141 = arith.addf %137, %140 : vector<1x8x128xf32>
    %cst_70 = arith.constant dense<0xFF800000> : vector<1x8xf32>
    %142 = vector.multi_reduction <maximumf>, %141, %cst_70 [2] : vector<1x8x128xf32> to vector<1x8xf32>
    %143 = vector.shape_cast %142 : vector<1x8xf32> to vector<1x8x1xf32>
    %144 = vector.broadcast %143 : vector<1x8x1xf32> to vector<1x8x128xf32>
    %145 = arith.subf %141, %144 : vector<1x8x128xf32>
    %146 = math.exp %145 : vector<1x8x128xf32>
    %cst_71 = arith.constant dense<0.000000e+00> : vector<1x8xf32>
    %147 = vector.multi_reduction <add>, %146, %cst_71 [2] : vector<1x8x128xf32> to vector<1x8xf32>
    %148 = vector.shape_cast %147 : vector<1x8xf32> to vector<1x8x1xf32>
    %149 = tpu.reciprocal %148 {approx = true} : vector<1x8x1xf32> -> vector<1x8x1xf32>
    %150 = vector.broadcast %149 : vector<1x8x1xf32> to vector<1x8x128xf32>
    %151 = arith.mulf %146, %150 : vector<1x8x128xf32>
    %152 = arith.truncf %151 : vector<1x8x128xf32> to vector<1x8x128xbf16>
    "tpu.trace_start"() <{level = 10 : i32, message = "bnj,bjd->bnd"}> : () -> ()
    %cst_72 = arith.constant dense<0.000000e+00> : vector<1x8x16xf32>
    %153 = tpu.matmul %152, %74, %cst_72 {dimension_numbers = #tpu.dot_dimension_numbers<[2], [1], [1], [2], [0, 0, 0, 1, 1, 2], [0], [0]>} : vector<1x8x128xbf16>, vector<1x128x16xbf16>, vector<1x8x16xf32> -> vector<1x8x16xf32>
    "tpu.trace_stop"() : () -> ()
    %154 = vector.shape_cast %153 : vector<1x8x16xf32> to vector<8x16xf32>
    %155 = vector.extract_strided_slice %33 {offsets = [0, 32], sizes = [8, 16], strides = [1, 1]} : vector<8x64xf32> to vector<8x16xf32>
    %c1_i32_73 = arith.constant 1 : i32
    %156 = tpu.dynamic_rotate %155 by %c1_i32_73 dim 1 : vector<8x16xf32>, i32 -> vector<8x16xf32>
    %c15_i32_74 = arith.constant 15 : i32
    %157 = tpu.dynamic_rotate %155 by %c15_i32_74 dim 1 : vector<8x16xf32>, i32 -> vector<8x16xf32>
    %158 = vector.shape_cast %155 : vector<8x16xf32> to vector<1x8x16xf32>
    %159 = arith.mulf %158, %4 : vector<1x8x16xf32>
    %160 = vector.shape_cast %156 : vector<8x16xf32> to vector<1x8x16xf32>
    %161 = arith.mulf %160, %6 : vector<1x8x16xf32>
    %162 = arith.addf %159, %161 : vector<1x8x16xf32>
    %163 = vector.shape_cast %157 : vector<8x16xf32> to vector<1x8x16xf32>
    %164 = arith.mulf %163, %8 : vector<1x8x16xf32>
    %165 = arith.addf %162, %164 : vector<1x8x16xf32>
    %166 = arith.mulf %165, %165 : vector<1x8x16xf32>
    %cst_75 = arith.constant dense<0.000000e+00> : vector<1x8xf32>
    %167 = vector.multi_reduction <add>, %166, %cst_75 [2] : vector<1x8x16xf32> to vector<1x8xf32>
    %168 = vector.shape_cast %167 : vector<1x8xf32> to vector<1x8x1xf32>
    %cst_76 = arith.constant 1.000000e-24 : f32
    %169 = vector.broadcast %cst_76 : f32 to vector<1x8x1xf32>
    %170 = arith.maximumf %168, %169 : vector<1x8x1xf32>
    %171 = math.rsqrt %170 : vector<1x8x1xf32>
    %cst_77 = arith.constant 4.000000e+00 : f32
    %172 = vector.broadcast %cst_77 : f32 to vector<1x8x1xf32>
    %173 = arith.mulf %171, %172 : vector<1x8x1xf32>
    %174 = vector.broadcast %173 : vector<1x8x1xf32> to vector<1x8x16xf32>
    %175 = arith.mulf %165, %174 : vector<1x8x16xf32>
    %176 = arith.truncf %175 : vector<1x8x16xf32> to vector<1x8x16xbf16>
    "tpu.trace_start"() <{level = 10 : i32, message = "bnd,bjd->bnj"}> : () -> ()
    %cst_78 = arith.constant dense<0.000000e+00> : vector<1x8x128xf32>
    %177 = tpu.matmul %176, %73, %cst_78 {dimension_numbers = #tpu.dot_dimension_numbers<[2], [2], [1], [1], [0, 0, 0, 1, 1, 1], [0], [0]>} : vector<1x8x16xbf16>, vector<1x128x16xbf16>, vector<1x8x128xf32> -> vector<1x8x128xf32>
    "tpu.trace_stop"() : () -> ()
    %c2 = arith.constant 2 : index
    %c0_79 = arith.constant 0 : index
    %c0_80 = arith.constant 0 : index
    %178 = vector.load %arg18[%c2, %c0_79, %c0_80] : memref<4x8x128xf32, #tpu.memory_space<vmem>>, vector<1x8x128xf32>
    %179 = vector.shape_cast %178 : vector<1x8x128xf32> to vector<8x128xf32>
    %180 = vector.shape_cast %179 : vector<8x128xf32> to vector<1x8x128xf32>
    %181 = arith.addf %177, %180 : vector<1x8x128xf32>
    %cst_81 = arith.constant dense<0xFF800000> : vector<1x8xf32>
    %182 = vector.multi_reduction <maximumf>, %181, %cst_81 [2] : vector<1x8x128xf32> to vector<1x8xf32>
    %183 = vector.shape_cast %182 : vector<1x8xf32> to vector<1x8x1xf32>
    %184 = vector.broadcast %183 : vector<1x8x1xf32> to vector<1x8x128xf32>
    %185 = arith.subf %181, %184 : vector<1x8x128xf32>
    %186 = math.exp %185 : vector<1x8x128xf32>
    %cst_82 = arith.constant dense<0.000000e+00> : vector<1x8xf32>
    %187 = vector.multi_reduction <add>, %186, %cst_82 [2] : vector<1x8x128xf32> to vector<1x8xf32>
    %188 = vector.shape_cast %187 : vector<1x8xf32> to vector<1x8x1xf32>
    %189 = tpu.reciprocal %188 {approx = true} : vector<1x8x1xf32> -> vector<1x8x1xf32>
    %190 = vector.broadcast %189 : vector<1x8x1xf32> to vector<1x8x128xf32>
    %191 = arith.mulf %186, %190 : vector<1x8x128xf32>
    %192 = arith.truncf %191 : vector<1x8x128xf32> to vector<1x8x128xbf16>
    "tpu.trace_start"() <{level = 10 : i32, message = "bnj,bjd->bnd"}> : () -> ()
    %cst_83 = arith.constant dense<0.000000e+00> : vector<1x8x16xf32>
    %193 = tpu.matmul %192, %74, %cst_83 {dimension_numbers = #tpu.dot_dimension_numbers<[2], [1], [1], [2], [0, 0, 0, 1, 1, 2], [0], [0]>} : vector<1x8x128xbf16>, vector<1x128x16xbf16>, vector<1x8x16xf32> -> vector<1x8x16xf32>
    "tpu.trace_stop"() : () -> ()
    %194 = vector.shape_cast %193 : vector<1x8x16xf32> to vector<8x16xf32>
    %195 = vector.extract_strided_slice %33 {offsets = [0, 48], sizes = [8, 16], strides = [1, 1]} : vector<8x64xf32> to vector<8x16xf32>
    %c1_i32_84 = arith.constant 1 : i32
    %196 = tpu.dynamic_rotate %195 by %c1_i32_84 dim 1 : vector<8x16xf32>, i32 -> vector<8x16xf32>
    %c15_i32_85 = arith.constant 15 : i32
    %197 = tpu.dynamic_rotate %195 by %c15_i32_85 dim 1 : vector<8x16xf32>, i32 -> vector<8x16xf32>
    %198 = vector.shape_cast %195 : vector<8x16xf32> to vector<1x8x16xf32>
    %199 = arith.mulf %198, %4 : vector<1x8x16xf32>
    %200 = vector.shape_cast %196 : vector<8x16xf32> to vector<1x8x16xf32>
    %201 = arith.mulf %200, %6 : vector<1x8x16xf32>
    %202 = arith.addf %199, %201 : vector<1x8x16xf32>
    %203 = vector.shape_cast %197 : vector<8x16xf32> to vector<1x8x16xf32>
    %204 = arith.mulf %203, %8 : vector<1x8x16xf32>
    %205 = arith.addf %202, %204 : vector<1x8x16xf32>
    %206 = arith.mulf %205, %205 : vector<1x8x16xf32>
    %cst_86 = arith.constant dense<0.000000e+00> : vector<1x8xf32>
    %207 = vector.multi_reduction <add>, %206, %cst_86 [2] : vector<1x8x16xf32> to vector<1x8xf32>
    %208 = vector.shape_cast %207 : vector<1x8xf32> to vector<1x8x1xf32>
    %cst_87 = arith.constant 1.000000e-24 : f32
    %209 = vector.broadcast %cst_87 : f32 to vector<1x8x1xf32>
    %210 = arith.maximumf %208, %209 : vector<1x8x1xf32>
    %211 = math.rsqrt %210 : vector<1x8x1xf32>
    %cst_88 = arith.constant 4.000000e+00 : f32
    %212 = vector.broadcast %cst_88 : f32 to vector<1x8x1xf32>
    %213 = arith.mulf %211, %212 : vector<1x8x1xf32>
    %214 = vector.broadcast %213 : vector<1x8x1xf32> to vector<1x8x16xf32>
    %215 = arith.mulf %205, %214 : vector<1x8x16xf32>
    %216 = arith.truncf %215 : vector<1x8x16xf32> to vector<1x8x16xbf16>
    "tpu.trace_start"() <{level = 10 : i32, message = "bnd,bjd->bnj"}> : () -> ()
    %cst_89 = arith.constant dense<0.000000e+00> : vector<1x8x128xf32>
    %217 = tpu.matmul %216, %73, %cst_89 {dimension_numbers = #tpu.dot_dimension_numbers<[2], [2], [1], [1], [0, 0, 0, 1, 1, 1], [0], [0]>} : vector<1x8x16xbf16>, vector<1x128x16xbf16>, vector<1x8x128xf32> -> vector<1x8x128xf32>
    "tpu.trace_stop"() : () -> ()
    %c3 = arith.constant 3 : index
    %c0_90 = arith.constant 0 : index
    %c0_91 = arith.constant 0 : index
    %218 = vector.load %arg18[%c3, %c0_90, %c0_91] : memref<4x8x128xf32, #tpu.memory_space<vmem>>, vector<1x8x128xf32>
    %219 = vector.shape_cast %218 : vector<1x8x128xf32> to vector<8x128xf32>
    %220 = vector.shape_cast %219 : vector<8x128xf32> to vector<1x8x128xf32>
    %221 = arith.addf %217, %220 : vector<1x8x128xf32>
    %cst_92 = arith.constant dense<0xFF800000> : vector<1x8xf32>
    %222 = vector.multi_reduction <maximumf>, %221, %cst_92 [2] : vector<1x8x128xf32> to vector<1x8xf32>
    %223 = vector.shape_cast %222 : vector<1x8xf32> to vector<1x8x1xf32>
    %224 = vector.broadcast %223 : vector<1x8x1xf32> to vector<1x8x128xf32>
    %225 = arith.subf %221, %224 : vector<1x8x128xf32>
    %226 = math.exp %225 : vector<1x8x128xf32>
    %cst_93 = arith.constant dense<0.000000e+00> : vector<1x8xf32>
    %227 = vector.multi_reduction <add>, %226, %cst_93 [2] : vector<1x8x128xf32> to vector<1x8xf32>
    %228 = vector.shape_cast %227 : vector<1x8xf32> to vector<1x8x1xf32>
    %229 = tpu.reciprocal %228 {approx = true} : vector<1x8x1xf32> -> vector<1x8x1xf32>
    %230 = vector.broadcast %229 : vector<1x8x1xf32> to vector<1x8x128xf32>
    %231 = arith.mulf %226, %230 : vector<1x8x128xf32>
    %232 = arith.truncf %231 : vector<1x8x128xf32> to vector<1x8x128xbf16>
    "tpu.trace_start"() <{level = 10 : i32, message = "bnj,bjd->bnd"}> : () -> ()
    %cst_94 = arith.constant dense<0.000000e+00> : vector<1x8x16xf32>
    %233 = tpu.matmul %232, %74, %cst_94 {dimension_numbers = #tpu.dot_dimension_numbers<[2], [1], [1], [2], [0, 0, 0, 1, 1, 2], [0], [0]>} : vector<1x8x128xbf16>, vector<1x128x16xbf16>, vector<1x8x16xf32> -> vector<1x8x16xf32>
    "tpu.trace_stop"() : () -> ()
    %234 = vector.shape_cast %233 : vector<1x8x16xf32> to vector<8x16xf32>
    %235 = tpu.concatenate %114, %154, %194, %234 in 1 : vector<8x16xf32>, vector<8x16xf32>, vector<8x16xf32>, vector<8x16xf32> -> vector<8x64xf32>
    %236 = arith.truncf %235 : vector<8x64xf32> to vector<8x64xbf16>
    %c0_95 = arith.constant 0 : index
    %c0_96 = arith.constant 0 : index
    %c0_97 = arith.constant 0 : index
    %237 = vector.load %arg10[%c0_95, %c0_96, %c0_97] : memref<1x64x32xbf16, #tpu.memory_space<vmem>>, vector<1x64x32xbf16>
    %238 = vector.shape_cast %237 : vector<1x64x32xbf16> to vector<64x32xbf16>
    %cst_98 = arith.constant dense<0.000000e+00> : vector<8x32xf32>
    %239 = tpu.matmul %236, %238, %cst_98 {dimension_numbers = #tpu.dot_dimension_numbers<[1], [0], [0], [1], [0, 0, 1, 1], [], []>} : vector<8x64xbf16>, vector<64x32xbf16>, vector<8x32xf32> -> vector<8x32xf32>
    %c0_99 = arith.constant 0 : index
    %c0_100 = arith.constant 0 : index
    %c0_101 = arith.constant 0 : index
    %240 = vector.load %arg11[%c0_99, %c0_100, %c0_101] : memref<1x1x32xf32, #tpu.memory_space<vmem>>, vector<1x1x32xf32>
    %241 = vector.shape_cast %240 : vector<1x1x32xf32> to vector<1x32xf32>
    %cst_102 = arith.constant dense<0.000000e+00> : vector<8xf32>
    %242 = vector.multi_reduction <add>, %239, %cst_102 [1] : vector<8x32xf32> to vector<8xf32>
    %243 = vector.shape_cast %242 : vector<8xf32> to vector<8x1xf32>
    %cst_103 = arith.constant 3.200000e+01 : f32
    %244 = vector.broadcast %cst_103 : f32 to vector<8x1xf32>
    %245 = arith.divf %243, %244 : vector<8x1xf32>
    %246 = vector.broadcast %245 : vector<8x1xf32> to vector<8x32xf32>
    %247 = arith.subf %239, %246 : vector<8x32xf32>
    %248 = arith.mulf %247, %247 : vector<8x32xf32>
    %cst_104 = arith.constant dense<0.000000e+00> : vector<8xf32>
    %249 = vector.multi_reduction <add>, %248, %cst_104 [1] : vector<8x32xf32> to vector<8xf32>
    %250 = vector.shape_cast %249 : vector<8xf32> to vector<8x1xf32>
    %cst_105 = arith.constant 3.200000e+01 : f32
    %251 = vector.broadcast %cst_105 : f32 to vector<8x1xf32>
    %252 = arith.divf %250, %251 : vector<8x1xf32>
    %cst_106 = arith.constant 9.99999974E-6 : f32
    %253 = vector.broadcast %cst_106 : f32 to vector<8x1xf32>
    %254 = arith.addf %252, %253 : vector<8x1xf32>
    %255 = math.rsqrt %254 : vector<8x1xf32>
    %256 = vector.broadcast %255 : vector<8x1xf32> to vector<8x32xf32>
    %257 = arith.mulf %247, %256 : vector<8x32xf32>
    %258 = vector.broadcast %241 : vector<1x32xf32> to vector<8x32xf32>
    %259 = arith.mulf %257, %258 : vector<8x32xf32>
    %260 = arith.addf %9, %259 : vector<8x32xf32>
    %c0_107 = arith.constant 0 : index
    %c0_108 = arith.constant 0 : index
    %c0_109 = arith.constant 0 : index
    %261 = vector.load %arg12[%c0_107, %c0_108, %c0_109] : memref<1x1x32xf32, #tpu.memory_space<vmem>>, vector<1x1x32xf32>
    %262 = vector.shape_cast %261 : vector<1x1x32xf32> to vector<1x32xf32>
    %cst_110 = arith.constant dense<0.000000e+00> : vector<8xf32>
    %263 = vector.multi_reduction <add>, %260, %cst_110 [1] : vector<8x32xf32> to vector<8xf32>
    %264 = vector.shape_cast %263 : vector<8xf32> to vector<8x1xf32>
    %cst_111 = arith.constant 3.200000e+01 : f32
    %265 = vector.broadcast %cst_111 : f32 to vector<8x1xf32>
    %266 = arith.divf %264, %265 : vector<8x1xf32>
    %267 = vector.broadcast %266 : vector<8x1xf32> to vector<8x32xf32>
    %268 = arith.subf %260, %267 : vector<8x32xf32>
    %269 = arith.mulf %268, %268 : vector<8x32xf32>
    %cst_112 = arith.constant dense<0.000000e+00> : vector<8xf32>
    %270 = vector.multi_reduction <add>, %269, %cst_112 [1] : vector<8x32xf32> to vector<8xf32>
    %271 = vector.shape_cast %270 : vector<8xf32> to vector<8x1xf32>
    %cst_113 = arith.constant 3.200000e+01 : f32
    %272 = vector.broadcast %cst_113 : f32 to vector<8x1xf32>
    %273 = arith.divf %271, %272 : vector<8x1xf32>
    %cst_114 = arith.constant 9.99999974E-6 : f32
    %274 = vector.broadcast %cst_114 : f32 to vector<8x1xf32>
    %275 = arith.addf %273, %274 : vector<8x1xf32>
    %276 = math.rsqrt %275 : vector<8x1xf32>
    %277 = vector.broadcast %276 : vector<8x1xf32> to vector<8x32xf32>
    %278 = arith.mulf %268, %277 : vector<8x32xf32>
    %279 = vector.broadcast %262 : vector<1x32xf32> to vector<8x32xf32>
    %280 = arith.mulf %278, %279 : vector<8x32xf32>
    %281 = arith.truncf %280 : vector<8x32xf32> to vector<8x32xbf16>
    %c0_115 = arith.constant 0 : index
    %c0_116 = arith.constant 0 : index
    %c0_117 = arith.constant 0 : index
    %282 = vector.load %arg13[%c0_115, %c0_116, %c0_117] : memref<1x32x128xbf16, #tpu.memory_space<vmem>>, vector<1x32x128xbf16>
    %283 = vector.shape_cast %282 : vector<1x32x128xbf16> to vector<32x128xbf16>
    %cst_118 = arith.constant dense<0.000000e+00> : vector<8x128xf32>
    %284 = tpu.matmul %281, %283, %cst_118 {dimension_numbers = #tpu.dot_dimension_numbers<[1], [0], [0], [1], [0, 0, 1, 1], [], []>} : vector<8x32xbf16>, vector<32x128xbf16>, vector<8x128xf32> -> vector<8x128xf32>
    %c0_119 = arith.constant 0 : index
    %c0_120 = arith.constant 0 : index
    %c0_121 = arith.constant 0 : index
    %285 = vector.load %arg14[%c0_119, %c0_120, %c0_121] : memref<1x32x128xbf16, #tpu.memory_space<vmem>>, vector<1x32x128xbf16>
    %286 = vector.shape_cast %285 : vector<1x32x128xbf16> to vector<32x128xbf16>
    %cst_122 = arith.constant dense<0.000000e+00> : vector<8x128xf32>
    %287 = tpu.matmul %281, %286, %cst_122 {dimension_numbers = #tpu.dot_dimension_numbers<[1], [0], [0], [1], [0, 0, 1, 1], [], []>} : vector<8x32xbf16>, vector<32x128xbf16>, vector<8x128xf32> -> vector<8x128xf32>
    %288 = arith.negf %287 : vector<8x128xf32>
    %289 = math.exp %288 : vector<8x128xf32>
    %cst_123 = arith.constant 1.000000e+00 : f32
    %290 = vector.broadcast %cst_123 : f32 to vector<8x128xf32>
    %291 = arith.addf %290, %289 : vector<8x128xf32>
    %292 = arith.divf %290, %291 : vector<8x128xf32>
    %293 = arith.mulf %287, %292 : vector<8x128xf32>
    %294 = arith.mulf %284, %293 : vector<8x128xf32>
    %295 = arith.truncf %294 : vector<8x128xf32> to vector<8x128xbf16>
    %c0_124 = arith.constant 0 : index
    %c0_125 = arith.constant 0 : index
    %c0_126 = arith.constant 0 : index
    %296 = vector.load %arg15[%c0_124, %c0_125, %c0_126] : memref<1x128x32xbf16, #tpu.memory_space<vmem>>, vector<1x128x32xbf16>
    %297 = vector.shape_cast %296 : vector<1x128x32xbf16> to vector<128x32xbf16>
    %cst_127 = arith.constant dense<0.000000e+00> : vector<8x32xf32>
    %298 = tpu.matmul %295, %297, %cst_127 {dimension_numbers = #tpu.dot_dimension_numbers<[1], [0], [0], [1], [0, 0, 1, 1], [], []>} : vector<8x128xbf16>, vector<128x32xbf16>, vector<8x32xf32> -> vector<8x32xf32>
    %299 = arith.addf %260, %298 : vector<8x32xf32>
    %c0_128 = arith.constant 0 : index
    %c0_129 = arith.constant 0 : index
    %300 = vector.load %arg23[%c0_128, %c0_129] : memref<8x32xf32, #tpu.memory_space<vmem>>, vector<8x32xf32>
    tpu.vector_store %arg23[%c0_128, %c0_129], %299 {strides = array<i32>} : memref<8x32xf32, #tpu.memory_space<vmem>>, vector<8x32xf32>,
    %c1_i32_130 = arith.constant 1 : i32
    %301 = arith.cmpi eq, %arg1, %c1_i32_130 : i32
    %302 = arith.extui %301 : i1 to i32
    %c0_i32_131 = arith.constant 0 : i32
    %303 = arith.cmpi ne, %302, %c0_i32_131 : i32
    scf.if %303 {
      %cst_132 = arith.constant dense<0xFF800000> : vector<8xf32>
      %304 = vector.multi_reduction <maximumf>, %299, %cst_132 [1] : vector<8x32xf32> to vector<8xf32>
      %305 = vector.shape_cast %304 : vector<8xf32> to vector<8x1xf32>
      %306 = vector.broadcast %305 : vector<8x1xf32> to vector<8x32xf32>
      %307 = arith.divf %299, %306 : vector<8x32xf32>
      %c0_133 = arith.constant 0 : index
      %c0_134 = arith.constant 0 : index
      %308 = vector.load %arg16[%c0_133, %c0_134] : memref<1x32xf32, #tpu.memory_space<vmem>>, vector<1x32xf32>
      %cst_135 = arith.constant dense<0.000000e+00> : vector<8xf32>
      %309 = vector.multi_reduction <add>, %307, %cst_135 [1] : vector<8x32xf32> to vector<8xf32>
      %310 = vector.shape_cast %309 : vector<8xf32> to vector<8x1xf32>
      %cst_136 = arith.constant 3.200000e+01 : f32
      %311 = vector.broadcast %cst_136 : f32 to vector<8x1xf32>
      %312 = arith.divf %310, %311 : vector<8x1xf32>
      %313 = vector.broadcast %312 : vector<8x1xf32> to vector<8x32xf32>
      %314 = arith.subf %307, %313 : vector<8x32xf32>
      %315 = arith.mulf %314, %314 : vector<8x32xf32>
      %cst_137 = arith.constant dense<0.000000e+00> : vector<8xf32>
      %316 = vector.multi_reduction <add>, %315, %cst_137 [1] : vector<8x32xf32> to vector<8xf32>
      %317 = vector.shape_cast %316 : vector<8xf32> to vector<8x1xf32>
      %cst_138 = arith.constant 3.200000e+01 : f32
      %318 = vector.broadcast %cst_138 : f32 to vector<8x1xf32>
      %319 = arith.divf %317, %318 : vector<8x1xf32>
      %cst_139 = arith.constant 9.99999974E-6 : f32
      %320 = vector.broadcast %cst_139 : f32 to vector<8x1xf32>
      %321 = arith.addf %319, %320 : vector<8x1xf32>
      %322 = math.rsqrt %321 : vector<8x1xf32>
      %323 = vector.broadcast %322 : vector<8x1xf32> to vector<8x32xf32>
      %324 = arith.mulf %314, %323 : vector<8x32xf32>
      %325 = vector.broadcast %308 : vector<1x32xf32> to vector<8x32xf32>
      %326 = arith.mulf %324, %325 : vector<8x32xf32>
      %327 = arith.truncf %326 : vector<8x32xf32> to vector<8x32xbf16>
      %c0_140 = arith.constant 0 : index
      %c0_141 = arith.constant 0 : index
      %328 = vector.load %arg17[%c0_140, %c0_141] : memref<32x128xbf16, #tpu.memory_space<vmem>>, vector<32x128xbf16>
      %cst_142 = arith.constant dense<0.000000e+00> : vector<8x128xf32>
      %329 = tpu.matmul %327, %328, %cst_142 {dimension_numbers = #tpu.dot_dimension_numbers<[1], [0], [0], [1], [0, 0, 1, 1], [], []>} : vector<8x32xbf16>, vector<32x128xbf16>, vector<8x128xf32> -> vector<8x128xf32>
      %330 = arith.truncf %329 : vector<8x128xf32> to vector<8x128xbf16>
      %c0_143 = arith.constant 0 : index
      %c0_144 = arith.constant 0 : index
      %331 = vector.load %arg22[%c0_143, %c0_144] : memref<8x128xbf16, #tpu.memory_space<vmem>>, vector<8x128xbf16>
      tpu.vector_store %arg22[%c0_143, %c0_144], %330 {strides = array<i32>} : memref<8x128xbf16, #tpu.memory_space<vmem>>, vector<8x128xbf16>,
    } else {
    }
    return
  }
  func.func @transform_0(%arg0: i32, %arg1: i32) -> (i32, i32) {
    %c0_i32 = arith.constant 0 : i32
    %c0_i32_0 = arith.constant 0 : i32
    return %arg0, %c0_i32 : i32, i32
  }
  func.func @transform_1(%arg0: i32, %arg1: i32) -> (i32, i32) {
    %c0_i32 = arith.constant 0 : i32
    %c0_i32_0 = arith.constant 0 : i32
    %c0_i32_1 = arith.constant 0 : i32
    return %c0_i32, %c0_i32_0 : i32, i32
  }
  func.func @transform_2(%arg0: i32, %arg1: i32) -> (i32, i32) {
    %c0_i32 = arith.constant 0 : i32
    %c0_i32_0 = arith.constant 0 : i32
    %c0_i32_1 = arith.constant 0 : i32
    return %c0_i32, %c0_i32_0 : i32, i32
  }
  func.func @transform_3(%arg0: i32, %arg1: i32) -> (i32, i32, i32) {
    %c0_i32 = arith.constant 0 : i32
    %c0_i32_0 = arith.constant 0 : i32
    %c0_i32_1 = arith.constant 0 : i32
    return %arg1, %c0_i32, %c0_i32_0 : i32, i32, i32
  }
  func.func @transform_4(%arg0: i32, %arg1: i32) -> (i32, i32, i32) {
    %c0_i32 = arith.constant 0 : i32
    %c0_i32_0 = arith.constant 0 : i32
    %c0_i32_1 = arith.constant 0 : i32
    return %arg1, %c0_i32, %c0_i32_0 : i32, i32, i32
  }
  func.func @transform_5(%arg0: i32, %arg1: i32) -> (i32, i32, i32) {
    %c0_i32 = arith.constant 0 : i32
    %c0_i32_0 = arith.constant 0 : i32
    %c0_i32_1 = arith.constant 0 : i32
    return %arg1, %c0_i32, %c0_i32_0 : i32, i32, i32
  }
  func.func @transform_6(%arg0: i32, %arg1: i32) -> (i32, i32, i32) {
    %c0_i32 = arith.constant 0 : i32
    %c0_i32_0 = arith.constant 0 : i32
    %c0_i32_1 = arith.constant 0 : i32
    return %arg1, %c0_i32, %c0_i32_0 : i32, i32, i32
  }
  func.func @transform_7(%arg0: i32, %arg1: i32) -> (i32, i32, i32) {
    %c0_i32 = arith.constant 0 : i32
    %c0_i32_0 = arith.constant 0 : i32
    %c0_i32_1 = arith.constant 0 : i32
    return %arg1, %c0_i32, %c0_i32_0 : i32, i32, i32
  }
  func.func @transform_8(%arg0: i32, %arg1: i32) -> (i32, i32, i32) {
    %c0_i32 = arith.constant 0 : i32
    %c0_i32_0 = arith.constant 0 : i32
    %c0_i32_1 = arith.constant 0 : i32
    return %arg1, %c0_i32, %c0_i32_0 : i32, i32, i32
  }
  func.func @transform_9(%arg0: i32, %arg1: i32) -> (i32, i32, i32) {
    %c0_i32 = arith.constant 0 : i32
    %c0_i32_0 = arith.constant 0 : i32
    %c0_i32_1 = arith.constant 0 : i32
    return %arg1, %c0_i32, %c0_i32_0 : i32, i32, i32
  }
  func.func @transform_10(%arg0: i32, %arg1: i32) -> (i32, i32, i32) {
    %c0_i32 = arith.constant 0 : i32
    %c0_i32_0 = arith.constant 0 : i32
    %c0_i32_1 = arith.constant 0 : i32
    return %arg1, %c0_i32, %c0_i32_0 : i32, i32, i32
  }
  func.func @transform_11(%arg0: i32, %arg1: i32) -> (i32, i32, i32) {
    %c0_i32 = arith.constant 0 : i32
    %c0_i32_0 = arith.constant 0 : i32
    %c0_i32_1 = arith.constant 0 : i32
    return %arg1, %c0_i32, %c0_i32_0 : i32, i32, i32
  }
  func.func @transform_12(%arg0: i32, %arg1: i32) -> (i32, i32, i32) {
    %c0_i32 = arith.constant 0 : i32
    %c0_i32_0 = arith.constant 0 : i32
    %c0_i32_1 = arith.constant 0 : i32
    return %arg1, %c0_i32, %c0_i32_0 : i32, i32, i32
  }
  func.func @transform_13(%arg0: i32, %arg1: i32) -> (i32, i32, i32) {
    %c0_i32 = arith.constant 0 : i32
    %c0_i32_0 = arith.constant 0 : i32
    %c0_i32_1 = arith.constant 0 : i32
    return %arg1, %c0_i32, %c0_i32_0 : i32, i32, i32
  }
  func.func @transform_14(%arg0: i32, %arg1: i32) -> (i32, i32) {
    %c0_i32 = arith.constant 0 : i32
    %c0_i32_0 = arith.constant 0 : i32
    %c0_i32_1 = arith.constant 0 : i32
    return %c0_i32, %c0_i32_0 : i32, i32
  }
  func.func @transform_15(%arg0: i32, %arg1: i32) -> (i32, i32) {
    %c0_i32 = arith.constant 0 : i32
    %c0_i32_0 = arith.constant 0 : i32
    %c0_i32_1 = arith.constant 0 : i32
    return %c0_i32, %c0_i32_0 : i32, i32
  }
  func.func @transform_16(%arg0: i32, %arg1: i32) -> (i32, i32, i32) {
    %c0_i32 = arith.constant 0 : i32
    %c0_i32_0 = arith.constant 0 : i32
    %c0_i32_1 = arith.constant 0 : i32
    %c0_i32_2 = arith.constant 0 : i32
    return %c0_i32, %c0_i32_0, %c0_i32_1 : i32, i32, i32
  }
  func.func @transform_17(%arg0: i32, %arg1: i32) -> (i32, i32) {
    %c0_i32 = arith.constant 0 : i32
    %c0_i32_0 = arith.constant 0 : i32
    %c0_i32_1 = arith.constant 0 : i32
    return %c0_i32, %c0_i32_0 : i32, i32
  }
  func.func @transform_18(%arg0: i32, %arg1: i32) -> (i32, i32) {
    %c0_i32 = arith.constant 0 : i32
    %c0_i32_0 = arith.constant 0 : i32
    %c0_i32_1 = arith.constant 0 : i32
    return %c0_i32, %c0_i32_0 : i32, i32
  }
  func.func @transform_19(%arg0: i32, %arg1: i32) -> (i32, i32) {
    %c0_i32 = arith.constant 0 : i32
    %c0_i32_0 = arith.constant 0 : i32
    %c0_i32_1 = arith.constant 0 : i32
    return %c0_i32, %c0_i32_0 : i32, i32
  }
  func.func @transform_20(%arg0: i32, %arg1: i32) -> (i32, i32) {
    %c0_i32 = arith.constant 0 : i32
    %c0_i32_0 = arith.constant 0 : i32
    return %arg0, %c0_i32 : i32, i32
  }
}

</mosaic_0001>

<llo_original>
// kernel: tpu_custom_call.1
$region0: #{tpu_custom_call.1}
  #allocation0 [shape = 'u32[]', space=smem, size = 0x4, offset = 0x4, fixed_abs, tag = 'smem constant byte address 0x4 - core index']
  #allocation1 [shape = 'u32[144,128]{1,0:T(1,128)}', space=vmem, size = 0x12000, scoped, tag = 'internal scratch']
  #allocation2 [shape = 'f32[8,32]{1,0:T(8,128)}', space=vmem, size = 0x1000, scoped, tag = 'scratch operand']
  #allocation3 [shape = 'bf16[1,128,16]{2,1,0:T(16,128)(2,1)}', space=vmem, size = 0x8000, scoped, tag = 'scratch operand']
  #allocation4 [shape = 'bf16[1,128,16]{2,1,0:T(16,128)(2,1)}', space=vmem, size = 0x8000, scoped, tag = 'scratch operand']
  %s0 = inlined_call_operand.vmem [shape: f32[16,32], index: 0, kind: input, shape index: {}]
  %s1 = inlined_call_operand.vmem [shape: bf16[32,32], index: 1, kind: input, shape index: {}]
  %s2 = inlined_call_operand.vmem [shape: f32[1,32], index: 2, kind: input, shape index: {}]
  %s3 = inlined_call_operand.vmem [shape: f32[2,1,32], index: 3, kind: input, shape index: {}]
  %s4 = inlined_call_operand.vmem [shape: bf16[2,32,64], index: 4, kind: input, shape index: {}]
  %s5 = inlined_call_operand.vmem [shape: bf16[2,32,16], index: 5, kind: input, shape index: {}]
  %s6 = inlined_call_operand.vmem [shape: bf16[2,32,16], index: 6, kind: input, shape index: {}]
  %s7 = inlined_call_operand.vmem [shape: bf16[2,2,16], index: 7, kind: input, shape index: {}]
  %s8 = inlined_call_operand.vmem [shape: bf16[2,64,32], index: 8, kind: input, shape index: {}]
  %s9 = inlined_call_operand.vmem [shape: f32[2,1,32], index: 9, kind: input, shape index: {}]
  %s10 = inlined_call_operand.vmem [shape: f32[2,1,32], index: 10, kind: input, shape index: {}]
  %s11 = inlined_call_operand.vmem [shape: bf16[2,32,128], index: 11, kind: input, shape index: {}]
  %s12 = inlined_call_operand.vmem [shape: bf16[2,32,128], index: 12, kind: input, shape index: {}]
  %s13 = inlined_call_operand.vmem [shape: bf16[2,128,32], index: 13, kind: input, shape index: {}]
  %s14 = inlined_call_operand.vmem [shape: f32[1,32], index: 14, kind: input, shape index: {}]
  %s15 = inlined_call_operand.vmem [shape: bf16[32,128], index: 15, kind: input, shape index: {}]
  %s16 = inlined_call_operand.vmem [shape: f32[4,8,128], index: 16, kind: input, shape index: {}]
  %s17 = inlined_call_operand.vmem [shape: f32[8,16], index: 17, kind: input, shape index: {}]
  %s18 = inlined_call_operand.vmem [shape: f32[8,16], index: 18, kind: input, shape index: {}]
  %s19 = inlined_call_operand.vmem [shape: f32[8,16], index: 19, kind: input, shape index: {}]
  %s20 = inlined_call_operand.hbm [shape: bf16[16,128], index: 20, kind: output, shape index: {}]
  %s21 = sld [smem:[#allocation0]]
  $region121: #{tpu_custom_call.1} parent=0
    _
  %s23 = ssub.s32 1, %s21
  %s24 = scalar_select 0, %s23, %s21
  $region1: #{tpu_custom_call.1} parent=0
    #allocation5 [shape = 'u8[4096]{0}', space=vmem, size = 0x1000, scoped, tag = 'output window, operand 0']
    #allocation6 [shape = 's32[2]{0}', space=sflag, size = 0x8, scoped, tag = 'scoped memory for tpu_custom_call.1']
    %25 = vsyncpa [#allocation6], 0
    %s26 = scalar_lea.sflag [#allocation6], 1
    %27 = vsyncpa %s26, 0
    loop: start=0, step=1, limit=6
    $region2: #{tpu_custom_call.1} parent=1 // loop_pre_header
      _
    $region3: #{tpu_custom_call.1} parent=1 // loop_header
      %s29 = sphi 0, %s33
      %p30 = scmp.ge.s32.totalorder %s29, 6
      %s36 = sphi 0, %s48
      %s37 = sphi 0, %s44
      %s38 = sphi 0, %s36
      %s39 = sphi 0, %s37
      %s40 = sphi 0, %s38
      %s41 = sphi 0, %s39
      %s51 = sphi 0, %s53
      %s54 = sphi 0, %s51
      %s55 = sphi 0, %s54
      %s71 = sphi 0, %s55
      %s75 = sphi 0, %s75
      %s77 = sphi 0, %s75
      %s78 = sphi 0, %s77
      %s92 = sphi 0, %s78
      %s96 = sphi 0, %s96
      %s98 = sphi 0, %s96
      %s99 = sphi 0, %s98
      %s113 = sphi 0, %s99
      %s119 = sphi 0, %s121
      %s122 = sphi 0, %s119
      %s123 = sphi 0, %s122
      %s139 = sphi 0, %s123
      %s145 = sphi 0, %s147
      %s148 = sphi 0, %s145
      %s149 = sphi 0, %s148
      %s165 = sphi 0, %s149
      %s171 = sphi 0, %s173
      %s174 = sphi 0, %s171
      %s175 = sphi 0, %s174
      %s191 = sphi 0, %s175
      %s197 = sphi 0, %s199
      %s200 = sphi 0, %s197
      %s201 = sphi 0, %s200
      %s217 = sphi 0, %s201
      %s223 = sphi 0, %s225
      %s226 = sphi 0, %s223
      %s227 = sphi 0, %s226
      %s243 = sphi 0, %s227
      %s249 = sphi 0, %s251
      %s252 = sphi 0, %s249
      %s253 = sphi 0, %s252
      %s269 = sphi 0, %s253
      %s275 = sphi 0, %s277
      %s278 = sphi 0, %s275
      %s279 = sphi 0, %s278
      %s295 = sphi 0, %s279
      %s301 = sphi 0, %s303
      %s304 = sphi 0, %s301
      %s305 = sphi 0, %s304
      %s321 = sphi 0, %s305
      %s327 = sphi 0, %s329
      %s330 = sphi 0, %s327
      %s331 = sphi 0, %s330
      %s347 = sphi 0, %s331
      %s353 = sphi 0, %s355
      %s356 = sphi 0, %s353
      %s357 = sphi 0, %s356
      %s373 = sphi 0, %s357
      %s379 = sphi 0, %s381
      %s382 = sphi 0, %s379
      %s383 = sphi 0, %s382
      %s399 = sphi 0, %s383
      %s403 = sphi 0, %s403
      %s405 = sphi 0, %s403
      %s406 = sphi 0, %s405
      %s420 = sphi 0, %s406
      %s424 = sphi 0, %s424
      %s426 = sphi 0, %s424
      %s427 = sphi 0, %s426
      %s441 = sphi 0, %s427
      %s445 = sphi 0, %s445
      %s447 = sphi 0, %s445
      %s448 = sphi 0, %s447
      %s462 = sphi 0, %s448
      %s466 = sphi 0, %s466
      %s468 = sphi 0, %s466
      %s469 = sphi 0, %s468
      %s483 = sphi 0, %s469
      %s487 = sphi 0, %s487
      %s489 = sphi 0, %s487
      %s490 = sphi 0, %s489
      %s504 = sphi 0, %s490
      %s508 = sphi 0, %s508
      %s510 = sphi 0, %s508
      %s511 = sphi 0, %s510
      %s525 = sphi 0, %s511
      %s531 = sphi 0, %s533
      %s534 = sphi 0, %s531
      %s535 = sphi 0, %s534
      %s551 = sphi 0, %s535
    $region4: #{tpu_custom_call.1} parent=1 // loop_header_branch
      %32 = sbr.rel (%p30) target = $region8
    $region5: #{tpu_custom_call.1} parent=1 // loop_body
      %s34 = ssub.s32 %s29, 1
      %s35 = ssub.s32 %s29, 2
      %s42 = sadd.s32 1, %s37
      %p43 = scmp.ge.s32.totalorder %s42, 2
      %s44 = scalar_select %p43, 0, %s42
      %s45 = sadd.s32 1, %s36
      %s46 = scalar_select %p43, %s45, %s36
      %p47 = scmp.ge.s32.totalorder %s46, 2
      %s48 = scalar_select %p47, 0, %s46
      %s49 = ssub.s32 %s36, %s48
      %p50 = scmp.eq.s32.totalorder %s49, 0
      %s52 = sadd.s32 %s51, 1
      %s53 = scalar_select %p50, %s51, %s52
      %p56 = pneg %p50
      %p57 = scmp.eq.s32.totalorder %s29, 3
      %p58 = por %p56, %p57
      %p59 = scmp.ne.s32.totalorder %s51, %s54
      %p60 = scmp.eq.s32.totalorder %s29, 0
      %p61 = por %p59, %p60
      %p62 = scmp.ne.s32.totalorder %s51, %s54
      %p63 = scmp.eq.s32.totalorder %s34, 3
      %p64 = por %p62, %p63
      %p65 = scmp.ne.s32.totalorder %s54, %s55
      %p66 = scmp.eq.s32.totalorder %s34, 0
      %p67 = por %p65, %p66
      %p68 = scmp.ne.s32.totalorder %s54, %s55
      %p69 = scmp.eq.s32.totalorder %s35, 3
      %p70 = por %p68, %p69
      %p72 = scmp.ne.s32.totalorder %s55, %s71
      %p73 = scmp.eq.s32.totalorder %s35, 0
      %p74 = por %p72, %p73
      %s76 = sadd.s32 %s75, 1
      %p79 = scmp.eq.s32.totalorder %s29, 3
      %p80 = scmp.ne.s32.totalorder %s75, %s77
      %p81 = scmp.eq.s32.totalorder %s29, 0
      %p82 = por %p80, %p81
      %p83 = scmp.ne.s32.totalorder %s75, %s77
      %p84 = scmp.eq.s32.totalorder %s34, 3
      %p85 = por %p83, %p84
      %p86 = scmp.ne.s32.totalorder %s77, %s78
      %p87 = scmp.eq.s32.totalorder %s34, 0
      %p88 = por %p86, %p87
      %p89 = scmp.ne.s32.totalorder %s77, %s78
      %p90 = scmp.eq.s32.totalorder %s35, 3
      %p91 = por %p89, %p90
      %p93 = scmp.ne.s32.totalorder %s78, %s92
      %p94 = scmp.eq.s32.totalorder %s35, 0
      %p95 = por %p93, %p94
      %s97 = sadd.s32 %s96, 1
      %p100 = scmp.eq.s32.totalorder %s29, 3
      %p101 = scmp.ne.s32.totalorder %s96, %s98
      %p102 = scmp.eq.s32.totalorder %s29, 0
      %p103 = por %p101, %p102
      %p104 = scmp.ne.s32.totalorder %s96, %s98
      %p105 = scmp.eq.s32.totalorder %s34, 3
      %p106 = por %p104, %p105
      %p107 = scmp.ne.s32.totalorder %s98, %s99
      %p108 = scmp.eq.s32.totalorder %s34, 0
      %p109 = por %p107, %p108
      %p110 = scmp.ne.s32.totalorder %s98, %s99
      %p111 = scmp.eq.s32.totalorder %s35, 3
      %p112 = por %p110, %p111
      %p114 = scmp.ne.s32.totalorder %s99, %s113
      %p115 = scmp.eq.s32.totalorder %s35, 0
      %p116 = por %p114, %p115
      %s117 = ssub.s32 %s37, %s44
      %p118 = scmp.eq.s32.totalorder %s117, 0
      %s120 = sadd.s32 %s119, 1
      %s121 = scalar_select %p118, %s119, %s120
      %p124 = pneg %p118
      %p125 = scmp.eq.s32.totalorder %s29, 3
      %p126 = por %p124, %p125
      %p127 = scmp.ne.s32.totalorder %s119, %s122
      %p128 = scmp.eq.s32.totalorder %s29, 0
      %p129 = por %p127, %p128
      %p130 = scmp.ne.s32.totalorder %s119, %s122
      %p131 = scmp.eq.s32.totalorder %s34, 3
      %p132 = por %p130, %p131
      %p133 = scmp.ne.s32.totalorder %s122, %s123
      %p134 = scmp.eq.s32.totalorder %s34, 0
      %p135 = por %p133, %p134
      %p136 = scmp.ne.s32.totalorder %s122, %s123
      %p137 = scmp.eq.s32.totalorder %s35, 3
      %p138 = por %p136, %p137
      %p140 = scmp.ne.s32.totalorder %s123, %s139
      %p141 = scmp.eq.s32.totalorder %s35, 0
      %p142 = por %p140, %p141
      %s143 = ssub.s32 %s37, %s44
      %p144 = scmp.eq.s32.totalorder %s143, 0
      %s146 = sadd.s32 %s145, 1
      %s147 = scalar_select %p144, %s145, %s146
      %p150 = pneg %p144
      %p151 = scmp.eq.s32.totalorder %s29, 3
      %p152 = por %p150, %p151
      %p153 = scmp.ne.s32.totalorder %s145, %s148
      %p154 = scmp.eq.s32.totalorder %s29, 0
      %p155 = por %p153, %p154
      %p156 = scmp.ne.s32.totalorder %s145, %s148
      %p157 = scmp.eq.s32.totalorder %s34, 3
      %p158 = por %p156, %p157
      %p159 = scmp.ne.s32.totalorder %s148, %s149
      %p160 = scmp.eq.s32.totalorder %s34, 0
      %p161 = por %p159, %p160
      %p162 = scmp.ne.s32.totalorder %s148, %s149
      %p163 = scmp.eq.s32.totalorder %s35, 3
      %p164 = por %p162, %p163
      %p166 = scmp.ne.s32.totalorder %s149, %s165
      %p167 = scmp.eq.s32.totalorder %s35, 0
      %p168 = por %p166, %p167
      %s169 = ssub.s32 %s37, %s44
      %p170 = scmp.eq.s32.totalorder %s169, 0
      %s172 = sadd.s32 %s171, 1
      %s173 = scalar_select %p170, %s171, %s172
      %p176 = pneg %p170
      %p177 = scmp.eq.s32.totalorder %s29, 3
      %p178 = por %p176, %p177
      %p179 = scmp.ne.s32.totalorder %s171, %s174
      %p180 = scmp.eq.s32.totalorder %s29, 0
      %p181 = por %p179, %p180
      %p182 = scmp.ne.s32.totalorder %s171, %s174
      %p183 = scmp.eq.s32.totalorder %s34, 3
      %p184 = por %p182, %p183
      %p185 = scmp.ne.s32.totalorder %s174, %s175
      %p186 = scmp.eq.s32.totalorder %s34, 0
      %p187 = por %p185, %p186
      %p188 = scmp.ne.s32.totalorder %s174, %s175
      %p189 = scmp.eq.s32.totalorder %s35, 3
      %p190 = por %p188, %p189
      %p192 = scmp.ne.s32.totalorder %s175, %s191
      %p193 = scmp.eq.s32.totalorder %s35, 0
      %p194 = por %p192, %p193
      %s195 = ssub.s32 %s37, %s44
      %p196 = scmp.eq.s32.totalorder %s195, 0
      %s198 = sadd.s32 %s197, 1
      %s199 = scalar_select %p196, %s197, %s198
      %p202 = pneg %p196
      %p203 = scmp.eq.s32.totalorder %s29, 3
      %p204 = por %p202, %p203
      %p205 = scmp.ne.s32.totalorder %s197, %s200
      %p206 = scmp.eq.s32.totalorder %s29, 0
      %p207 = por %p205, %p206
      %p208 = scmp.ne.s32.totalorder %s197, %s200
      %p209 = scmp.eq.s32.totalorder %s34, 3
      %p210 = por %p208, %p209
      %p211 = scmp.ne.s32.totalorder %s200, %s201
      %p212 = scmp.eq.s32.totalorder %s34, 0
      %p213 = por %p211, %p212
      %p214 = scmp.ne.s32.totalorder %s200, %s201
      %p215 = scmp.eq.s32.totalorder %s35, 3
      %p216 = por %p214, %p215
      %p218 = scmp.ne.s32.totalorder %s201, %s217
      %p219 = scmp.eq.s32.totalorder %s35, 0
      %p220 = por %p218, %p219
      %s221 = ssub.s32 %s37, %s44
      %p222 = scmp.eq.s32.totalorder %s221, 0
      %s224 = sadd.s32 %s223, 1
      %s225 = scalar_select %p222, %s223, %s224
      %p228 = pneg %p222
      %p229 = scmp.eq.s32.totalorder %s29, 3
      %p230 = por %p228, %p229
      %p231 = scmp.ne.s32.totalorder %s223, %s226
      %p232 = scmp.eq.s32.totalorder %s29, 0
      %p233 = por %p231, %p232
      %p234 = scmp.ne.s32.totalorder %s223, %s226
      %p235 = scmp.eq.s32.totalorder %s34, 3
      %p236 = por %p234, %p235
      %p237 = scmp.ne.s32.totalorder %s226, %s227
      %p238 = scmp.eq.s32.totalorder %s34, 0
      %p239 = por %p237, %p238
      %p240 = scmp.ne.s32.totalorder %s226, %s227
      %p241 = scmp.eq.s32.totalorder %s35, 3
      %p242 = por %p240, %p241
      %p244 = scmp.ne.s32.totalorder %s227, %s243
      %p245 = scmp.eq.s32.totalorder %s35, 0
      %p246 = por %p244, %p245
      %s247 = ssub.s32 %s37, %s44
      %p248 = scmp.eq.s32.totalorder %s247, 0
      %s250 = sadd.s32 %s249, 1
      %s251 = scalar_select %p248, %s249, %s250
      %p254 = pneg %p248
      %p255 = scmp.eq.s32.totalorder %s29, 3
      %p256 = por %p254, %p255
      %p257 = scmp.ne.s32.totalorder %s249, %s252
      %p258 = scmp.eq.s32.totalorder %s29, 0
      %p259 = por %p257, %p258
      %p260 = scmp.ne.s32.totalorder %s249, %s252
      %p261 = scmp.eq.s32.totalorder %s34, 3
      %p262 = por %p260, %p261
      %p263 = scmp.ne.s32.totalorder %s252, %s253
      %p264 = scmp.eq.s32.totalorder %s34, 0
      %p265 = por %p263, %p264
      %p266 = scmp.ne.s32.totalorder %s252, %s253
      %p267 = scmp.eq.s32.totalorder %s35, 3
      %p268 = por %p266, %p267
      %p270 = scmp.ne.s32.totalorder %s253, %s269
      %p271 = scmp.eq.s32.totalorder %s35, 0
      %p272 = por %p270, %p271
      %s273 = ssub.s32 %s37, %s44
      %p274 = scmp.eq.s32.totalorder %s273, 0
      %s276 = sadd.s32 %s275, 1
      %s277 = scalar_select %p274, %s275, %s276
      %p280 = pneg %p274
      %p281 = scmp.eq.s32.totalorder %s29, 3
      %p282 = por %p280, %p281
      %p283 = scmp.ne.s32.totalorder %s275, %s278
      %p284 = scmp.eq.s32.totalorder %s29, 0
      %p285 = por %p283, %p284
      %p286 = scmp.ne.s32.totalorder %s275, %s278
      %p287 = scmp.eq.s32.totalorder %s34, 3
      %p288 = por %p286, %p287
      %p289 = scmp.ne.s32.totalorder %s278, %s279
      %p290 = scmp.eq.s32.totalorder %s34, 0
      %p291 = por %p289, %p290
      %p292 = scmp.ne.s32.totalorder %s278, %s279
      %p293 = scmp.eq.s32.totalorder %s35, 3
      %p294 = por %p292, %p293
      %p296 = scmp.ne.s32.totalorder %s279, %s295
      %p297 = scmp.eq.s32.totalorder %s35, 0
      %p298 = por %p296, %p297
      %s299 = ssub.s32 %s37, %s44
      %p300 = scmp.eq.s32.totalorder %s299, 0
      %s302 = sadd.s32 %s301, 1
      %s303 = scalar_select %p300, %s301, %s302
      %p306 = pneg %p300
      %p307 = scmp.eq.s32.totalorder %s29, 3
      %p308 = por %p306, %p307
      %p309 = scmp.ne.s32.totalorder %s301, %s304
      %p310 = scmp.eq.s32.totalorder %s29, 0
      %p311 = por %p309, %p310
      %p312 = scmp.ne.s32.totalorder %s301, %s304
      %p313 = scmp.eq.s32.totalorder %s34, 3
      %p314 = por %p312, %p313
      %p315 = scmp.ne.s32.totalorder %s304, %s305
      %p316 = scmp.eq.s32.totalorder %s34, 0
      %p317 = por %p315, %p316
      %p318 = scmp.ne.s32.totalorder %s304, %s305
      %p319 = scmp.eq.s32.totalorder %s35, 3
      %p320 = por %p318, %p319
      %p322 = scmp.ne.s32.totalorder %s305, %s321
      %p323 = scmp.eq.s32.totalorder %s35, 0
      %p324 = por %p322, %p323
      %s325 = ssub.s32 %s37, %s44
      %p326 = scmp.eq.s32.totalorder %s325, 0
      %s328 = sadd.s32 %s327, 1
      %s329 = scalar_select %p326, %s327, %s328
      %p332 = pneg %p326
      %p333 = scmp.eq.s32.totalorder %s29, 3
      %p334 = por %p332, %p333
      %p335 = scmp.ne.s32.totalorder %s327, %s330
      %p336 = scmp.eq.s32.totalorder %s29, 0
      %p337 = por %p335, %p336
      %p338 = scmp.ne.s32.totalorder %s327, %s330
      %p339 = scmp.eq.s32.totalorder %s34, 3
      %p340 = por %p338, %p339
      %p341 = scmp.ne.s32.totalorder %s330, %s331
      %p342 = scmp.eq.s32.totalorder %s34, 0
      %p343 = por %p341, %p342
      %p344 = scmp.ne.s32.totalorder %s330, %s331
      %p345 = scmp.eq.s32.totalorder %s35, 3
      %p346 = por %p344, %p345
      %p348 = scmp.ne.s32.totalorder %s331, %s347
      %p349 = scmp.eq.s32.totalorder %s35, 0
      %p350 = por %p348, %p349
      %s351 = ssub.s32 %s37, %s44
      %p352 = scmp.eq.s32.totalorder %s351, 0
      %s354 = sadd.s32 %s353, 1
      %s355 = scalar_select %p352, %s353, %s354
      %p358 = pneg %p352
      %p359 = scmp.eq.s32.totalorder %s29, 3
      %p360 = por %p358, %p359
      %p361 = scmp.ne.s32.totalorder %s353, %s356
      %p362 = scmp.eq.s32.totalorder %s29, 0
      %p363 = por %p361, %p362
      %p364 = scmp.ne.s32.totalorder %s353, %s356
      %p365 = scmp.eq.s32.totalorder %s34, 3
      %p366 = por %p364, %p365
      %p367 = scmp.ne.s32.totalorder %s356, %s357
      %p368 = scmp.eq.s32.totalorder %s34, 0
      %p369 = por %p367, %p368
      %p370 = scmp.ne.s32.totalorder %s356, %s357
      %p371 = scmp.eq.s32.totalorder %s35, 3
      %p372 = por %p370, %p371
      %p374 = scmp.ne.s32.totalorder %s357, %s373
      %p375 = scmp.eq.s32.totalorder %s35, 0
      %p376 = por %p374, %p375
      %s377 = ssub.s32 %s37, %s44
      %p378 = scmp.eq.s32.totalorder %s377, 0
      %s380 = sadd.s32 %s379, 1
      %s381 = scalar_select %p378, %s379, %s380
      %p384 = pneg %p378
      %p385 = scmp.eq.s32.totalorder %s29, 3
      %p386 = por %p384, %p385
      %p387 = scmp.ne.s32.totalorder %s379, %s382
      %p388 = scmp.eq.s32.totalorder %s29, 0
      %p389 = por %p387, %p388
      %p390 = scmp.ne.s32.totalorder %s379, %s382
      %p391 = scmp.eq.s32.totalorder %s34, 3
      %p392 = por %p390, %p391
      %p393 = scmp.ne.s32.totalorder %s382, %s383
      %p394 = scmp.eq.s32.totalorder %s34, 0
      %p395 = por %p393, %p394
      %p396 = scmp.ne.s32.totalorder %s382, %s383
      %p397 = scmp.eq.s32.totalorder %s35, 3
      %p398 = por %p396, %p397
      %p400 = scmp.ne.s32.totalorder %s383, %s399
      %p401 = scmp.eq.s32.totalorder %s35, 0
      %p402 = por %p400, %p401
      %s404 = sadd.s32 %s403, 1
      %p407 = scmp.eq.s32.totalorder %s29, 3
      %p408 = scmp.ne.s32.totalorder %s403, %s405
      %p409 = scmp.eq.s32.totalorder %s29, 0
      %p410 = por %p408, %p409
      %p411 = scmp.ne.s32.totalorder %s403, %s405
      %p412 = scmp.eq.s32.totalorder %s34, 3
      %p413 = por %p411, %p412
      %p414 = scmp.ne.s32.totalorder %s405, %s406
      %p415 = scmp.eq.s32.totalorder %s34, 0
      %p416 = por %p414, %p415
      %p417 = scmp.ne.s32.totalorder %s405, %s406
      %p418 = scmp.eq.s32.totalorder %s35, 3
      %p419 = por %p417, %p418
      %p421 = scmp.ne.s32.totalorder %s406, %s420
      %p422 = scmp.eq.s32.totalorder %s35, 0
      %p423 = por %p421, %p422
      %s425 = sadd.s32 %s424, 1
      %p428 = scmp.eq.s32.totalorder %s29, 3
      %p429 = scmp.ne.s32.totalorder %s424, %s426
      %p430 = scmp.eq.s32.totalorder %s29, 0
      %p431 = por %p429, %p430
      %p432 = scmp.ne.s32.totalorder %s424, %s426
      %p433 = scmp.eq.s32.totalorder %s34, 3
      %p434 = por %p432, %p433
      %p435 = scmp.ne.s32.totalorder %s426, %s427
      %p436 = scmp.eq.s32.totalorder %s34, 0
      %p437 = por %p435, %p436
      %p438 = scmp.ne.s32.totalorder %s426, %s427
      %p439 = scmp.eq.s32.totalorder %s35, 3
      %p440 = por %p438, %p439
      %p442 = scmp.ne.s32.totalorder %s427, %s441
      %p443 = scmp.eq.s32.totalorder %s35, 0
      %p444 = por %p442, %p443
      %s446 = sadd.s32 %s445, 1
      %p449 = scmp.eq.s32.totalorder %s29, 3
      %p450 = scmp.ne.s32.totalorder %s445, %s447
      %p451 = scmp.eq.s32.totalorder %s29, 0
      %p452 = por %p450, %p451
      %p453 = scmp.ne.s32.totalorder %s445, %s447
      %p454 = scmp.eq.s32.totalorder %s34, 3
      %p455 = por %p453, %p454
      %p456 = scmp.ne.s32.totalorder %s447, %s448
      %p457 = scmp.eq.s32.totalorder %s34, 0
      %p458 = por %p456, %p457
      %p459 = scmp.ne.s32.totalorder %s447, %s448
      %p460 = scmp.eq.s32.totalorder %s35, 3
      %p461 = por %p459, %p460
      %p463 = scmp.ne.s32.totalorder %s448, %s462
      %p464 = scmp.eq.s32.totalorder %s35, 0
      %p465 = por %p463, %p464
      %s467 = sadd.s32 %s466, 1
      %p470 = scmp.eq.s32.totalorder %s29, 3
      %p471 = scmp.ne.s32.totalorder %s466, %s468
      %p472 = scmp.eq.s32.totalorder %s29, 0
      %p473 = por %p471, %p472
      %p474 = scmp.ne.s32.totalorder %s466, %s468
      %p475 = scmp.eq.s32.totalorder %s34, 3
      %p476 = por %p474, %p475
      %p477 = scmp.ne.s32.totalorder %s468, %s469
      %p478 = scmp.eq.s32.totalorder %s34, 0
      %p479 = por %p477, %p478
      %p480 = scmp.ne.s32.totalorder %s468, %s469
      %p481 = scmp.eq.s32.totalorder %s35, 3
      %p482 = por %p480, %p481
      %p484 = scmp.ne.s32.totalorder %s469, %s483
      %p485 = scmp.eq.s32.totalorder %s35, 0
      %p486 = por %p484, %p485
      %s488 = sadd.s32 %s487, 1
      %p491 = scmp.eq.s32.totalorder %s29, 3
      %p492 = scmp.ne.s32.totalorder %s487, %s489
      %p493 = scmp.eq.s32.totalorder %s29, 0
      %p494 = por %p492, %p493
      %p495 = scmp.ne.s32.totalorder %s487, %s489
      %p496 = scmp.eq.s32.totalorder %s34, 3
      %p497 = por %p495, %p496
      %p498 = scmp.ne.s32.totalorder %s489, %s490
      %p499 = scmp.eq.s32.totalorder %s34, 0
      %p500 = por %p498, %p499
      %p501 = scmp.ne.s32.totalorder %s489, %s490
      %p502 = scmp.eq.s32.totalorder %s35, 3
      %p503 = por %p501, %p502
      %p505 = scmp.ne.s32.totalorder %s490, %s504
      %p506 = scmp.eq.s32.totalorder %s35, 0
      %p507 = por %p505, %p506
      %s509 = sadd.s32 %s508, 1
      %p512 = scmp.eq.s32.totalorder %s29, 3
      %p513 = scmp.ne.s32.totalorder %s508, %s510
      %p514 = scmp.eq.s32.totalorder %s29, 0
      %p515 = por %p513, %p514
      %p516 = scmp.ne.s32.totalorder %s508, %s510
      %p517 = scmp.eq.s32.totalorder %s34, 3
      %p518 = por %p516, %p517
      %p519 = scmp.ne.s32.totalorder %s510, %s511
      %p520 = scmp.eq.s32.totalorder %s34, 0
      %p521 = por %p519, %p520
      %p522 = scmp.ne.s32.totalorder %s510, %s511
      %p523 = scmp.eq.s32.totalorder %s35, 3
      %p524 = por %p522, %p523
      %p526 = scmp.ne.s32.totalorder %s511, %s525
      %p527 = scmp.eq.s32.totalorder %s35, 0
      %p528 = por %p526, %p527
      %s529 = ssub.s32 %s36, %s48
      %p530 = scmp.eq.s32.totalorder %s529, 0
      %s532 = sadd.s32 %s531, 1
      %s533 = scalar_select %p530, %s531, %s532
      %p536 = pneg %p530
      %p537 = scmp.eq.s32.totalorder %s29, 3
      %p538 = por %p536, %p537
      %p539 = scmp.ne.s32.totalorder %s531, %s534
      %p540 = scmp.eq.s32.totalorder %s29, 0
      %p541 = por %p539, %p540
      %p542 = scmp.ne.s32.totalorder %s531, %s534
      %p543 = scmp.eq.s32.totalorder %s34, 3
      %p544 = por %p542, %p543
      %p545 = scmp.ne.s32.totalorder %s534, %s535
      %p546 = scmp.eq.s32.totalorder %s34, 0
      %p547 = por %p545, %p546
      %p548 = scmp.ne.s32.totalorder %s534, %s535
      %p549 = scmp.eq.s32.totalorder %s35, 3
      %p550 = por %p548, %p549
      %p552 = scmp.ne.s32.totalorder %s535, %s551
      %p553 = scmp.eq.s32.totalorder %s35, 0
      %p554 = por %p552, %p553
      %p555 = scmp.le.s32.totalorder 1, %s29
      %p556 = scmp.lt.s32.totalorder %s29, 5
      %p557 = pnand %p555, %p556
      %p558 = pneg %p557
      // Predicated region
      $region9: #{tpu_custom_call.1} parent=5 // pred_check
        _
      $region10: #{tpu_custom_call.1} parent=5 // pred_check_branch
        %560 = sbr.rel (%p557) target = $region12
      $region11: #{tpu_custom_call.1} parent=5 // pred_region
        %s561 = ssub.s32 %s29, 1
        // Predicated region
        $region13: #{tpu_custom_call.1} parent=11 // pred_check
          %p562 = pneg %p88
        $region14: #{tpu_custom_call.1} parent=11 // pred_check_branch
          %564 = sbr.rel (%p562) target = $region16
        $region15: #{tpu_custom_call.1} parent=11 // pred_region
          _
        $region16: #{tpu_custom_call.1} parent=11 // pred_fallthru
          _
        // Predicated region
        $region17: #{tpu_custom_call.1} parent=11 // pred_check
          %p565 = pneg %p109
        $region18: #{tpu_custom_call.1} parent=11 // pred_check_branch
          %567 = sbr.rel (%p565) target = $region20
        $region19: #{tpu_custom_call.1} parent=11 // pred_region
          _
        $region20: #{tpu_custom_call.1} parent=11 // pred_fallthru
          _
        // Predicated region
        $region21: #{tpu_custom_call.1} parent=11 // pred_check
          %p568 = pneg %p416
        $region22: #{tpu_custom_call.1} parent=11 // pred_check_branch
          %570 = sbr.rel (%p568) target = $region24
        $region23: #{tpu_custom_call.1} parent=11 // pred_region
          _
        $region24: #{tpu_custom_call.1} parent=11 // pred_fallthru
          _
        // Predicated region
        $region25: #{tpu_custom_call.1} parent=11 // pred_check
          %p571 = pneg %p437
        $region26: #{tpu_custom_call.1} parent=11 // pred_check_branch
          %573 = sbr.rel (%p571) target = $region28
        $region27: #{tpu_custom_call.1} parent=11 // pred_region
          _
        $region28: #{tpu_custom_call.1} parent=11 // pred_fallthru
          _
        // Predicated region
        $region29: #{tpu_custom_call.1} parent=11 // pred_check
          %p574 = pneg %p458
        $region30: #{tpu_custom_call.1} parent=11 // pred_check_branch
          %576 = sbr.rel (%p574) target = $region32
        $region31: #{tpu_custom_call.1} parent=11 // pred_region
          _
        $region32: #{tpu_custom_call.1} parent=11 // pred_fallthru
          _
        // Predicated region
        $region33: #{tpu_custom_call.1} parent=11 // pred_check
          %p577 = pneg %p479
        $region34: #{tpu_custom_call.1} parent=11 // pred_check_branch
          %579 = sbr.rel (%p577) target = $region36
        $region35: #{tpu_custom_call.1} parent=11 // pred_region
          _
        $region36: #{tpu_custom_call.1} parent=11 // pred_fallthru
          _
        // Predicated region
        $region37: #{tpu_custom_call.1} parent=11 // pred_check
          %p580 = pneg %p500
        $region38: #{tpu_custom_call.1} parent=11 // pred_check_branch
          %582 = sbr.rel (%p580) target = $region40
        $region39: #{tpu_custom_call.1} parent=11 // pred_region
          _
        $region40: #{tpu_custom_call.1} parent=11 // pred_fallthru
          _
        // Predicated region
        $region41: #{tpu_custom_call.1} parent=11 // pred_check
          %p583 = pneg %p521
        $region42: #{tpu_custom_call.1} parent=11 // pred_check_branch
          %585 = sbr.rel (%p583) target = $region44
        $region43: #{tpu_custom_call.1} parent=11 // pred_region
          _
        $region44: #{tpu_custom_call.1} parent=11 // pred_fallthru
          _
      $region12: #{tpu_custom_call.1} parent=5 // pred_fallthru
        _
      %p586 = scmp.lt.s32.totalorder %s29, 4
      // Predicated region
      $region45: #{tpu_custom_call.1} parent=5 // pred_check
        %p587 = pneg %p586
      $region46: #{tpu_custom_call.1} parent=5 // pred_check_branch
        %589 = sbr.rel (%p587) target = $region48
      $region47: #{tpu_custom_call.1} parent=5 // pred_region
        // Predicated region
        $region49: #{tpu_custom_call.1} parent=47 // pred_check
          %p590 = pneg %p61
        $region50: #{tpu_custom_call.1} parent=47 // pred_check_branch
          %592 = sbr.rel (%p590) target = $region52
        $region51: #{tpu_custom_call.1} parent=47 // pred_region
          %p593 = scmp.lt.s32.totalorder %s36, 1
          %s594 = scalar_select %p593, %s36, 1
          %s595 = smul.addr %s594, 8
          %s596 = scalar_lea.vmem %s0, %s595
        $region52: #{tpu_custom_call.1} parent=47 // pred_fallthru
          _
        // Predicated region
        $region53: #{tpu_custom_call.1} parent=47 // pred_check
          %p597 = pneg %p129
        $region54: #{tpu_custom_call.1} parent=47 // pred_check_branch
          %599 = sbr.rel (%p597) target = $region56
        $region55: #{tpu_custom_call.1} parent=47 // pred_region
          %p600 = scmp.lt.s32.totalorder %s37, 1
          %s601 = scalar_select %p600, %s37, 1
          %s602 = scalar_lea.vmem %s3, %s601
        $region56: #{tpu_custom_call.1} parent=47 // pred_fallthru
          _
        // Predicated region
        $region57: #{tpu_custom_call.1} parent=47 // pred_check
          %p603 = pneg %p155
        $region58: #{tpu_custom_call.1} parent=47 // pred_check_branch
          %605 = sbr.rel (%p603) target = $region60
        $region59: #{tpu_custom_call.1} parent=47 // pred_region
          %p606 = scmp.lt.s32.totalorder %s37, 1
          %s607 = scalar_select %p606, %s37, 1
          %s608 = smul.addr %s607, 4
          %s609 = smul.addr %s608, 4
          %s610 = scalar_lea.vmem %s4, %s609
        $region60: #{tpu_custom_call.1} parent=47 // pred_fallthru
          _
        // Predicated region
        $region61: #{tpu_custom_call.1} parent=47 // pred_check
          %p611 = pneg %p181
        $region62: #{tpu_custom_call.1} parent=47 // pred_check_branch
          %613 = sbr.rel (%p611) target = $region64
        $region63: #{tpu_custom_call.1} parent=47 // pred_region
          %p614 = scmp.lt.s32.totalorder %s37, 1
          %s615 = scalar_select %p614, %s37, 1
          %s616 = smul.addr %s615, 4
          %s617 = smul.addr %s616, 4
          %s618 = scalar_lea.vmem %s5, %s617
        $region64: #{tpu_custom_call.1} parent=47 // pred_fallthru
          _
        // Predicated region
        $region65: #{tpu_custom_call.1} parent=47 // pred_check
          %p619 = pneg %p207
        $region66: #{tpu_custom_call.1} parent=47 // pred_check_branch
          %621 = sbr.rel (%p619) target = $region68
        $region67: #{tpu_custom_call.1} parent=47 // pred_region
          %p622 = scmp.lt.s32.totalorder %s37, 1
          %s623 = scalar_select %p622, %s37, 1
          %s624 = smul.addr %s623, 4
          %s625 = smul.addr %s624, 4
          %s626 = scalar_lea.vmem %s6, %s625
        $region68: #{tpu_custom_call.1} parent=47 // pred_fallthru
          _
        // Predicated region
        $region69: #{tpu_custom_call.1} parent=47 // pred_check
          %p627 = pneg %p233
        $region70: #{tpu_custom_call.1} parent=47 // pred_check_branch
          %629 = sbr.rel (%p627) target = $region72
        $region71: #{tpu_custom_call.1} parent=47 // pred_region
          %p630 = scmp.lt.s32.totalorder %s37, 1
          %s631 = scalar_select %p630, %s37, 1
          %s632 = scalar_lea.vmem %s7, %s631
        $region72: #{tpu_custom_call.1} parent=47 // pred_fallthru
          _
        // Predicated region
        $region73: #{tpu_custom_call.1} parent=47 // pred_check
          %p633 = pneg %p259
        $region74: #{tpu_custom_call.1} parent=47 // pred_check_branch
          %635 = sbr.rel (%p633) target = $region76
        $region75: #{tpu_custom_call.1} parent=47 // pred_region
          %p636 = scmp.lt.s32.totalorder %s37, 1
          %s637 = scalar_select %p636, %s37, 1
          %s638 = smul.addr %s637, 8
          %s639 = smul.addr %s638, 4
          %s640 = scalar_lea.vmem %s8, %s639
        $region76: #{tpu_custom_call.1} parent=47 // pred_fallthru
          _
        // Predicated region
        $region77: #{tpu_custom_call.1} parent=47 // pred_check
          %p641 = pneg %p285
        $region78: #{tpu_custom_call.1} parent=47 // pred_check_branch
          %643 = sbr.rel (%p641) target = $region80
        $region79: #{tpu_custom_call.1} parent=47 // pred_region
          %p644 = scmp.lt.s32.totalorder %s37, 1
          %s645 = scalar_select %p644, %s37, 1
          %s646 = scalar_lea.vmem %s9, %s645
        $region80: #{tpu_custom_call.1} parent=47 // pred_fallthru
          _
        // Predicated region
        $region81: #{tpu_custom_call.1} parent=47 // pred_check
          %p647 = pneg %p311
        $region82: #{tpu_custom_call.1} parent=47 // pred_check_branch
          %649 = sbr.rel (%p647) target = $region84
        $region83: #{tpu_custom_call.1} parent=47 // pred_region
          %p650 = scmp.lt.s32.totalorder %s37, 1
          %s651 = scalar_select %p650, %s37, 1
          %s652 = scalar_lea.vmem %s10, %s651
        $region84: #{tpu_custom_call.1} parent=47 // pred_fallthru
          _
        // Predicated region
        $region85: #{tpu_custom_call.1} parent=47 // pred_check
          %p653 = pneg %p337
        $region86: #{tpu_custom_call.1} parent=47 // pred_check_branch
          %655 = sbr.rel (%p653) target = $region88
        $region87: #{tpu_custom_call.1} parent=47 // pred_region
          %p656 = scmp.lt.s32.totalorder %s37, 1
          %s657 = scalar_select %p656, %s37, 1
          %s658 = smul.addr %s657, 4
          %s659 = smul.addr %s658, 4
          %s660 = scalar_lea.vmem %s11, %s659
        $region88: #{tpu_custom_call.1} parent=47 // pred_fallthru
          _
        // Predicated region
        $region89: #{tpu_custom_call.1} parent=47 // pred_check
          %p661 = pneg %p363
        $region90: #{tpu_custom_call.1} parent=47 // pred_check_branch
          %663 = sbr.rel (%p661) target = $region92
        $region91: #{tpu_custom_call.1} parent=47 // pred_region
          %p664 = scmp.lt.s32.totalorder %s37, 1
          %s665 = scalar_select %p664, %s37, 1
          %s666 = smul.addr %s665, 4
          %s667 = smul.addr %s666, 4
          %s668 = scalar_lea.vmem %s12, %s667
        $region92: #{tpu_custom_call.1} parent=47 // pred_fallthru
          _
        // Predicated region
        $region93: #{tpu_custom_call.1} parent=47 // pred_check
          %p669 = pneg %p389
        $region94: #{tpu_custom_call.1} parent=47 // pred_check_branch
          %671 = sbr.rel (%p669) target = $region96
        $region95: #{tpu_custom_call.1} parent=47 // pred_region
          %p672 = scmp.lt.s32.totalorder %s37, 1
          %s673 = scalar_select %p672, %s37, 1
          %s674 = smul.addr %s673, 16
          %s675 = smul.addr %s674, 4
          %s676 = scalar_lea.vmem %s13, %s675
        $region96: #{tpu_custom_call.1} parent=47 // pred_fallthru
          _
      $region48: #{tpu_custom_call.1} parent=5 // pred_fallthru
        _
      %p677 = scmp.le.s32.totalorder 1, %s29
      %p678 = scmp.lt.s32.totalorder %s29, 5
      %p679 = pnand %p677, %p678
      %p680 = pneg %p679
      // Predicated region
      $region97: #{tpu_custom_call.1} parent=5 // pred_check
        _
      $region98: #{tpu_custom_call.1} parent=5 // pred_check_branch
        %682 = sbr.rel (%p679) target = $region100
      $region99: #{tpu_custom_call.1} parent=5 // pred_region
        %s683 = ssub.s32 %s29, 1
        %p684 = scmp.lt.s32.totalorder %s38, 1
        %s685 = scalar_select %p684, %s38, 1
        %s686 = smul.addr %s685, 8
        %s687 = scalar_lea.vmem %s0, %s686
        %p688 = pneg %p67
        %p689 = pneg %p64
        %p690 = pneg %p88
        %p691 = pneg %p85
        %p692 = pneg %p109
        %p693 = pneg %p106
        %p694 = scmp.lt.s32.totalorder %s39, 1
        %s695 = scalar_select %p694, %s39, 1
        %s696 = scalar_lea.vmem %s3, %s695
        %p697 = pneg %p135
        %p698 = pneg %p132
        %p699 = scmp.lt.s32.totalorder %s39, 1
        %s700 = scalar_select %p699, %s39, 1
        %s701 = smul.addr %s700, 4
        %s702 = smul.addr %s701, 4
        %s703 = scalar_lea.vmem %s4, %s702
        %p704 = pneg %p161
        %p705 = pneg %p158
        %p706 = scmp.lt.s32.totalorder %s39, 1
        %s707 = scalar_select %p706, %s39, 1
        %s708 = smul.addr %s707, 4
        %s709 = smul.addr %s708, 4
        %s710 = scalar_lea.vmem %s5, %s709
        %p711 = pneg %p187
        %p712 = pneg %p184
        %p713 = scmp.lt.s32.totalorder %s39, 1
        %s714 = scalar_select %p713, %s39, 1
        %s715 = smul.addr %s714, 4
        %s716 = smul.addr %s715, 4
        %s717 = scalar_lea.vmem %s6, %s716
        %p718 = pneg %p213
        %p719 = pneg %p210
        %p720 = scmp.lt.s32.totalorder %s39, 1
        %s721 = scalar_select %p720, %s39, 1
        %s722 = scalar_lea.vmem %s7, %s721
        %p723 = pneg %p239
        %p724 = pneg %p236
        %p725 = scmp.lt.s32.totalorder %s39, 1
        %s726 = scalar_select %p725, %s39, 1
        %s727 = smul.addr %s726, 8
        %s728 = smul.addr %s727, 4
        %s729 = scalar_lea.vmem %s8, %s728
        %p730 = pneg %p265
        %p731 = pneg %p262
        %p732 = scmp.lt.s32.totalorder %s39, 1
        %s733 = scalar_select %p732, %s39, 1
        %s734 = scalar_lea.vmem %s9, %s733
        %p735 = pneg %p291
        %p736 = pneg %p288
        %p737 = scmp.lt.s32.totalorder %s39, 1
        %s738 = scalar_select %p737, %s39, 1
        %s739 = scalar_lea.vmem %s10, %s738
        %p740 = pneg %p317
        %p741 = pneg %p314
        %p742 = scmp.lt.s32.totalorder %s39, 1
        %s743 = scalar_select %p742, %s39, 1
        %s744 = smul.addr %s743, 4
        %s745 = smul.addr %s744, 4
        %s746 = scalar_lea.vmem %s11, %s745
        %p747 = pneg %p343
        %p748 = pneg %p340
        %p749 = scmp.lt.s32.totalorder %s39, 1
        %s750 = scalar_select %p749, %s39, 1
        %s751 = smul.addr %s750, 4
        %s752 = smul.addr %s751, 4
        %s753 = scalar_lea.vmem %s12, %s752
        %p754 = pneg %p369
        %p755 = pneg %p366
        %p756 = scmp.lt.s32.totalorder %s39, 1
        %s757 = scalar_select %p756, %s39, 1
        %s758 = smul.addr %s757, 16
        %s759 = smul.addr %s758, 4
        %s760 = scalar_lea.vmem %s13, %s759
        %p761 = pneg %p395
        %p762 = pneg %p392
        %p763 = pneg %p416
        %p764 = pneg %p413
        %p765 = pneg %p437
        %p766 = pneg %p434
        %p767 = pneg %p458
        %p768 = pneg %p455
        %p769 = pneg %p479
        %p770 = pneg %p476
        %p771 = pneg %p500
        %p772 = pneg %p497
        %p773 = pneg %p521
        %p774 = pneg %p518
        %p775 = pneg %p547
        %p776 = pneg %p544
        %s777 = sand.u32 %s534, 1
        %s778 = scalar_lea.sflag [#allocation6], %s777
        %s779 = sand.u32 %s534, 1
        %s780 = smul.addr %s779, 4
        %s781 = scalar_lea.vmem [#allocation5], %s780
        %p782 = scmp.lt.s32.totalorder %s38, 1
        %s783 = scalar_select %p782, %s38, 1
        %s784 = smul.addr %s783, 8
        %s785 = scalar_lea.vmem %s0, %s784
        %p786 = scmp.lt.s32.totalorder %s39, 1
        %s787 = scalar_select %p786, %s39, 1
        %s788 = scalar_lea.vmem %s3, %s787
        %p789 = scmp.lt.s32.totalorder %s39, 1
        %s790 = scalar_select %p789, %s39, 1
        %s791 = smul.addr %s790, 4
        %s792 = smul.addr %s791, 4
        %s793 = scalar_lea.vmem %s4, %s792
        %p794 = scmp.lt.s32.totalorder %s39, 1
        %s795 = scalar_select %p794, %s39, 1
        %s796 = smul.addr %s795, 4
        %s797 = smul.addr %s796, 4
        %s798 = scalar_lea.vmem %s5, %s797
        %p799 = scmp.lt.s32.totalorder %s39, 1
        %s800 = scalar_select %p799, %s39, 1
        %s801 = smul.addr %s800, 4
        %s802 = smul.addr %s801, 4
        %s803 = scalar_lea.vmem %s6, %s802
        %p804 = scmp.lt.s32.totalorder %s39, 1
        %s805 = scalar_select %p804, %s39, 1
        %s806 = scalar_lea.vmem %s7, %s805
        %p807 = scmp.lt.s32.totalorder %s39, 1
        %s808 = scalar_select %p807, %s39, 1
        %s809 = smul.addr %s808, 8
        %s810 = smul.addr %s809, 4
        %s811 = scalar_lea.vmem %s8, %s810
        %p812 = scmp.lt.s32.totalorder %s39, 1
        %s813 = scalar_select %p812, %s39, 1
        %s814 = scalar_lea.vmem %s9, %s813
        %p815 = scmp.lt.s32.totalorder %s39, 1
        %s816 = scalar_select %p815, %s39, 1
        %s817 = scalar_lea.vmem %s10, %s816
        %p818 = scmp.lt.s32.totalorder %s39, 1
        %s819 = scalar_select %p818, %s39, 1
        %s820 = smul.addr %s819, 4
        %s821 = smul.addr %s820, 4
        %s822 = scalar_lea.vmem %s11, %s821
        %p823 = scmp.lt.s32.totalorder %s39, 1
        %s824 = scalar_select %p823, %s39, 1
        %s825 = smul.addr %s824, 4
        %s826 = smul.addr %s825, 4
        %s827 = scalar_lea.vmem %s12, %s826
        %p828 = scmp.lt.s32.totalorder %s39, 1
        %s829 = scalar_select %p828, %s39, 1
        %s830 = smul.addr %s829, 16
        %s831 = smul.addr %s830, 4
        %s832 = scalar_lea.vmem %s13, %s831
        %p834 = scmp.eq.s32.totalorder %s39, 0
        // Predicated region
        $region101: #{tpu_custom_call.1} parent=99 // pred_check
          %p835 = pneg %p834
        $region102: #{tpu_custom_call.1} parent=99 // pred_check_branch
          %837 = sbr.rel (%p835) target = $region104
        $region103: #{tpu_custom_call.1} parent=99 // pred_region
          %v838 = vld [vmem:[%s785] sm:$0xff]
          %v839 = vpack.c.bf16 %v838, %v838
          %v840 = vld [vmem:[%s1] sm:$0xf]
          %v841 = vld [vmem:[%s1 + $0x4] sm:$0xf]
          %v842 = vld [vmem:[%s1 + $0x8] sm:$0xf]
          %v843 = vld [vmem:[%s1 + $0xc] sm:$0xf]
          %v844 = vld [vmem:[%s2] sm:$0x1]
          %v846 = vlaneseq
          %v847 = vshrl.u32 %v846, 7
          %v848 = vsub.s32 0, %v847
          %v849 = vrot.slane %v844, %v848
          %v855 = vunpack.c.l.b16 %v840
          %v856 = vunpack.c.l.b16 %v841
          %v857 = vunpack.c.l.b16 %v842
          %v858 = vunpack.c.l.b16 %v843
          %v859 = vpack.c.b16 %v856, %v855
          %v860 = vpack.c.b16 %v858, %v857
          %vm863 = vcmask 261120
          %v865 = vsel %vm863, %v839, 0
          %867 = vmatprep.subr.bf16.mxu0 0
          %868 = vmatpush1.bf16.msra.mxu0 %v859
          %869 = vmatprep.subr.bf16.mxu0 0
          %870 = vmatpush1.bf16.msra.mxu0 %v860
          %871 = vmatprep.subr.bf16.mxu0 0
          %872 = vmatpush1.bf16.msra.mxu0 0
          %873 = vmatprep.subr.bf16.mxu0 0
          %874 = vmatpush1.bf16.msra.mxu0 0
          %875 = vmatprep.subr.bf16.mxu0 0
          %876 = vmatpush1.bf16.msra.mxu0 0
          %877 = vmatprep.subr.bf16.mxu0 0
          %878 = vmatpush1.bf16.msra.mxu0 0
          %879 = vmatprep.subr.bf16.mxu0 0
          %880 = vmatpush1.bf16.msra.mxu0 0
          %881 = vmatprep.subr.bf16.mxu0 0
          %882 = vmatpush1.bf16.msra.mxu0 0
          %883 = vmatprep.subr.bf16.mxu0 0
          %884 = vmatpush1.bf16.msra.mxu0 0
          %885 = vmatprep.subr.bf16.mxu0 0
          %886 = vmatpush1.bf16.msra.mxu0 0
          %887 = vmatprep.subr.bf16.mxu0 0
          %888 = vmatpush1.bf16.msra.mxu0 0
          %889 = vmatprep.subr.bf16.mxu0 0
          %890 = vmatpush1.bf16.msra.mxu0 0
          %891 = vmatprep.subr.bf16.mxu0 0
          %892 = vmatpush1.bf16.msra.mxu0 0
          %893 = vmatprep.subr.bf16.mxu0 0
          %894 = vmatpush1.bf16.msra.mxu0 0
          %895 = vmatprep.subr.bf16.mxu0 0
          %896 = vmatpush1.bf16.msra.mxu0 0
          %897 = vmatprep.subr.bf16.mxu0 0
          %898 = vmatpush1.bf16.msra.mxu0 0
          %899 = vmatprep.mubr.bf16.mxu0 0
          %900 = vmatmul.mubr.bf16.gmra.mrb[0].mxu0 %v865
          %v901 = vpop.f32.mrb[0].mxu0
          %v902 = vadd.f32 %v849, %v901
          %v903 = vpop.f32.mrb[0].mxu0
          %v904 = vpop.f32.mrb[0].mxu0
          %v905 = vpop.f32.mrb[0].mxu0
          %906 = vdwg.mxu0
          %907 = vst.msk [vmem:[#allocation2] sm:$0xff] %vm863, %v902
          %vm908 = vcmask 130048
          %909 = vst.msk [vmem:[#allocation3] sm:$0xff] %vm908, 0
          %910 = vst.msk [vmem:[#allocation3 + $0x8] sm:$0xff] %vm908, 0
          %911 = vst.msk [vmem:[#allocation3 + $0x10] sm:$0xff] %vm908, 0
          %912 = vst.msk [vmem:[#allocation3 + $0x18] sm:$0xff] %vm908, 0
          %913 = vst.msk [vmem:[#allocation3 + $0x20] sm:$0xff] %vm908, 0
          %914 = vst.msk [vmem:[#allocation3 + $0x28] sm:$0xff] %vm908, 0
          %915 = vst.msk [vmem:[#allocation3 + $0x30] sm:$0xff] %vm908, 0
          %916 = vst.msk [vmem:[#allocation3 + $0x38] sm:$0xff] %vm908, 0
          %917 = vst.msk [vmem:[#allocation4] sm:$0xff] %vm908, 0
          %918 = vst.msk [vmem:[#allocation4 + $0x8] sm:$0xff] %vm908, 0
          %919 = vst.msk [vmem:[#allocation4 + $0x10] sm:$0xff] %vm908, 0
          %920 = vst.msk [vmem:[#allocation4 + $0x18] sm:$0xff] %vm908, 0
          %921 = vst.msk [vmem:[#allocation4 + $0x20] sm:$0xff] %vm908, 0
          %922 = vst.msk [vmem:[#allocation4 + $0x28] sm:$0xff] %vm908, 0
          %923 = vst.msk [vmem:[#allocation4 + $0x30] sm:$0xff] %vm908, 0
          %924 = vst.msk [vmem:[#allocation4 + $0x38] sm:$0xff] %vm908, 0
        $region104: #{tpu_custom_call.1} parent=99 // pred_fallthru
          _
        %v925 = vld [vmem:[%s17] sm:$0xff]
        %v926 = vld [vmem:[%s18] sm:$0xff]
        %v927 = vld [vmem:[%s19] sm:$0xff]
        %v928 = vld [vmem:[#allocation2] sm:$0xff]
        %v929 = vld [vmem:[%s788] sm:$0x1]
        %vm930 = vcmask 261120
        %v931 = vsel %vm930, %v928, 0.0
        %932 = vadd.xlane.f32.xlu0 %v931
        %v933 = vpop.xlane.xlu0 %932
        %v934 = vrcp.pop 32.0
        %v935 = vmul.f32 %v933, %v934
        %v936 = vsub.f32 %v928, %v935
        %v937 = vmul.f32 %v936, %v936
        %v938 = vsel %vm930, %v937, 0.0
        %939 = vadd.xlane.f32.xlu0 %v938
        %v940 = vpop.xlane.xlu0 %939
        %v941 = vmul.f32 %v940, %v934
        %v942 = vadd.f32 %v941, 1e-05
        %v943 = vrsqrt.pop %v942
        %v944 = vmul.f32 %v936, %v943
        %v946 = vlaneseq
        %v947 = vshrl.u32 %v946, 7
        %v948 = vsub.s32 0, %v947
        %v949 = vrot.slane %v929, %v948
        %v951 = vmul.f32 %v944, %v949
        %v952 = vpack.c.bf16 %v951, %v951
        %v953 = vld [vmem:[%s793] sm:$0xf]
        %v954 = vld [vmem:[%s793 + $0x4] sm:$0xf]
        %v955 = vld [vmem:[%s793 + $0x8] sm:$0xf]
        %v956 = vld [vmem:[%s793 + $0xc] sm:$0xf]
        %v961 = vunpack.c.l.b16 %v953
        %v962 = vunpack.c.l.b16 %v954
        %v963 = vunpack.c.l.b16 %v955
        %v964 = vunpack.c.l.b16 %v956
        %v965 = vpack.c.b16 %v962, %v961
        %v966 = vpack.c.b16 %v964, %v963
        %v970 = vsel %vm930, %v952, 0
        %972 = vmatprep.subr.bf16.mxu0 0
        %973 = vmatpush1.bf16.msra.mxu0 %v965
        %974 = vmatprep.subr.bf16.mxu0 0
        %975 = vmatpush1.bf16.msra.mxu0 %v966
        %976 = vmatprep.subr.bf16.mxu0 0
        %977 = vmatpush1.bf16.msra.mxu0 0
        %978 = vmatprep.subr.bf16.mxu0 0
        %979 = vmatpush1.bf16.msra.mxu0 0
        %980 = vmatprep.subr.bf16.mxu0 0
        %981 = vmatpush1.bf16.msra.mxu0 0
        %982 = vmatprep.subr.bf16.mxu0 0
        %983 = vmatpush1.bf16.msra.mxu0 0
        %984 = vmatprep.subr.bf16.mxu0 0
        %985 = vmatpush1.bf16.msra.mxu0 0
        %986 = vmatprep.subr.bf16.mxu0 0
        %987 = vmatpush1.bf16.msra.mxu0 0
        %988 = vmatprep.subr.bf16.mxu0 0
        %989 = vmatpush1.bf16.msra.mxu0 0
        %990 = vmatprep.subr.bf16.mxu0 0
        %991 = vmatpush1.bf16.msra.mxu0 0
        %992 = vmatprep.subr.bf16.mxu0 0
        %993 = vmatpush1.bf16.msra.mxu0 0
        %994 = vmatprep.subr.bf16.mxu0 0
        %995 = vmatpush1.bf16.msra.mxu0 0
        %996 = vmatprep.subr.bf16.mxu0 0
        %997 = vmatpush1.bf16.msra.mxu0 0
        %998 = vmatprep.subr.bf16.mxu0 0
        %999 = vmatpush1.bf16.msra.mxu0 0
        %1000 = vmatprep.subr.bf16.mxu0 0
        %1001 = vmatpush1.bf16.msra.mxu0 0
        %1002 = vmatprep.subr.bf16.mxu0 0
        %1003 = vmatpush1.bf16.msra.mxu0 0
        %1004 = vmatprep.mubr.bf16.mxu0 0
        %1005 = vmatmul.mubr.bf16.gmra.mrb[0].mxu0 %v970
        %v1006 = vpop.f32.mrb[0].mxu0
        %v1007 = vadd.f32 0.0, %v1006
        %v1008 = vpop.f32.mrb[0].mxu0
        %v1009 = vpop.f32.mrb[0].mxu0
        %v1010 = vpop.f32.mrb[0].mxu0
        %1011 = vdwg.mxu0
        %v1012 = vld [vmem:[%s798] sm:$0xf]
        %v1013 = vld [vmem:[%s798 + $0x4] sm:$0xf]
        %v1014 = vld [vmem:[%s798 + $0x8] sm:$0xf]
        %v1015 = vld [vmem:[%s798 + $0xc] sm:$0xf]
        %v1020 = vunpack.c.l.b16 %v1012
        %v1021 = vunpack.c.l.b16 %v1013
        %v1022 = vunpack.c.l.b16 %v1014
        %v1023 = vunpack.c.l.b16 %v1015
        %v1024 = vpack.c.b16 %v1021, %v1020
        %v1025 = vpack.c.b16 %v1023, %v1022
        %1028 = vmatprep.subr.bf16.mxu0 0
        %1029 = vmatpush1.bf16.msra.mxu0 %v1024
        %1030 = vmatprep.subr.bf16.mxu0 0
        %1031 = vmatpush1.bf16.msra.mxu0 %v1025
        %1032 = vmatprep.subr.bf16.mxu0 0
        %1033 = vmatpush1.bf16.msra.mxu0 0
        %1034 = vmatprep.subr.bf16.mxu0 0
        %1035 = vmatpush1.bf16.msra.mxu0 0
        %1036 = vmatprep.subr.bf16.mxu0 0
        %1037 = vmatpush1.bf16.msra.mxu0 0
        %1038 = vmatprep.subr.bf16.mxu0 0
        %1039 = vmatpush1.bf16.msra.mxu0 0
        %1040 = vmatprep.subr.bf16.mxu0 0
        %1041 = vmatpush1.bf16.msra.mxu0 0
        %1042 = vmatprep.subr.bf16.mxu0 0
        %1043 = vmatpush1.bf16.msra.mxu0 0
        %1044 = vmatprep.subr.bf16.mxu0 0
        %1045 = vmatpush1.bf16.msra.mxu0 0
        %1046 = vmatprep.subr.bf16.mxu0 0
        %1047 = vmatpush1.bf16.msra.mxu0 0
        %1048 = vmatprep.subr.bf16.mxu0 0
        %1049 = vmatpush1.bf16.msra.mxu0 0
        %1050 = vmatprep.subr.bf16.mxu0 0
        %1051 = vmatpush1.bf16.msra.mxu0 0
        %1052 = vmatprep.subr.bf16.mxu0 0
        %1053 = vmatpush1.bf16.msra.mxu0 0
        %1054 = vmatprep.subr.bf16.mxu0 0
        %1055 = vmatpush1.bf16.msra.mxu0 0
        %1056 = vmatprep.subr.bf16.mxu0 0
        %1057 = vmatpush1.bf16.msra.mxu0 0
        %1058 = vmatprep.subr.bf16.mxu0 0
        %1059 = vmatpush1.bf16.msra.mxu0 0
        %1060 = vmatprep.mubr.bf16.mxu0 0
        %1061 = vmatmul.mubr.bf16.gmra.mrb[0].mxu0 %v970
        %v1062 = vpop.f32.mrb[0].mxu0
        %v1063 = vadd.f32 0.0, %v1062
        %v1064 = vpop.f32.mrb[0].mxu0
        %v1065 = vpop.f32.mrb[0].mxu0
        %v1066 = vpop.f32.mrb[0].mxu0
        %1067 = vdwg.mxu0
        %v1068 = vld [vmem:[%s803] sm:$0xf]
        %v1069 = vld [vmem:[%s803 + $0x4] sm:$0xf]
        %v1070 = vld [vmem:[%s803 + $0x8] sm:$0xf]
        %v1071 = vld [vmem:[%s803 + $0xc] sm:$0xf]
        %v1076 = vunpack.c.l.b16 %v1068
        %v1077 = vunpack.c.l.b16 %v1069
        %v1078 = vunpack.c.l.b16 %v1070
        %v1079 = vunpack.c.l.b16 %v1071
        %v1080 = vpack.c.b16 %v1077, %v1076
        %v1081 = vpack.c.b16 %v1079, %v1078
        %1084 = vmatprep.subr.bf16.mxu0 0
        %1085 = vmatpush1.bf16.msra.mxu0 %v1080
        %1086 = vmatprep.subr.bf16.mxu0 0
        %1087 = vmatpush1.bf16.msra.mxu0 %v1081
        %1088 = vmatprep.subr.bf16.mxu0 0
        %1089 = vmatpush1.bf16.msra.mxu0 0
        %1090 = vmatprep.subr.bf16.mxu0 0
        %1091 = vmatpush1.bf16.msra.mxu0 0
        %1092 = vmatprep.subr.bf16.mxu0 0
        %1093 = vmatpush1.bf16.msra.mxu0 0
        %1094 = vmatprep.subr.bf16.mxu0 0
        %1095 = vmatpush1.bf16.msra.mxu0 0
        %1096 = vmatprep.subr.bf16.mxu0 0
        %1097 = vmatpush1.bf16.msra.mxu0 0
        %1098 = vmatprep.subr.bf16.mxu0 0
        %1099 = vmatpush1.bf16.msra.mxu0 0
        %1100 = vmatprep.subr.bf16.mxu0 0
        %1101 = vmatpush1.bf16.msra.mxu0 0
        %1102 = vmatprep.subr.bf16.mxu0 0
        %1103 = vmatpush1.bf16.msra.mxu0 0
        %1104 = vmatprep.subr.bf16.mxu0 0
        %1105 = vmatpush1.bf16.msra.mxu0 0
        %1106 = vmatprep.subr.bf16.mxu0 0
        %1107 = vmatpush1.bf16.msra.mxu0 0
        %1108 = vmatprep.subr.bf16.mxu0 0
        %1109 = vmatpush1.bf16.msra.mxu0 0
        %1110 = vmatprep.subr.bf16.mxu0 0
        %1111 = vmatpush1.bf16.msra.mxu0 0
        %1112 = vmatprep.subr.bf16.mxu0 0
        %1113 = vmatpush1.bf16.msra.mxu0 0
        %1114 = vmatprep.subr.bf16.mxu0 0
        %1115 = vmatpush1.bf16.msra.mxu0 0
        %1116 = vmatprep.mubr.bf16.mxu0 0
        %1117 = vmatmul.mubr.bf16.gmra.mrb[0].mxu0 %v970
        %v1118 = vpop.f32.mrb[0].mxu0
        %v1119 = vadd.f32 0.0, %v1118
        %v1120 = vpop.f32.mrb[0].mxu0
        %v1121 = vpop.f32.mrb[0].mxu0
        %v1122 = vpop.f32.mrb[0].mxu0
        %1123 = vdwg.mxu0
        %vm1124 = vcmask 1047680
        %1125 = vrot.lane.b32.xlu0 %v1063, 16
        %v1126 = vpop.permute.xlu0 %1125
        %v1127 = vsel %vm1124, %v1126, %v1063
        %1128 = vrot.lane.b32.xlu0 %v1127, 16
        %v1129 = vpop.permute.xlu0 %1128
        %v1130 = vsel %vm1124, %v1129, %v1063
        %v1131 = vmul.f32 %v1063, %v925
        %1133 = vrot.lane.b32.xlu0 %v926, 15
        %v1134 = vpop.permute.xlu0 %1133
        %v1136 = vmul.f32 %v1130, %v1134
        %1138 = vrot.lane.b32.xlu0 %v1136, 113
        %v1139 = vpop.permute.xlu0 %1138
        %v1141 = vadd.f32 %v1131, %v1139
        %1143 = vrot.lane.b32.xlu0 %v927, 1
        %v1144 = vpop.permute.xlu0 %1143
        %v1146 = vmul.f32 %v1130, %v1144
        %1148 = vrot.lane.b32.xlu0 %v1146, 127
        %v1149 = vpop.permute.xlu0 %1148
        %v1151 = vadd.f32 %v1141, %v1149
        %v1152 = vmul.f32 %v1151, %v1151
        %vm1153 = vcmask 130048
        %v1154 = vsel %vm1153, %v1152, 0.0
        %1155 = vadd.xlane.f32.xlu0 %v1154
        %v1156 = vpop.xlane.xlu0 %1155
        %v1157 = vmax.f32 %v1156, 1e-24
        %v1158 = vrsqrt.pop %v1157
        %v1159 = vmul.f32 %v1158, 4.0
        %v1160 = vmul.f32 %v1151, %v1159
        %v1161 = vpack.c.bf16 %v1160, %v1160
        %vm1162 = vcmask 125952
        %1163 = vst.msk [vmem:[#allocation3] sm:$0xf] %vm1162, %v1161
        %v1164 = vpack.c.bf16 %v1119, %v1119
        %1165 = vst.msk [vmem:[#allocation4] sm:$0xf] %vm1162, %v1164
        %v1166 = vld [vmem:[%s806] sm:$0x1]
        %v1169 = vunpack.c.l.s4 1966171168
        %v1170 = vunpack.c.0.s8 %v1169
        %v1171 = vlaneseq
        %v1172 = vshrl.u32 %v1171, 7
        %v1173 = vsub.s32 %v1170, %v1172
        %v1174 = vrot.slane %v1166, %v1173
        %v1176 = vunpack.c.l.s4 1966171168
        %v1177 = vunpack.c.0.s8 %v1176
        %v1178 = vlaneseq
        %v1179 = vshrl.u32 %v1178, 7
        %v1180 = vsub.s32 %v1177, %v1179
        %v1181 = vrot.slane %v1174, %v1180
        %v1182 = vcombine.low %v1181, %v1181
        %vm1184 = vcmask 126980
        %vm1185 = vsmask.f32 4352
        %vm1186 = vmand %vm1184, %vm1185
        %v1187 = vld [vmem:[#allocation3] sm:$0x10]
        %v1188 = vsel %vm1186, %v1182, %v1187
        %1189 = vst [vmem:[#allocation3] sm:$0x10] %v1188
        %v1191 = vshrl.u32 %v1181, 16
        %v1193 = vrot.slane %v1191, 4
        %v1195 = vld [vmem:[#allocation4] sm:$0x10]
        %v1196 = vsel %vm1186, %v1193, %v1195
        %1197 = vst [vmem:[#allocation4] sm:$0x10] %v1196
        %v1198 = vld [vmem:[#allocation3] sm:$0xff]
        %v1199 = vld [vmem:[#allocation3 + $0x8] sm:$0xff]
        %v1200 = vld [vmem:[#allocation3 + $0x10] sm:$0xff]
        %v1201 = vld [vmem:[#allocation3 + $0x18] sm:$0xff]
        %v1202 = vld [vmem:[#allocation3 + $0x20] sm:$0xff]
        %v1203 = vld [vmem:[#allocation3 + $0x28] sm:$0xff]
        %v1204 = vld [vmem:[#allocation3 + $0x30] sm:$0xff]
        %v1205 = vld [vmem:[#allocation3 + $0x38] sm:$0xff]
        %v1206 = vld [vmem:[#allocation4] sm:$0xff]
        %v1207 = vld [vmem:[#allocation4 + $0x8] sm:$0xff]
        %v1208 = vld [vmem:[#allocation4 + $0x10] sm:$0xff]
        %v1209 = vld [vmem:[#allocation4 + $0x18] sm:$0xff]
        %v1210 = vld [vmem:[#allocation4 + $0x20] sm:$0xff]
        %v1211 = vld [vmem:[#allocation4 + $0x28] sm:$0xff]
        %v1212 = vld [vmem:[#allocation4 + $0x30] sm:$0xff]
        %v1213 = vld [vmem:[#allocation4 + $0x38] sm:$0xff]
        %1214 = vrot.lane.b32.xlu0 %v1007, 16
        %v1215 = vpop.permute.xlu0 %1214
        %v1216 = vsel %vm1124, %v1215, %v1007
        %1217 = vrot.lane.b32.xlu0 %v1216, 16
        %v1218 = vpop.permute.xlu0 %1217
        %v1219 = vsel %vm1124, %v1218, %v1007
        %v1220 = vmul.f32 %v1007, %v925
        %v1221 = vmul.f32 %v1219, %v1134
        %1223 = vrot.lane.b32.xlu0 %v1221, 113
        %v1224 = vpop.permute.xlu0 %1223
        %v1226 = vadd.f32 %v1220, %v1224
        %v1227 = vmul.f32 %v1219, %v1144
        %1229 = vrot.lane.b32.xlu0 %v1227, 127
        %v1230 = vpop.permute.xlu0 %1229
        %v1232 = vadd.f32 %v1226, %v1230
        %v1233 = vmul.f32 %v1232, %v1232
        %v1234 = vsel %vm1153, %v1233, 0.0
        %1235 = vadd.xlane.f32.xlu0 %v1234
        %v1236 = vpop.xlane.xlu0 %1235
        %v1237 = vmax.f32 %v1236, 1e-24
        %v1238 = vrsqrt.pop %v1237
        %v1239 = vmul.f32 %v1238, 4.0
        %v1240 = vmul.f32 %v1232, %v1239
        %v1241 = vpack.c.bf16 %v1240, %v1240
        %v1242 = vld [vmem:[%s16] sm:$0xff]
        %v1244 = vsel %vm1153, %v1241, 0
        %v1247 = vsel %vm1153, %v1198, 0
        %v1250 = vsel %vm1153, %v1199, 0
        %v1253 = vsel %vm1153, %v1200, 0
        %v1256 = vsel %vm1153, %v1201, 0
        %v1259 = vsel %vm1153, %v1202, 0
        %v1262 = vsel %vm1153, %v1203, 0
        %v1265 = vsel %vm1153, %v1204, 0
        %v1268 = vsel %vm1153, %v1205, 0
        %1270 = vmatprep.subr.bf16.mxu0 0
        %1271 = vmatpush1.bf16.xpose.msra.mxu0 %v1247
        %1272 = vmatprep.subr.bf16.mxu0 0
        %1273 = vmatpush1.bf16.xpose.msra.mxu0 %v1250
        %1274 = vmatprep.subr.bf16.mxu0 0
        %1275 = vmatpush1.bf16.xpose.msra.mxu0 %v1253
        %1276 = vmatprep.subr.bf16.mxu0 0
        %1277 = vmatpush1.bf16.xpose.msra.mxu0 %v1256
        %1278 = vmatprep.subr.bf16.mxu0 0
        %1279 = vmatpush1.bf16.xpose.msra.mxu0 %v1259
        %1280 = vmatprep.subr.bf16.mxu0 0
        %1281 = vmatpush1.bf16.xpose.msra.mxu0 %v1262
        %1282 = vmatprep.subr.bf16.mxu0 0
        %1283 = vmatpush1.bf16.xpose.msra.mxu0 %v1265
        %1284 = vmatprep.subr.bf16.mxu0 0
        %1285 = vmatpush1.bf16.xpose.msra.mxu0 %v1268
        %1286 = vmatprep.subr.bf16.mxu0 0
        %1287 = vmatpush1.bf16.xpose.msra.mxu0 0
        %1288 = vmatprep.subr.bf16.mxu0 0
        %1289 = vmatpush1.bf16.xpose.msra.mxu0 0
        %1290 = vmatprep.subr.bf16.mxu0 0
        %1291 = vmatpush1.bf16.xpose.msra.mxu0 0
        %1292 = vmatprep.subr.bf16.mxu0 0
        %1293 = vmatpush1.bf16.xpose.msra.mxu0 0
        %1294 = vmatprep.subr.bf16.mxu0 0
        %1295 = vmatpush1.bf16.xpose.msra.mxu0 0
        %1296 = vmatprep.subr.bf16.mxu0 0
        %1297 = vmatpush1.bf16.xpose.msra.mxu0 0
        %1298 = vmatprep.subr.bf16.mxu0 0
        %1299 = vmatpush1.bf16.xpose.msra.mxu0 0
        %1300 = vmatprep.subr.bf16.mxu0 0
        %1301 = vmatpush1.bf16.xpose.msra.mxu0 0
        %1302 = vmatprep.mubr.bf16.mxu0 0
        %1303 = vmatmul.mubr.bf16.gmra.mrb[0].mxu0 %v1244
        %v1304 = vpop.f32.mrb[0].mxu0
        %v1305 = vadd.f32 %v1242, %v1304
        %v1306 = vpop.f32.mrb[0].mxu0
        %v1307 = vpop.f32.mrb[0].mxu0
        %v1308 = vpop.f32.mrb[0].mxu0
        %1309 = vdwg.mxu0
        %1310 = vmax.xlane.f32.xlu0 %v1305
        %v1311 = vpop.xlane.xlu0 %1310
        %v1312 = vsub.f32 %v1305, %v1311
        %v1313 = vmul.f32 %v1312, 1.442695
        %v1314 = vpow.pop %v1313
        %1315 = vadd.xlane.f32.xlu0 %v1314
        %v1316 = vpop.xlane.xlu0 %1315
        %v1317 = vrcp.pop %v1316
        %v1318 = vmul.f32 %v1314, %v1317
        %v1319 = vpack.c.bf16 %v1318, %v1318
        %1320 = vmatprep.subr.bf16.mxu0 0
        %1321 = vmatpush1.bf16.msra.mxu0 %v1206
        %1322 = vmatprep.subr.bf16.mxu0 0
        %1323 = vmatpush1.bf16.msra.mxu0 %v1207
        %1324 = vmatprep.subr.bf16.mxu0 0
        %1325 = vmatpush1.bf16.msra.mxu0 %v1208
        %1326 = vmatprep.subr.bf16.mxu0 0
        %1327 = vmatpush1.bf16.msra.mxu0 %v1209
        %1328 = vmatprep.subr.bf16.mxu0 0
        %1329 = vmatpush1.bf16.msra.mxu0 %v1210
        %1330 = vmatprep.subr.bf16.mxu0 0
        %1331 = vmatpush1.bf16.msra.mxu0 %v1211
        %1332 = vmatprep.subr.bf16.mxu0 0
        %1333 = vmatpush1.bf16.msra.mxu0 %v1212
        %1334 = vmatprep.subr.bf16.mxu0 0
        %1335 = vmatpush1.bf16.msra.mxu0 %v1213
        %1336 = vmatprep.subr.bf16.mxu0 0
        %1337 = vmatpush1.bf16.msra.mxu0 0
        %1338 = vmatprep.subr.bf16.mxu0 0
        %1339 = vmatpush1.bf16.msra.mxu0 0
        %1340 = vmatprep.subr.bf16.mxu0 0
        %1341 = vmatpush1.bf16.msra.mxu0 0
        %1342 = vmatprep.subr.bf16.mxu0 0
        %1343 = vmatpush1.bf16.msra.mxu0 0
        %1344 = vmatprep.subr.bf16.mxu0 0
        %1345 = vmatpush1.bf16.msra.mxu0 0
        %1346 = vmatprep.subr.bf16.mxu0 0
        %1347 = vmatpush1.bf16.msra.mxu0 0
        %1348 = vmatprep.subr.bf16.mxu0 0
        %1349 = vmatpush1.bf16.msra.mxu0 0
        %1350 = vmatprep.subr.bf16.mxu0 0
        %1351 = vmatpush1.bf16.msra.mxu0 0
        %1352 = vmatprep.mubr.bf16.mxu0 0
        %1353 = vmatmul.mubr.bf16.gmra.mrb[0].mxu0 %v1319
        %v1354 = vpop.f32.mrb[0].mxu0
        %v1355 = vadd.f32 0.0, %v1354
        %v1356 = vpop.f32.mrb[0].mxu0
        %v1357 = vpop.f32.mrb[0].mxu0
        %v1358 = vpop.f32.mrb[0].mxu0
        %1359 = vdwg.mxu0
        %1361 = vrot.lane.b32.xlu0 %v1007, 112
        %v1362 = vpop.permute.xlu0 %1361
        %1364 = vrot.lane.b32.xlu0 %v1362, 16
        %v1365 = vpop.permute.xlu0 %1364
        %v1366 = vsel %vm1124, %v1365, %v1362
        %1367 = vrot.lane.b32.xlu0 %v1366, 16
        %v1368 = vpop.permute.xlu0 %1367
        %v1369 = vsel %vm1124, %v1368, %v1362
        %1371 = vrot.lane.b32.xlu0 %v925, 16
        %v1372 = vpop.permute.xlu0 %1371
        %v1374 = vmul.f32 %v1007, %v1372
        %v1375 = vmul.f32 %v1369, %v1134
        %1377 = vrot.lane.b32.xlu0 %v1375, 1
        %v1378 = vpop.permute.xlu0 %1377
        %v1380 = vadd.f32 %v1374, %v1378
        %v1381 = vmul.f32 %v1369, %v1144
        %1383 = vrot.lane.b32.xlu0 %v1381, 15
        %v1384 = vpop.permute.xlu0 %1383
        %v1386 = vadd.f32 %v1380, %v1384
        %v1387 = vmul.f32 %v1386, %v1386
        %1389 = vrot.lane.b32.xlu0 %v1387, 112
        %v1390 = vpop.permute.xlu0 %1389
        %v1392 = vsel %vm1153, %v1390, 0.0
        %1393 = vadd.xlane.f32.xlu0 %v1392
        %v1394 = vpop.xlane.xlu0 %1393
        %v1395 = vmax.f32 %v1394, 1e-24
        %v1396 = vrsqrt.pop %v1395
        %v1397 = vmul.f32 %v1396, 4.0
        %v1398 = vmul.f32 %v1386, %v1397
        %v1399 = vpack.c.bf16 %v1398, %v1398
        %s1400 = scalar_lea.vmem %s16, 8
        %v1401 = vld [vmem:[%s1400] sm:$0xff]
        %1403 = vrot.lane.b32.xlu0 %v1399, 112
        %v1404 = vpop.permute.xlu0 %1403
        %v1406 = vsel %vm1153, %v1404, 0
        %1408 = vmatprep.subr.bf16.mxu0 0
        %1409 = vmatpush1.bf16.xpose.msra.mxu0 %v1247
        %1410 = vmatprep.subr.bf16.mxu0 0
        %1411 = vmatpush1.bf16.xpose.msra.mxu0 %v1250
        %1412 = vmatprep.subr.bf16.mxu0 0
        %1413 = vmatpush1.bf16.xpose.msra.mxu0 %v1253
        %1414 = vmatprep.subr.bf16.mxu0 0
        %1415 = vmatpush1.bf16.xpose.msra.mxu0 %v1256
        %1416 = vmatprep.subr.bf16.mxu0 0
        %1417 = vmatpush1.bf16.xpose.msra.mxu0 %v1259
        %1418 = vmatprep.subr.bf16.mxu0 0
        %1419 = vmatpush1.bf16.xpose.msra.mxu0 %v1262
        %1420 = vmatprep.subr.bf16.mxu0 0
        %1421 = vmatpush1.bf16.xpose.msra.mxu0 %v1265
        %1422 = vmatprep.subr.bf16.mxu0 0
        %1423 = vmatpush1.bf16.xpose.msra.mxu0 %v1268
        %1424 = vmatprep.subr.bf16.mxu0 0
        %1425 = vmatpush1.bf16.xpose.msra.mxu0 0
        %1426 = vmatprep.subr.bf16.mxu0 0
        %1427 = vmatpush1.bf16.xpose.msra.mxu0 0
        %1428 = vmatprep.subr.bf16.mxu0 0
        %1429 = vmatpush1.bf16.xpose.msra.mxu0 0
        %1430 = vmatprep.subr.bf16.mxu0 0
        %1431 = vmatpush1.bf16.xpose.msra.mxu0 0
        %1432 = vmatprep.subr.bf16.mxu0 0
        %1433 = vmatpush1.bf16.xpose.msra.mxu0 0
        %1434 = vmatprep.subr.bf16.mxu0 0
        %1435 = vmatpush1.bf16.xpose.msra.mxu0 0
        %1436 = vmatprep.subr.bf16.mxu0 0
        %1437 = vmatpush1.bf16.xpose.msra.mxu0 0
        %1438 = vmatprep.subr.bf16.mxu0 0
        %1439 = vmatpush1.bf16.xpose.msra.mxu0 0
        %1440 = vmatprep.mubr.bf16.mxu0 0
        %1441 = vmatmul.mubr.bf16.gmra.mrb[0].mxu0 %v1406
        %v1442 = vpop.f32.mrb[0].mxu0
        %v1443 = vadd.f32 %v1401, %v1442
        %v1444 = vpop.f32.mrb[0].mxu0
        %v1445 = vpop.f32.mrb[0].mxu0
        %v1446 = vpop.f32.mrb[0].mxu0
        %1447 = vdwg.mxu0
        %1448 = vmax.xlane.f32.xlu0 %v1443
        %v1449 = vpop.xlane.xlu0 %1448
        %v1450 = vsub.f32 %v1443, %v1449
        %v1451 = vmul.f32 %v1450, 1.442695
        %v1452 = vpow.pop %v1451
        %1453 = vadd.xlane.f32.xlu0 %v1452
        %v1454 = vpop.xlane.xlu0 %1453
        %v1455 = vrcp.pop %v1454
        %v1456 = vmul.f32 %v1452, %v1455
        %v1457 = vpack.c.bf16 %v1456, %v1456
        %1458 = vmatprep.subr.bf16.mxu0 0
        %1459 = vmatpush1.bf16.msra.mxu0 %v1206
        %1460 = vmatprep.subr.bf16.mxu0 0
        %1461 = vmatpush1.bf16.msra.mxu0 %v1207
        %1462 = vmatprep.subr.bf16.mxu0 0
        %1463 = vmatpush1.bf16.msra.mxu0 %v1208
        %1464 = vmatprep.subr.bf16.mxu0 0
        %1465 = vmatpush1.bf16.msra.mxu0 %v1209
        %1466 = vmatprep.subr.bf16.mxu0 0
        %1467 = vmatpush1.bf16.msra.mxu0 %v1210
        %1468 = vmatprep.subr.bf16.mxu0 0
        %1469 = vmatpush1.bf16.msra.mxu0 %v1211
        %1470 = vmatprep.subr.bf16.mxu0 0
        %1471 = vmatpush1.bf16.msra.mxu0 %v1212
        %1472 = vmatprep.subr.bf16.mxu0 0
        %1473 = vmatpush1.bf16.msra.mxu0 %v1213
        %1474 = vmatprep.subr.bf16.mxu0 0
        %1475 = vmatpush1.bf16.msra.mxu0 0
        %1476 = vmatprep.subr.bf16.mxu0 0
        %1477 = vmatpush1.bf16.msra.mxu0 0
        %1478 = vmatprep.subr.bf16.mxu0 0
        %1479 = vmatpush1.bf16.msra.mxu0 0
        %1480 = vmatprep.subr.bf16.mxu0 0
        %1481 = vmatpush1.bf16.msra.mxu0 0
        %1482 = vmatprep.subr.bf16.mxu0 0
        %1483 = vmatpush1.bf16.msra.mxu0 0
        %1484 = vmatprep.subr.bf16.mxu0 0
        %1485 = vmatpush1.bf16.msra.mxu0 0
        %1486 = vmatprep.subr.bf16.mxu0 0
        %1487 = vmatpush1.bf16.msra.mxu0 0
        %1488 = vmatprep.subr.bf16.mxu0 0
        %1489 = vmatpush1.bf16.msra.mxu0 0
        %1490 = vmatprep.mubr.bf16.mxu0 0
        %1491 = vmatmul.mubr.bf16.gmra.mrb[0].mxu0 %v1457
        %v1492 = vpop.f32.mrb[0].mxu0
        %v1493 = vadd.f32 0.0, %v1492
        %v1494 = vpop.f32.mrb[0].mxu0
        %v1495 = vpop.f32.mrb[0].mxu0
        %v1496 = vpop.f32.mrb[0].mxu0
        %1497 = vdwg.mxu0
        %1498 = vrot.lane.b32.xlu0 %v1007, 96
        %v1499 = vpop.permute.xlu0 %1498
        %1501 = vrot.lane.b32.xlu0 %v1499, 16
        %v1502 = vpop.permute.xlu0 %1501
        %v1503 = vsel %vm1124, %v1502, %v1499
        %1504 = vrot.lane.b32.xlu0 %v1503, 16
        %v1505 = vpop.permute.xlu0 %1504
        %v1506 = vsel %vm1124, %v1505, %v1499
        %1507 = vrot.lane.b32.xlu0 %v925, 32
        %v1508 = vpop.permute.xlu0 %1507
        %v1510 = vmul.f32 %v1007, %v1508
        %v1511 = vmul.f32 %v1506, %v1134
        %1513 = vrot.lane.b32.xlu0 %v1511, 17
        %v1514 = vpop.permute.xlu0 %1513
        %v1516 = vadd.f32 %v1510, %v1514
        %v1517 = vmul.f32 %v1506, %v1144
        %1519 = vrot.lane.b32.xlu0 %v1517, 31
        %v1520 = vpop.permute.xlu0 %1519
        %v1522 = vadd.f32 %v1516, %v1520
        %v1523 = vmul.f32 %v1522, %v1522
        %1525 = vrot.lane.b32.xlu0 %v1523, 96
        %v1526 = vpop.permute.xlu0 %1525
        %v1528 = vsel %vm1153, %v1526, 0.0
        %1529 = vadd.xlane.f32.xlu0 %v1528
        %v1530 = vpop.xlane.xlu0 %1529
        %v1531 = vmax.f32 %v1530, 1e-24
        %v1532 = vrsqrt.pop %v1531
        %v1533 = vmul.f32 %v1532, 4.0
        %v1534 = vmul.f32 %v1522, %v1533
        %v1535 = vpack.c.bf16 %v1534, %v1534
        %s1536 = scalar_lea.vmem %s16, 16
        %v1537 = vld [vmem:[%s1536] sm:$0xff]
        %1539 = vrot.lane.b32.xlu0 %v1535, 96
        %v1540 = vpop.permute.xlu0 %1539
        %v1542 = vsel %vm1153, %v1540, 0
        %1544 = vmatprep.subr.bf16.mxu0 0
        %1545 = vmatpush1.bf16.xpose.msra.mxu0 %v1247
        %1546 = vmatprep.subr.bf16.mxu0 0
        %1547 = vmatpush1.bf16.xpose.msra.mxu0 %v1250
        %1548 = vmatprep.subr.bf16.mxu0 0
        %1549 = vmatpush1.bf16.xpose.msra.mxu0 %v1253
        %1550 = vmatprep.subr.bf16.mxu0 0
        %1551 = vmatpush1.bf16.xpose.msra.mxu0 %v1256
        %1552 = vmatprep.subr.bf16.mxu0 0
        %1553 = vmatpush1.bf16.xpose.msra.mxu0 %v1259
        %1554 = vmatprep.subr.bf16.mxu0 0
        %1555 = vmatpush1.bf16.xpose.msra.mxu0 %v1262
        %1556 = vmatprep.subr.bf16.mxu0 0
        %1557 = vmatpush1.bf16.xpose.msra.mxu0 %v1265
        %1558 = vmatprep.subr.bf16.mxu0 0
        %1559 = vmatpush1.bf16.xpose.msra.mxu0 %v1268
        %1560 = vmatprep.subr.bf16.mxu0 0
        %1561 = vmatpush1.bf16.xpose.msra.mxu0 0
        %1562 = vmatprep.subr.bf16.mxu0 0
        %1563 = vmatpush1.bf16.xpose.msra.mxu0 0
        %1564 = vmatprep.subr.bf16.mxu0 0
        %1565 = vmatpush1.bf16.xpose.msra.mxu0 0
        %1566 = vmatprep.subr.bf16.mxu0 0
        %1567 = vmatpush1.bf16.xpose.msra.mxu0 0
        %1568 = vmatprep.subr.bf16.mxu0 0
        %1569 = vmatpush1.bf16.xpose.msra.mxu0 0
        %1570 = vmatprep.subr.bf16.mxu0 0
        %1571 = vmatpush1.bf16.xpose.msra.mxu0 0
        %1572 = vmatprep.subr.bf16.mxu0 0
        %1573 = vmatpush1.bf16.xpose.msra.mxu0 0
        %1574 = vmatprep.subr.bf16.mxu0 0
        %1575 = vmatpush1.bf16.xpose.msra.mxu0 0
        %1576 = vmatprep.mubr.bf16.mxu0 0
        %1577 = vmatmul.mubr.bf16.gmra.mrb[0].mxu0 %v1542
        %v1578 = vpop.f32.mrb[0].mxu0
        %v1579 = vadd.f32 %v1537, %v1578
        %v1580 = vpop.f32.mrb[0].mxu0
        %v1581 = vpop.f32.mrb[0].mxu0
        %v1582 = vpop.f32.mrb[0].mxu0
        %1583 = vdwg.mxu0
        %1584 = vmax.xlane.f32.xlu0 %v1579
        %v1585 = vpop.xlane.xlu0 %1584
        %v1586 = vsub.f32 %v1579, %v1585
        %v1587 = vmul.f32 %v1586, 1.442695
        %v1588 = vpow.pop %v1587
        %1589 = vadd.xlane.f32.xlu0 %v1588
        %v1590 = vpop.xlane.xlu0 %1589
        %v1591 = vrcp.pop %v1590
        %v1592 = vmul.f32 %v1588, %v1591
        %v1593 = vpack.c.bf16 %v1592, %v1592
        %1594 = vmatprep.subr.bf16.mxu0 0
        %1595 = vmatpush1.bf16.msra.mxu0 %v1206
        %1596 = vmatprep.subr.bf16.mxu0 0
        %1597 = vmatpush1.bf16.msra.mxu0 %v1207
        %1598 = vmatprep.subr.bf16.mxu0 0
        %1599 = vmatpush1.bf16.msra.mxu0 %v1208
        %1600 = vmatprep.subr.bf16.mxu0 0
        %1601 = vmatpush1.bf16.msra.mxu0 %v1209
        %1602 = vmatprep.subr.bf16.mxu0 0
        %1603 = vmatpush1.bf16.msra.mxu0 %v1210
        %1604 = vmatprep.subr.bf16.mxu0 0
        %1605 = vmatpush1.bf16.msra.mxu0 %v1211
        %1606 = vmatprep.subr.bf16.mxu0 0
        %1607 = vmatpush1.bf16.msra.mxu0 %v1212
        %1608 = vmatprep.subr.bf16.mxu0 0
        %1609 = vmatpush1.bf16.msra.mxu0 %v1213
        %1610 = vmatprep.subr.bf16.mxu0 0
        %1611 = vmatpush1.bf16.msra.mxu0 0
        %1612 = vmatprep.subr.bf16.mxu0 0
        %1613 = vmatpush1.bf16.msra.mxu0 0
        %1614 = vmatprep.subr.bf16.mxu0 0
        %1615 = vmatpush1.bf16.msra.mxu0 0
        %1616 = vmatprep.subr.bf16.mxu0 0
        %1617 = vmatpush1.bf16.msra.mxu0 0
        %1618 = vmatprep.subr.bf16.mxu0 0
        %1619 = vmatpush1.bf16.msra.mxu0 0
        %1620 = vmatprep.subr.bf16.mxu0 0
        %1621 = vmatpush1.bf16.msra.mxu0 0
        %1622 = vmatprep.subr.bf16.mxu0 0
        %1623 = vmatpush1.bf16.msra.mxu0 0
        %1624 = vmatprep.subr.bf16.mxu0 0
        %1625 = vmatpush1.bf16.msra.mxu0 0
        %1626 = vmatprep.mubr.bf16.mxu0 0
        %1627 = vmatmul.mubr.bf16.gmra.mrb[0].mxu0 %v1593
        %v1628 = vpop.f32.mrb[0].mxu0
        %v1629 = vadd.f32 0.0, %v1628
        %v1630 = vpop.f32.mrb[0].mxu0
        %v1631 = vpop.f32.mrb[0].mxu0
        %v1632 = vpop.f32.mrb[0].mxu0
        %1633 = vdwg.mxu0
        %1634 = vrot.lane.b32.xlu0 %v1007, 80
        %v1635 = vpop.permute.xlu0 %1634
        %1637 = vrot.lane.b32.xlu0 %v1635, 16
        %v1638 = vpop.permute.xlu0 %1637
        %v1639 = vsel %vm1124, %v1638, %v1635
        %1640 = vrot.lane.b32.xlu0 %v1639, 16
        %v1641 = vpop.permute.xlu0 %1640
        %v1642 = vsel %vm1124, %v1641, %v1635
        %1643 = vrot.lane.b32.xlu0 %v925, 48
        %v1644 = vpop.permute.xlu0 %1643
        %v1646 = vmul.f32 %v1007, %v1644
        %v1647 = vmul.f32 %v1642, %v1134
        %1649 = vrot.lane.b32.xlu0 %v1647, 33
        %v1650 = vpop.permute.xlu0 %1649
        %v1652 = vadd.f32 %v1646, %v1650
        %v1653 = vmul.f32 %v1642, %v1144
        %1655 = vrot.lane.b32.xlu0 %v1653, 47
        %v1656 = vpop.permute.xlu0 %1655
        %v1658 = vadd.f32 %v1652, %v1656
        %v1659 = vmul.f32 %v1658, %v1658
        %1661 = vrot.lane.b32.xlu0 %v1659, 80
        %v1662 = vpop.permute.xlu0 %1661
        %v1664 = vsel %vm1153, %v1662, 0.0
        %1665 = vadd.xlane.f32.xlu0 %v1664
        %v1666 = vpop.xlane.xlu0 %1665
        %v1667 = vmax.f32 %v1666, 1e-24
        %v1668 = vrsqrt.pop %v1667
        %v1669 = vmul.f32 %v1668, 4.0
        %v1670 = vmul.f32 %v1658, %v1669
        %v1671 = vpack.c.bf16 %v1670, %v1670
        %s1672 = scalar_lea.vmem %s16, 24
        %v1673 = vld [vmem:[%s1672] sm:$0xff]
        %1675 = vrot.lane.b32.xlu0 %v1671, 80
        %v1676 = vpop.permute.xlu0 %1675
        %v1678 = vsel %vm1153, %v1676, 0
        %1680 = vmatprep.subr.bf16.mxu0 0
        %1681 = vmatpush1.bf16.xpose.msra.mxu0 %v1247
        %1682 = vmatprep.subr.bf16.mxu0 0
        %1683 = vmatpush1.bf16.xpose.msra.mxu0 %v1250
        %1684 = vmatprep.subr.bf16.mxu0 0
        %1685 = vmatpush1.bf16.xpose.msra.mxu0 %v1253
        %1686 = vmatprep.subr.bf16.mxu0 0
        %1687 = vmatpush1.bf16.xpose.msra.mxu0 %v1256
        %1688 = vmatprep.subr.bf16.mxu0 0
        %1689 = vmatpush1.bf16.xpose.msra.mxu0 %v1259
        %1690 = vmatprep.subr.bf16.mxu0 0
        %1691 = vmatpush1.bf16.xpose.msra.mxu0 %v1262
        %1692 = vmatprep.subr.bf16.mxu0 0
        %1693 = vmatpush1.bf16.xpose.msra.mxu0 %v1265
        %1694 = vmatprep.subr.bf16.mxu0 0
        %1695 = vmatpush1.bf16.xpose.msra.mxu0 %v1268
        %1696 = vmatprep.subr.bf16.mxu0 0
        %1697 = vmatpush1.bf16.xpose.msra.mxu0 0
        %1698 = vmatprep.subr.bf16.mxu0 0
        %1699 = vmatpush1.bf16.xpose.msra.mxu0 0
        %1700 = vmatprep.subr.bf16.mxu0 0
        %1701 = vmatpush1.bf16.xpose.msra.mxu0 0
        %1702 = vmatprep.subr.bf16.mxu0 0
        %1703 = vmatpush1.bf16.xpose.msra.mxu0 0
        %1704 = vmatprep.subr.bf16.mxu0 0
        %1705 = vmatpush1.bf16.xpose.msra.mxu0 0
        %1706 = vmatprep.subr.bf16.mxu0 0
        %1707 = vmatpush1.bf16.xpose.msra.mxu0 0
        %1708 = vmatprep.subr.bf16.mxu0 0
        %1709 = vmatpush1.bf16.xpose.msra.mxu0 0
        %1710 = vmatprep.subr.bf16.mxu0 0
        %1711 = vmatpush1.bf16.xpose.msra.mxu0 0
        %1712 = vmatprep.mubr.bf16.mxu0 0
        %1713 = vmatmul.mubr.bf16.gmra.mrb[0].mxu0 %v1678
        %v1714 = vpop.f32.mrb[0].mxu0
        %v1715 = vadd.f32 %v1673, %v1714
        %v1716 = vpop.f32.mrb[0].mxu0
        %v1717 = vpop.f32.mrb[0].mxu0
        %v1718 = vpop.f32.mrb[0].mxu0
        %1719 = vdwg.mxu0
        %1720 = vmax.xlane.f32.xlu0 %v1715
        %v1721 = vpop.xlane.xlu0 %1720
        %v1722 = vsub.f32 %v1715, %v1721
        %v1723 = vmul.f32 %v1722, 1.442695
        %v1724 = vpow.pop %v1723
        %1725 = vadd.xlane.f32.xlu0 %v1724
        %v1726 = vpop.xlane.xlu0 %1725
        %v1727 = vrcp.pop %v1726
        %v1728 = vmul.f32 %v1724, %v1727
        %v1729 = vpack.c.bf16 %v1728, %v1728
        %1730 = vmatprep.subr.bf16.mxu0 0
        %1731 = vmatpush1.bf16.msra.mxu0 %v1206
        %1732 = vmatprep.subr.bf16.mxu0 0
        %1733 = vmatpush1.bf16.msra.mxu0 %v1207
        %1734 = vmatprep.subr.bf16.mxu0 0
        %1735 = vmatpush1.bf16.msra.mxu0 %v1208
        %1736 = vmatprep.subr.bf16.mxu0 0
        %1737 = vmatpush1.bf16.msra.mxu0 %v1209
        %1738 = vmatprep.subr.bf16.mxu0 0
        %1739 = vmatpush1.bf16.msra.mxu0 %v1210
        %1740 = vmatprep.subr.bf16.mxu0 0
        %1741 = vmatpush1.bf16.msra.mxu0 %v1211
        %1742 = vmatprep.subr.bf16.mxu0 0
        %1743 = vmatpush1.bf16.msra.mxu0 %v1212
        %1744 = vmatprep.subr.bf16.mxu0 0
        %1745 = vmatpush1.bf16.msra.mxu0 %v1213
        %1746 = vmatprep.subr.bf16.mxu0 0
        %1747 = vmatpush1.bf16.msra.mxu0 0
        %1748 = vmatprep.subr.bf16.mxu0 0
        %1749 = vmatpush1.bf16.msra.mxu0 0
        %1750 = vmatprep.subr.bf16.mxu0 0
        %1751 = vmatpush1.bf16.msra.mxu0 0
        %1752 = vmatprep.subr.bf16.mxu0 0
        %1753 = vmatpush1.bf16.msra.mxu0 0
        %1754 = vmatprep.subr.bf16.mxu0 0
        %1755 = vmatpush1.bf16.msra.mxu0 0
        %1756 = vmatprep.subr.bf16.mxu0 0
        %1757 = vmatpush1.bf16.msra.mxu0 0
        %1758 = vmatprep.subr.bf16.mxu0 0
        %1759 = vmatpush1.bf16.msra.mxu0 0
        %1760 = vmatprep.subr.bf16.mxu0 0
        %1761 = vmatpush1.bf16.msra.mxu0 0
        %1762 = vmatprep.mubr.bf16.mxu0 0
        %1763 = vmatmul.mubr.bf16.gmra.mrb[0].mxu0 %v1729
        %v1764 = vpop.f32.mrb[0].mxu0
        %v1765 = vadd.f32 0.0, %v1764
        %v1766 = vpop.f32.mrb[0].mxu0
        %v1767 = vpop.f32.mrb[0].mxu0
        %v1768 = vpop.f32.mrb[0].mxu0
        %1769 = vdwg.mxu0
        %1771 = vrot.lane.b32.xlu0 %v1493, 16
        %v1772 = vpop.permute.xlu0 %1771
        %1775 = vrot.lane.b32.xlu0 %v1629, 32
        %v1776 = vpop.permute.xlu0 %1775
        %1779 = vrot.lane.b32.xlu0 %v1765, 48
        %v1780 = vpop.permute.xlu0 %1779
        %v1782 = vsel %vm1153, %v1355, %v1772
        %v1783 = vsel %vm930, %v1782, %v1776
        %vm1784 = vcmask 392192
        %v1785 = vsel %vm1784, %v1783, %v1780
        %v1786 = vpack.c.bf16 %v1785, %v1785
        %v1787 = vld [vmem:[%s811] sm:$0xf]
        %v1788 = vld [vmem:[%s811 + $0x4] sm:$0xf]
        %v1789 = vld [vmem:[%s811 + $0x8] sm:$0xf]
        %v1790 = vld [vmem:[%s811 + $0xc] sm:$0xf]
        %v1791 = vld [vmem:[%s811 + $0x10] sm:$0xf]
        %v1792 = vld [vmem:[%s811 + $0x14] sm:$0xf]
        %v1793 = vld [vmem:[%s811 + $0x18] sm:$0xf]
        %v1794 = vld [vmem:[%s811 + $0x1c] sm:$0xf]
        %v1803 = vunpack.c.l.b16 %v1787
        %v1804 = vunpack.c.l.b16 %v1788
        %v1805 = vunpack.c.l.b16 %v1789
        %v1806 = vunpack.c.l.b16 %v1790
        %v1807 = vunpack.c.l.b16 %v1791
        %v1808 = vunpack.c.l.b16 %v1792
        %v1809 = vunpack.c.l.b16 %v1793
        %v1810 = vunpack.c.l.b16 %v1794
        %v1811 = vpack.c.b16 %v1804, %v1803
        %v1812 = vpack.c.b16 %v1806, %v1805
        %v1813 = vpack.c.b16 %v1808, %v1807
        %v1814 = vpack.c.b16 %v1810, %v1809
        %vm1819 = vcmask 523264
        %v1821 = vsel %vm1819, %v1786, 0
        %1823 = vmatprep.subr.bf16.mxu0 0
        %1824 = vmatpush1.bf16.msra.mxu0 %v1811
        %1825 = vmatprep.subr.bf16.mxu0 0
        %1826 = vmatpush1.bf16.msra.mxu0 %v1812
        %1827 = vmatprep.subr.bf16.mxu0 0
        %1828 = vmatpush1.bf16.msra.mxu0 %v1813
        %1829 = vmatprep.subr.bf16.mxu0 0
        %1830 = vmatpush1.bf16.msra.mxu0 %v1814
        %1831 = vmatprep.subr.bf16.mxu0 0
        %1832 = vmatpush1.bf16.msra.mxu0 0
        %1833 = vmatprep.subr.bf16.mxu0 0
        %1834 = vmatpush1.bf16.msra.mxu0 0
        %1835 = vmatprep.subr.bf16.mxu0 0
        %1836 = vmatpush1.bf16.msra.mxu0 0
        %1837 = vmatprep.subr.bf16.mxu0 0
        %1838 = vmatpush1.bf16.msra.mxu0 0
        %1839 = vmatprep.subr.bf16.mxu0 0
        %1840 = vmatpush1.bf16.msra.mxu0 0
        %1841 = vmatprep.subr.bf16.mxu0 0
        %1842 = vmatpush1.bf16.msra.mxu0 0
        %1843 = vmatprep.subr.bf16.mxu0 0
        %1844 = vmatpush1.bf16.msra.mxu0 0
        %1845 = vmatprep.subr.bf16.mxu0 0
        %1846 = vmatpush1.bf16.msra.mxu0 0
        %1847 = vmatprep.subr.bf16.mxu0 0
        %1848 = vmatpush1.bf16.msra.mxu0 0
        %1849 = vmatprep.subr.bf16.mxu0 0
        %1850 = vmatpush1.bf16.msra.mxu0 0
        %1851 = vmatprep.subr.bf16.mxu0 0
        %1852 = vmatpush1.bf16.msra.mxu0 0
        %1853 = vmatprep.subr.bf16.mxu0 0
        %1854 = vmatpush1.bf16.msra.mxu0 0
        %1855 = vmatprep.mubr.bf16.mxu0 0
        %1856 = vmatmul.mubr.bf16.gmra.mrb[0].mxu0 %v1821
        %v1857 = vpop.f32.mrb[0].mxu0
        %v1858 = vadd.f32 0.0, %v1857
        %v1859 = vpop.f32.mrb[0].mxu0
        %v1860 = vpop.f32.mrb[0].mxu0
        %v1861 = vpop.f32.mrb[0].mxu0
        %1862 = vdwg.mxu0
        %v1863 = vld [vmem:[%s814] sm:$0x1]
        %v1864 = vsel %vm930, %v1858, 0.0
        %1865 = vadd.xlane.f32.xlu0 %v1864
        %v1866 = vpop.xlane.xlu0 %1865
        %v1867 = vmul.f32 %v1866, %v934
        %v1868 = vsub.f32 %v1858, %v1867
        %v1869 = vmul.f32 %v1868, %v1868
        %v1870 = vsel %vm930, %v1869, 0.0
        %1871 = vadd.xlane.f32.xlu0 %v1870
        %v1872 = vpop.xlane.xlu0 %1871
        %v1873 = vmul.f32 %v1872, %v934
        %v1874 = vadd.f32 %v1873, 1e-05
        %v1875 = vrsqrt.pop %v1874
        %v1876 = vmul.f32 %v1868, %v1875
        %v1878 = vlaneseq
        %v1879 = vshrl.u32 %v1878, 7
        %v1880 = vsub.s32 0, %v1879
        %v1881 = vrot.slane %v1863, %v1880
        %v1883 = vmul.f32 %v1876, %v1881
        %v1884 = vadd.f32 %v928, %v1883
        %v1885 = vld [vmem:[%s817] sm:$0x1]
        %v1886 = vsel %vm930, %v1884, 0.0
        %1887 = vadd.xlane.f32.xlu0 %v1886
        %v1888 = vpop.xlane.xlu0 %1887
        %v1889 = vmul.f32 %v1888, %v934
        %v1890 = vsub.f32 %v1884, %v1889
        %v1891 = vmul.f32 %v1890, %v1890
        %v1892 = vsel %vm930, %v1891, 0.0
        %1893 = vadd.xlane.f32.xlu0 %v1892
        %v1894 = vpop.xlane.xlu0 %1893
        %v1895 = vmul.f32 %v1894, %v934
        %v1896 = vadd.f32 %v1895, 1e-05
        %v1897 = vrsqrt.pop %v1896
        %v1898 = vmul.f32 %v1890, %v1897
        %v1900 = vlaneseq
        %v1901 = vshrl.u32 %v1900, 7
        %v1902 = vsub.s32 0, %v1901
        %v1903 = vrot.slane %v1885, %v1902
        %v1905 = vmul.f32 %v1898, %v1903
        %v1906 = vpack.c.bf16 %v1905, %v1905
        %v1907 = vld [vmem:[%s822] sm:$0xf]
        %v1908 = vld [vmem:[%s822 + $0x4] sm:$0xf]
        %v1909 = vld [vmem:[%s822 + $0x8] sm:$0xf]
        %v1910 = vld [vmem:[%s822 + $0xc] sm:$0xf]
        %v1915 = vunpack.c.l.b16 %v1907
        %v1916 = vunpack.c.l.b16 %v1908
        %v1917 = vunpack.c.l.b16 %v1909
        %v1918 = vunpack.c.l.b16 %v1910
        %v1919 = vpack.c.b16 %v1916, %v1915
        %v1920 = vpack.c.b16 %v1918, %v1917
        %v1924 = vsel %vm930, %v1906, 0
        %1926 = vmatprep.subr.bf16.mxu0 0
        %1927 = vmatpush1.bf16.msra.mxu0 %v1919
        %1928 = vmatprep.subr.bf16.mxu0 0
        %1929 = vmatpush1.bf16.msra.mxu0 %v1920
        %1930 = vmatprep.subr.bf16.mxu0 0
        %1931 = vmatpush1.bf16.msra.mxu0 0
        %1932 = vmatprep.subr.bf16.mxu0 0
        %1933 = vmatpush1.bf16.msra.mxu0 0
        %1934 = vmatprep.subr.bf16.mxu0 0
        %1935 = vmatpush1.bf16.msra.mxu0 0
        %1936 = vmatprep.subr.bf16.mxu0 0
        %1937 = vmatpush1.bf16.msra.mxu0 0
        %1938 = vmatprep.subr.bf16.mxu0 0
        %1939 = vmatpush1.bf16.msra.mxu0 0
        %1940 = vmatprep.subr.bf16.mxu0 0
        %1941 = vmatpush1.bf16.msra.mxu0 0
        %1942 = vmatprep.subr.bf16.mxu0 0
        %1943 = vmatpush1.bf16.msra.mxu0 0
        %1944 = vmatprep.subr.bf16.mxu0 0
        %1945 = vmatpush1.bf16.msra.mxu0 0
        %1946 = vmatprep.subr.bf16.mxu0 0
        %1947 = vmatpush1.bf16.msra.mxu0 0
        %1948 = vmatprep.subr.bf16.mxu0 0
        %1949 = vmatpush1.bf16.msra.mxu0 0
        %1950 = vmatprep.subr.bf16.mxu0 0
        %1951 = vmatpush1.bf16.msra.mxu0 0
        %1952 = vmatprep.subr.bf16.mxu0 0
        %1953 = vmatpush1.bf16.msra.mxu0 0
        %1954 = vmatprep.subr.bf16.mxu0 0
        %1955 = vmatpush1.bf16.msra.mxu0 0
        %1956 = vmatprep.subr.bf16.mxu0 0
        %1957 = vmatpush1.bf16.msra.mxu0 0
        %1958 = vmatprep.mubr.bf16.mxu0 0
        %1959 = vmatmul.mubr.bf16.gmra.mrb[0].mxu0 %v1924
        %v1960 = vpop.f32.mrb[0].mxu0
        %v1961 = vadd.f32 0.0, %v1960
        %v1962 = vpop.f32.mrb[0].mxu0
        %v1963 = vpop.f32.mrb[0].mxu0
        %v1964 = vpop.f32.mrb[0].mxu0
        %1965 = vdwg.mxu0
        %v1966 = vld [vmem:[%s827] sm:$0xf]
        %v1967 = vld [vmem:[%s827 + $0x4] sm:$0xf]
        %v1968 = vld [vmem:[%s827 + $0x8] sm:$0xf]
        %v1969 = vld [vmem:[%s827 + $0xc] sm:$0xf]
        %v1974 = vunpack.c.l.b16 %v1966
        %v1975 = vunpack.c.l.b16 %v1967
        %v1976 = vunpack.c.l.b16 %v1968
        %v1977 = vunpack.c.l.b16 %v1969
        %v1978 = vpack.c.b16 %v1975, %v1974
        %v1979 = vpack.c.b16 %v1977, %v1976
        %1982 = vmatprep.subr.bf16.mxu0 0
        %1983 = vmatpush1.bf16.msra.mxu0 %v1978
        %1984 = vmatprep.subr.bf16.mxu0 0
        %1985 = vmatpush1.bf16.msra.mxu0 %v1979
        %1986 = vmatprep.subr.bf16.mxu0 0
        %1987 = vmatpush1.bf16.msra.mxu0 0
        %1988 = vmatprep.subr.bf16.mxu0 0
        %1989 = vmatpush1.bf16.msra.mxu0 0
        %1990 = vmatprep.subr.bf16.mxu0 0
        %1991 = vmatpush1.bf16.msra.mxu0 0
        %1992 = vmatprep.subr.bf16.mxu0 0
        %1993 = vmatpush1.bf16.msra.mxu0 0
        %1994 = vmatprep.subr.bf16.mxu0 0
        %1995 = vmatpush1.bf16.msra.mxu0 0
        %1996 = vmatprep.subr.bf16.mxu0 0
        %1997 = vmatpush1.bf16.msra.mxu0 0
        %1998 = vmatprep.subr.bf16.mxu0 0
        %1999 = vmatpush1.bf16.msra.mxu0 0
        %2000 = vmatprep.subr.bf16.mxu0 0
        %2001 = vmatpush1.bf16.msra.mxu0 0
        %2002 = vmatprep.subr.bf16.mxu0 0
        %2003 = vmatpush1.bf16.msra.mxu0 0
        %2004 = vmatprep.subr.bf16.mxu0 0
        %2005 = vmatpush1.bf16.msra.mxu0 0
        %2006 = vmatprep.subr.bf16.mxu0 0
        %2007 = vmatpush1.bf16.msra.mxu0 0
        %2008 = vmatprep.subr.bf16.mxu0 0
        %2009 = vmatpush1.bf16.msra.mxu0 0
        %2010 = vmatprep.subr.bf16.mxu0 0
        %2011 = vmatpush1.bf16.msra.mxu0 0
        %2012 = vmatprep.subr.bf16.mxu0 0
        %2013 = vmatpush1.bf16.msra.mxu0 0
        %2014 = vmatprep.mubr.bf16.mxu0 0
        %2015 = vmatmul.mubr.bf16.gmra.mrb[0].mxu0 %v1924
        %v2016 = vpop.f32.mrb[0].mxu0
        %v2017 = vadd.f32 0.0, %v2016
        %v2018 = vpop.f32.mrb[0].mxu0
        %v2019 = vpop.f32.mrb[0].mxu0
        %v2020 = vpop.f32.mrb[0].mxu0
        %2021 = vdwg.mxu0
        %v2022 = vxor.u32 %v2017, 2147483648
        %v2023 = vmul.f32 %v2022, 1.442695
        %v2024 = vpow.pop %v2023
        %v2025 = vadd.f32 %v2024, 1.0
        %v2026 = vrcp.pop %v2025
        %v2027 = vmul.f32 1.0, %v2026
        %v2028 = vmul.f32 %v2017, %v2027
        %v2029 = vmul.f32 %v1961, %v2028
        %v2030 = vpack.c.bf16 %v2029, %v2029
        %v2031 = vld [vmem:[%s832] sm:$0xf]
        %v2032 = vld [vmem:[%s832 + $0x4] sm:$0xf]
        %v2033 = vld [vmem:[%s832 + $0x8] sm:$0xf]
        %v2034 = vld [vmem:[%s832 + $0xc] sm:$0xf]
        %v2035 = vld [vmem:[%s832 + $0x10] sm:$0xf]
        %v2036 = vld [vmem:[%s832 + $0x14] sm:$0xf]
        %v2037 = vld [vmem:[%s832 + $0x18] sm:$0xf]
        %v2038 = vld [vmem:[%s832 + $0x1c] sm:$0xf]
        %v2039 = vld [vmem:[%s832 + $0x20] sm:$0xf]
        %v2040 = vld [vmem:[%s832 + $0x24] sm:$0xf]
        %v2041 = vld [vmem:[%s832 + $0x28] sm:$0xf]
        %v2042 = vld [vmem:[%s832 + $0x2c] sm:$0xf]
        %v2043 = vld [vmem:[%s832 + $0x30] sm:$0xf]
        %v2044 = vld [vmem:[%s832 + $0x34] sm:$0xf]
        %v2045 = vld [vmem:[%s832 + $0x38] sm:$0xf]
        %v2046 = vld [vmem:[%s832 + $0x3c] sm:$0xf]
        %v2063 = vunpack.c.l.b16 %v2031
        %v2064 = vunpack.c.l.b16 %v2032
        %v2065 = vunpack.c.l.b16 %v2033
        %v2066 = vunpack.c.l.b16 %v2034
        %v2067 = vunpack.c.l.b16 %v2035
        %v2068 = vunpack.c.l.b16 %v2036
        %v2069 = vunpack.c.l.b16 %v2037
        %v2070 = vunpack.c.l.b16 %v2038
        %v2071 = vunpack.c.l.b16 %v2039
        %v2072 = vunpack.c.l.b16 %v2040
        %v2073 = vunpack.c.l.b16 %v2041
        %v2074 = vunpack.c.l.b16 %v2042
        %v2075 = vunpack.c.l.b16 %v2043
        %v2076 = vunpack.c.l.b16 %v2044
        %v2077 = vunpack.c.l.b16 %v2045
        %v2078 = vunpack.c.l.b16 %v2046
        %v2079 = vpack.c.b16 %v2064, %v2063
        %v2080 = vpack.c.b16 %v2066, %v2065
        %v2081 = vpack.c.b16 %v2068, %v2067
        %v2082 = vpack.c.b16 %v2070, %v2069
        %v2083 = vpack.c.b16 %v2072, %v2071
        %v2084 = vpack.c.b16 %v2074, %v2073
        %v2085 = vpack.c.b16 %v2076, %v2075
        %v2086 = vpack.c.b16 %v2078, %v2077
        %2095 = vmatprep.subr.bf16.mxu0 0
        %2096 = vmatpush1.bf16.msra.mxu0 %v2079
        %2097 = vmatprep.subr.bf16.mxu0 0
        %2098 = vmatpush1.bf16.msra.mxu0 %v2080
        %2099 = vmatprep.subr.bf16.mxu0 0
        %2100 = vmatpush1.bf16.msra.mxu0 %v2081
        %2101 = vmatprep.subr.bf16.mxu0 0
        %2102 = vmatpush1.bf16.msra.mxu0 %v2082
        %2103 = vmatprep.subr.bf16.mxu0 0
        %2104 = vmatpush1.bf16.msra.mxu0 %v2083
        %2105 = vmatprep.subr.bf16.mxu0 0
        %2106 = vmatpush1.bf16.msra.mxu0 %v2084
        %2107 = vmatprep.subr.bf16.mxu0 0
        %2108 = vmatpush1.bf16.msra.mxu0 %v2085
        %2109 = vmatprep.subr.bf16.mxu0 0
        %2110 = vmatpush1.bf16.msra.mxu0 %v2086
        %2111 = vmatprep.subr.bf16.mxu0 0
        %2112 = vmatpush1.bf16.msra.mxu0 0
        %2113 = vmatprep.subr.bf16.mxu0 0
        %2114 = vmatpush1.bf16.msra.mxu0 0
        %2115 = vmatprep.subr.bf16.mxu0 0
        %2116 = vmatpush1.bf16.msra.mxu0 0
        %2117 = vmatprep.subr.bf16.mxu0 0
        %2118 = vmatpush1.bf16.msra.mxu0 0
        %2119 = vmatprep.subr.bf16.mxu0 0
        %2120 = vmatpush1.bf16.msra.mxu0 0
        %2121 = vmatprep.subr.bf16.mxu0 0
        %2122 = vmatpush1.bf16.msra.mxu0 0
        %2123 = vmatprep.subr.bf16.mxu0 0
        %2124 = vmatpush1.bf16.msra.mxu0 0
        %2125 = vmatprep.subr.bf16.mxu0 0
        %2126 = vmatpush1.bf16.msra.mxu0 0
        %2127 = vmatprep.mubr.bf16.mxu0 0
        %2128 = vmatmul.mubr.bf16.gmra.mrb[0].mxu0 %v2030
        %v2129 = vpop.f32.mrb[0].mxu0
        %v2130 = vadd.f32 0.0, %v2129
        %v2131 = vpop.f32.mrb[0].mxu0
        %v2132 = vpop.f32.mrb[0].mxu0
        %v2133 = vpop.f32.mrb[0].mxu0
        %2134 = vdwg.mxu0
        %v2135 = vadd.f32 %v1884, %v2130
        %2136 = vst.msk [vmem:[#allocation2] sm:$0xff] %vm930, %v2135
        %p2137 = scmp.eq.s32.totalorder %s39, 1
        // Predicated region
        $region105: #{tpu_custom_call.1} parent=99 // pred_check
          %p2138 = pneg %p2137
        $region106: #{tpu_custom_call.1} parent=99 // pred_check_branch
          %2140 = sbr.rel (%p2138) target = $region108
        $region107: #{tpu_custom_call.1} parent=99 // pred_region
          %v2141 = vsel %vm930, %v2135, -inf
          %2142 = vmax.xlane.f32.xlu0 %v2141
          %v2143 = vpop.xlane.xlu0 %2142
          %v2144 = vrcp.pop %v2143
          %v2145 = vmul.f32 %v2135, %v2144
          %v2146 = vld [vmem:[%s14] sm:$0x1]
          %v2147 = vsel %vm930, %v2145, 0.0
          %2148 = vadd.xlane.f32.xlu0 %v2147
          %v2149 = vpop.xlane.xlu0 %2148
          %v2150 = vmul.f32 %v2149, %v934
          %v2151 = vsub.f32 %v2145, %v2150
          %v2152 = vmul.f32 %v2151, %v2151
          %v2153 = vsel %vm930, %v2152, 0.0
          %2154 = vadd.xlane.f32.xlu0 %v2153
          %v2155 = vpop.xlane.xlu0 %2154
          %v2156 = vmul.f32 %v2155, %v934
          %v2157 = vadd.f32 %v2156, 1e-05
          %v2158 = vrsqrt.pop %v2157
          %v2159 = vmul.f32 %v2151, %v2158
          %v2161 = vlaneseq
          %v2162 = vshrl.u32 %v2161, 7
          %v2163 = vsub.s32 0, %v2162
          %v2164 = vrot.slane %v2146, %v2163
          %v2166 = vmul.f32 %v2159, %v2164
          %v2167 = vpack.c.bf16 %v2166, %v2166
          %v2168 = vld [vmem:[%s15] sm:$0xf]
          %v2169 = vld [vmem:[%s15 + $0x4] sm:$0xf]
          %v2170 = vld [vmem:[%s15 + $0x8] sm:$0xf]
          %v2171 = vld [vmem:[%s15 + $0xc] sm:$0xf]
          %v2176 = vunpack.c.l.b16 %v2168
          %v2177 = vunpack.c.l.b16 %v2169
          %v2178 = vunpack.c.l.b16 %v2170
          %v2179 = vunpack.c.l.b16 %v2171
          %v2180 = vpack.c.b16 %v2177, %v2176
          %v2181 = vpack.c.b16 %v2179, %v2178
          %v2185 = vsel %vm930, %v2167, 0
          %2187 = vmatprep.subr.bf16.mxu0 0
          %2188 = vmatpush1.bf16.msra.mxu0 %v2180
          %2189 = vmatprep.subr.bf16.mxu0 0
          %2190 = vmatpush1.bf16.msra.mxu0 %v2181
          %2191 = vmatprep.subr.bf16.mxu0 0
          %2192 = vmatpush1.bf16.msra.mxu0 0
          %2193 = vmatprep.subr.bf16.mxu0 0
          %2194 = vmatpush1.bf16.msra.mxu0 0
          %2195 = vmatprep.subr.bf16.mxu0 0
          %2196 = vmatpush1.bf16.msra.mxu0 0
          %2197 = vmatprep.subr.bf16.mxu0 0
          %2198 = vmatpush1.bf16.msra.mxu0 0
          %2199 = vmatprep.subr.bf16.mxu0 0
          %2200 = vmatpush1.bf16.msra.mxu0 0
          %2201 = vmatprep.subr.bf16.mxu0 0
          %2202 = vmatpush1.bf16.msra.mxu0 0
          %2203 = vmatprep.subr.bf16.mxu0 0
          %2204 = vmatpush1.bf16.msra.mxu0 0
          %2205 = vmatprep.subr.bf16.mxu0 0
          %2206 = vmatpush1.bf16.msra.mxu0 0
          %2207 = vmatprep.subr.bf16.mxu0 0
          %2208 = vmatpush1.bf16.msra.mxu0 0
          %2209 = vmatprep.subr.bf16.mxu0 0
          %2210 = vmatpush1.bf16.msra.mxu0 0
          %2211 = vmatprep.subr.bf16.mxu0 0
          %2212 = vmatpush1.bf16.msra.mxu0 0
          %2213 = vmatprep.subr.bf16.mxu0 0
          %2214 = vmatpush1.bf16.msra.mxu0 0
          %2215 = vmatprep.subr.bf16.mxu0 0
          %2216 = vmatpush1.bf16.msra.mxu0 0
          %2217 = vmatprep.subr.bf16.mxu0 0
          %2218 = vmatpush1.bf16.msra.mxu0 0
          %2219 = vmatprep.mubr.bf16.mxu0 0
          %2220 = vmatmul.mubr.bf16.gmra.mrb[0].mxu0 %v2185
          %v2221 = vpop.f32.mrb[0].mxu0
          %v2222 = vadd.f32 0.0, %v2221
          %v2223 = vpop.f32.mrb[0].mxu0
          %v2224 = vpop.f32.mrb[0].mxu0
          %v2225 = vpop.f32.mrb[0].mxu0
          %2226 = vdwg.mxu0
          %v2227 = vpack.c.bf16 %v2222, %v2222
          %2228 = vst [vmem:[%s781] sm:$0xf] %v2227
        $region108: #{tpu_custom_call.1} parent=99 // pred_fallthru
          _
        %s2229 = sand.u32 %s534, 1
        %s2230 = scalar_lea.sflag [#allocation6], %s2229
        %s2231 = sand.u32 %s534, 1
        %s2232 = smul.addr %s2231, 4
        %s2233 = scalar_lea.vmem [#allocation5], %s2232
        // Predicated region
        $region109: #{tpu_custom_call.1} parent=99 // pred_check
          %p2234 = pneg %p544
        $region110: #{tpu_custom_call.1} parent=99 // pred_check_branch
          %2236 = sbr.rel (%p2234) target = $region112
        $region111: #{tpu_custom_call.1} parent=99 // pred_region
          %s2238 = ssub.s32 64, 64
          %2239 = vsyncadd %s2230, %s2238
          %s2240 = smul.addr %s38, 64
          %s2241 = scalar_lea.hbm %s20, %s2240
          %s2243 = sshll.u32 %s2233, 4
          %s2244 = int_to_ptr.vmem [resolvable:$true] %s2243
          %2246 = dma.vmem_to_hbm [thread:$0]  %s2244, 64, %s2241, %s2230
        $region112: #{tpu_custom_call.1} parent=99 // pred_fallthru
          _
      $region100: #{tpu_custom_call.1} parent=5 // pred_fallthru
        _
      %p2247 = scmp.le.s32.totalorder 2, %s29
      // Predicated region
      $region113: #{tpu_custom_call.1} parent=5 // pred_check
        %p2248 = pneg %p2247
      $region114: #{tpu_custom_call.1} parent=5 // pred_check_branch
        %2250 = sbr.rel (%p2248) target = $region116
      $region115: #{tpu_custom_call.1} parent=5 // pred_region
        %s2251 = ssub.s32 %s29, 2
        // Predicated region
        $region117: #{tpu_custom_call.1} parent=115 // pred_check
          %p2252 = pneg %p550
        $region118: #{tpu_custom_call.1} parent=115 // pred_check_branch
          %2254 = sbr.rel (%p2252) target = $region120
        $region119: #{tpu_custom_call.1} parent=115 // pred_region
          %s2255 = sand.u32 %s535, 1
          %s2256 = scalar_lea.sflag [#allocation6], %s2255
          %s2257 = sand.u32 %s535, 1
          %s2258 = smul.addr %s2257, 4
          %s2259 = scalar_lea.vmem [#allocation5], %s2258
          %2260 = dma.done %s2256, 64
        $region120: #{tpu_custom_call.1} parent=115 // pred_fallthru
          _
      $region116: #{tpu_custom_call.1} parent=5 // pred_fallthru
        _
    $region6: #{tpu_custom_call.1} parent=1 // loop_footer
      %s33 = sadd.s32 1, %s29
    $region7: #{tpu_custom_call.1} parent=1 // loop_footer_branch
      %28 = sbr.rel target = $region3
    $region8: #{tpu_custom_call.1} parent=1 // loop_exit
      _
    %2261 = vsyncpa [#allocation6], 1
    %s2262 = scalar_lea.sflag [#allocation6], 1
    %2263 = vsyncpa %s2262, 1

</llo_original>
